<compile_context>
chip_gen: v5e
topology: v5e:2x2
jax: 0.10.0
libtpu: 0.0.40
codegen_flags: <defaults>
</compile_context>

<pallas_src>
import functools

import numpy as np
import jax
import jax.numpy as jnp
from jax.experimental import pallas as pl
from jax.experimental.pallas import tpu as pltpu


# ----------------------------------------------------------------------------
# Kernel: one grid step = (a few batch elements, one W tile).  All three
# pointwise conv layers run back-to-back on the MXU; activations never leave
# VMEM.  Weights arrive already in compute_dtype (pre-cast in the wrapper).
# ----------------------------------------------------------------------------
def _final_mlp_kernel(x_ref, w1_ref, b1_ref, w2_ref, b2_ref, w3_ref, b3_ref,
                      o_ref, *, compute_dtype):
    cd = compute_dtype
    w1 = w1_ref[...]
    b1 = b1_ref[...]
    w2 = w2_ref[...]
    b2 = b2_ref[...]
    w3 = w3_ref[...]
    b3 = b3_ref[...]

    # Small, statically-unrolled loop over the batch elements folded into this
    # block (b_block is VMEM-budgeted in the wrapper, so worst-case live
    # intermediates stay bounded).
    for b in range(x_ref.shape[0]):
        x = x_ref[b].astype(cd)                                       # [Cin, Wt]

        h = jnp.dot(w1, x, preferred_element_type=jnp.float32) + b1   # [256, Wt]
        h = jnp.maximum(h, 0.0)

        h = jnp.dot(w2, h.astype(cd),
                    preferred_element_type=jnp.float32) + b2          # [64, Wt]
        h = jnp.maximum(h, 0.0)

        y = jnp.dot(w3, h.astype(cd),
                    preferred_element_type=jnp.float32) + b3          # [Cout, Wt]
        o_ref[b] = y.astype(o_ref.dtype)


# ----------------------------------------------------------------------------
# Tile selection: big lane-dense W tiles, batch folded into the block, both
# budgeted so the 256 x block_w f32 intermediates (and the x tile) stay well
# inside even v7x's scoped VMEM.
# ----------------------------------------------------------------------------
def _choose_tiles(B, Cin, W, block_w):
    # ~8 MiB budget for the widest live slab (max of x-tile rows and the
    # 256-wide hidden activation), expressed as lane elements.
    budget_lanes = (8 << 20) // (4 * max(Cin, 256))
    if block_w is None:
        cap = max(512, min(4096, (budget_lanes // 128) * 128))
        block_w = W if W <= cap else cap
        # Keep >= 2 W tiles on wide inputs so v7x's two TensorCores both get
        # work (grid axes are "parallel"); irrelevant on single-TC v5e/v6e.
        if block_w == W and W >= 2048 and W % 256 == 0:
            block_w = W // 2
    b_block = int(max(1, min(B, budget_lanes // max(block_w, 1))))
    return b_block, block_w


# ----------------------------------------------------------------------------
# Wrapper
# ----------------------------------------------------------------------------
def final_mlp_forward(x, params, *, block_w=None, compute_dtype=jnp.bfloat16):
    """x: [B, in_num, W] (PyTorch Conv1d NCW layout). Returns [B, out_num, W].

    compute_dtype only affects the MXU operand precision (weights pre-cast in
    the wrapper, activations cast in-kernel); accumulation, bias add and ReLU
    are always float32.  Use compute_dtype=jnp.float32 for exact semantics.
    """
    w1, b1, w2, b2, w3, b3 = params
    B, Cin, W = x.shape
    C1, C2, Cout = w1.shape[0], w2.shape[0], w3.shape[0]
    assert w1.shape == (C1, Cin)
    assert w2.shape == (C2, C1)
    assert w3.shape == (Cout, C2)

    cd = jnp.dtype(compute_dtype)
    out_dtype = x.dtype

    # Hoist the operand casts out of the kernel: weights are VMEM-resident
    # (constant index_map), so casting them per grid step would be pure VPU
    # filler.  Biases stay f32 (f32 bias/ReLU path).
    w1c, w2c, w3c = w1.astype(cd), w2.astype(cd), w3.astype(cd)

    b_block, block_w = _choose_tiles(B, Cin, W, block_w)
    nb = pl.cdiv(B, b_block)
    nw = pl.cdiv(W, block_w)

    flops = 2 * B * W * (C1 * Cin + C2 * C1 + Cout * C2)
    bytes_accessed = (x.size * x.dtype.itemsize
                      + (w1c.size + w2c.size + w3c.size) * cd.itemsize
                      + (b1.size + b2.size + b3.size) * 4
                      + B * Cout * W * jnp.dtype(out_dtype).itemsize)

    kernel = functools.partial(_final_mlp_kernel, compute_dtype=cd)

    return pl.pallas_call(
        kernel,
        out_shape=jax.ShapeDtypeStruct((B, Cout, W), out_dtype),
        grid=(nb, nw),
        in_specs=[
            pl.BlockSpec((b_block, Cin, block_w), lambda bi, wi: (bi, 0, wi)),
            # Weights / biases: constant index_map -> fetched once, VMEM-resident.
            pl.BlockSpec((C1, Cin),  lambda bi, wi: (0, 0)),
            pl.BlockSpec((C1, 1),    lambda bi, wi: (0, 0)),
            pl.BlockSpec((C2, C1),   lambda bi, wi: (0, 0)),
            pl.BlockSpec((C2, 1),    lambda bi, wi: (0, 0)),
            pl.BlockSpec((Cout, C2), lambda bi, wi: (0, 0)),
            pl.BlockSpec((Cout, 1),  lambda bi, wi: (0, 0)),
        ],
        out_specs=pl.BlockSpec((b_block, Cout, block_w),
                               lambda bi, wi: (bi, 0, wi)),
        compiler_params=pltpu.CompilerParams(
            dimension_semantics=("parallel", "parallel")),
        cost_estimate=pl.CostEstimate(flops=flops, transcendentals=0,
                                      bytes_accessed=int(bytes_accessed)),
    )(x, w1c, b1, w2c, b2, w3c, b3)


# ----------------------------------------------------------------------------
# Parameter construction (deterministic, mimics PyTorch Conv1d default init).
# Conv1d weight [out_c, in_c, 1] is stored squeezed as [out_c, in_c];
# bias is stored as [out_c, 1] so it lane-broadcasts inside the kernel.
# ----------------------------------------------------------------------------
def make_final_mlp_params(key, in_num, out_num):
    def conv1x1(k, in_c, out_c):
        kw, kb = jax.random.split(k)
        bound = 1.0 / np.sqrt(in_c)
        w = jax.random.uniform(kw, (out_c, in_c), jnp.float32, -bound, bound)
        b = jax.random.uniform(kb, (out_c, 1), jnp.float32, -bound, bound)
        return w, b

    k1, k2, k3 = jax.random.split(key, 3)
    w1, b1 = conv1x1(k1, in_num, 256)
    w2, b2 = conv1x1(k2, 256, 64)
    w3, b3 = conv1x1(k3, 64, out_num)
    return (w1, b1, w2, b2, w3, b3)


# Pure-JAX reference (matches the PyTorch forward) for correctness checks.
def final_mlp_reference(x, params):
    w1, b1, w2, b2, w3, b3 = params
    h = jax.nn.relu(jnp.einsum("oc,bcw->bow", w1, x) + b1[None])
    h = jax.nn.relu(jnp.einsum("oc,bcw->bow", w2, h) + b2[None])
    return jnp.einsum("oc,bcw->bow", w3, h) + b3[None]


if __name__ == "__main__":
    key = jax.random.PRNGKey(0)
    k_params, k_x = jax.random.split(key)

    B, in_num, out_num, W = 2, 8, 3, 1024
    params = make_final_mlp_params(k_params, in_num, out_num)
    x = jax.random.normal(k_x, (B, in_num, W), jnp.float32)

    y_ref = final_mlp_reference(x, params)

    # Exact-semantics f32 path.
    fwd_f32 = jax.jit(functools.partial(final_mlp_forward,
                                        compute_dtype=jnp.float32))
    y32 = fwd_f32(x, params)
    jax.block_until_ready(y32)
    assert y32.shape == (B, out_num, W), y32.shape
    np.testing.assert_allclose(np.asarray(y32), np.asarray(y_ref),
                               rtol=2e-3, atol=2e-3)

    # Default fast path: bf16 MXU operands, f32 accumulation / bias / ReLU.
    fwd_fast = jax.jit(final_mlp_forward)
    ybf = fwd_fast(x, params)
    jax.block_until_ready(ybf)
    assert ybf.shape == (B, out_num, W), ybf.shape
    np.testing.assert_allclose(np.asarray(ybf), np.asarray(y_ref),
                               rtol=5e-2, atol=5e-2)

    print("KERNEL_OK")
</pallas_src>

<mosaic_0001>
module attributes {stable_mosaic.version = 11 : i64} {
  func.func @_final_mlp_kernel(%arg0: i32, %arg1: i32, %arg2: memref<2x8x1024xf32, #tpu.memory_space<vmem>>, %arg3: memref<256x8xf32, #tpu.memory_space<vmem>>, %arg4: memref<256x1xf32, #tpu.memory_space<vmem>>, %arg5: memref<64x256xf32, #tpu.memory_space<vmem>>, %arg6: memref<64x1xf32, #tpu.memory_space<vmem>>, %arg7: memref<3x64xf32, #tpu.memory_space<vmem>>, %arg8: memref<3x1xf32, #tpu.memory_space<vmem>>, %arg9: memref<2x3x1024xf32, #tpu.memory_space<vmem>>) attributes {dimension_semantics = [#tpu.dimension_semantics<parallel>, #tpu.dimension_semantics<parallel>], iteration_bounds = array<i64: 1, 1>, scalar_prefetch = 0 : i64, scratch_operands = 0 : i64, tpu.core_type = #tpu.core_type<tc>, window_params = [{transform_indices = @transform_0, window_bounds = array<i64: 2, 8, 1024>}, {pipeline_mode = #tpu.pipeline_mode<synchronous>, transform_indices = @transform_1, window_bounds = array<i64: 256, 8>}, {pipeline_mode = #tpu.pipeline_mode<synchronous>, transform_indices = @transform_2, window_bounds = array<i64: 256, 1>}, {pipeline_mode = #tpu.pipeline_mode<synchronous>, transform_indices = @transform_3, window_bounds = array<i64: 64, 256>}, {pipeline_mode = #tpu.pipeline_mode<synchronous>, transform_indices = @transform_4, window_bounds = array<i64: 64, 1>}, {pipeline_mode = #tpu.pipeline_mode<synchronous>, transform_indices = @transform_5, window_bounds = array<i64: 3, 64>}, {pipeline_mode = #tpu.pipeline_mode<synchronous>, transform_indices = @transform_6, window_bounds = array<i64: 3, 1>}, {transform_indices = @transform_7, window_bounds = array<i64: 2, 3, 1024>}]} {
    %c0 = arith.constant 0 : index
    %c0_0 = arith.constant 0 : index
    %0 = vector.load %arg3[%c0, %c0_0] : memref<256x8xf32, #tpu.memory_space<vmem>>, vector<256x8xf32>
    %c0_1 = arith.constant 0 : index
    %c0_2 = arith.constant 0 : index
    %1 = vector.load %arg4[%c0_1, %c0_2] : memref<256x1xf32, #tpu.memory_space<vmem>>, vector<256x1xf32>
    %c0_3 = arith.constant 0 : index
    %c0_4 = arith.constant 0 : index
    %2 = vector.load %arg5[%c0_3, %c0_4] : memref<64x256xf32, #tpu.memory_space<vmem>>, vector<64x256xf32>
    %c0_5 = arith.constant 0 : index
    %c0_6 = arith.constant 0 : index
    %3 = vector.load %arg6[%c0_5, %c0_6] : memref<64x1xf32, #tpu.memory_space<vmem>>, vector<64x1xf32>
    %c0_7 = arith.constant 0 : index
    %c0_8 = arith.constant 0 : index
    %4 = vector.load %arg7[%c0_7, %c0_8] : memref<3x64xf32, #tpu.memory_space<vmem>>, vector<3x64xf32>
    %c0_9 = arith.constant 0 : index
    %c0_10 = arith.constant 0 : index
    %5 = vector.load %arg8[%c0_9, %c0_10] : memref<3x1xf32, #tpu.memory_space<vmem>>, vector<3x1xf32>
    %c0_11 = arith.constant 0 : index
    %c0_12 = arith.constant 0 : index
    %c0_13 = arith.constant 0 : index
    %6 = vector.load %arg2[%c0_11, %c0_12, %c0_13] : memref<2x8x1024xf32, #tpu.memory_space<vmem>>, vector<1x8x1024xf32>
    %7 = vector.shape_cast %6 : vector<1x8x1024xf32> to vector<8x1024xf32>
    %cst = arith.constant dense<0.000000e+00> : vector<256x1024xf32>
    %8 = tpu.matmul %0, %7, %cst {dimension_numbers = #tpu.dot_dimension_numbers<[1], [0], [0], [1], [0, 0, 1, 1], [], []>} : vector<256x8xf32>, vector<8x1024xf32>, vector<256x1024xf32> -> vector<256x1024xf32>
    %9 = vector.broadcast %1 : vector<256x1xf32> to vector<256x1024xf32>
    %10 = arith.addf %8, %9 : vector<256x1024xf32>
    %cst_14 = arith.constant 0.000000e+00 : f32
    %11 = vector.broadcast %cst_14 : f32 to vector<256x1024xf32>
    %12 = arith.maximumf %10, %11 : vector<256x1024xf32>
    %cst_15 = arith.constant dense<0.000000e+00> : vector<64x1024xf32>
    %13 = tpu.matmul %2, %12, %cst_15 {dimension_numbers = #tpu.dot_dimension_numbers<[1], [0], [0], [1], [0, 0, 1, 1], [], []>} : vector<64x256xf32>, vector<256x1024xf32>, vector<64x1024xf32> -> vector<64x1024xf32>
    %14 = vector.broadcast %3 : vector<64x1xf32> to vector<64x1024xf32>
    %15 = arith.addf %13, %14 : vector<64x1024xf32>
    %cst_16 = arith.constant 0.000000e+00 : f32
    %16 = vector.broadcast %cst_16 : f32 to vector<64x1024xf32>
    %17 = arith.maximumf %15, %16 : vector<64x1024xf32>
    %cst_17 = arith.constant dense<0.000000e+00> : vector<3x1024xf32>
    %18 = tpu.matmul %4, %17, %cst_17 {dimension_numbers = #tpu.dot_dimension_numbers<[1], [0], [0], [1], [0, 0, 1, 1], [], []>} : vector<3x64xf32>, vector<64x1024xf32>, vector<3x1024xf32> -> vector<3x1024xf32>
    %19 = vector.broadcast %5 : vector<3x1xf32> to vector<3x1024xf32>
    %20 = arith.addf %18, %19 : vector<3x1024xf32>
    %c0_18 = arith.constant 0 : index
    %c0_19 = arith.constant 0 : index
    %c0_20 = arith.constant 0 : index
    %21 = vector.load %arg9[%c0_18, %c0_19, %c0_20] : memref<2x3x1024xf32, #tpu.memory_space<vmem>>, vector<1x3x1024xf32>
    %22 = vector.shape_cast %21 : vector<1x3x1024xf32> to vector<3x1024xf32>
    %23 = vector.shape_cast %20 : vector<3x1024xf32> to vector<1x3x1024xf32>
    tpu.vector_store %arg9[%c0_18, %c0_19, %c0_20], %23 {strides = array<i32>} : memref<2x3x1024xf32, #tpu.memory_space<vmem>>, vector<1x3x1024xf32>,
    %c1 = arith.constant 1 : index
    %c0_21 = arith.constant 0 : index
    %c0_22 = arith.constant 0 : index
    %24 = vector.load %arg2[%c1, %c0_21, %c0_22] : memref<2x8x1024xf32, #tpu.memory_space<vmem>>, vector<1x8x1024xf32>
    %25 = vector.shape_cast %24 : vector<1x8x1024xf32> to vector<8x1024xf32>
    %cst_23 = arith.constant dense<0.000000e+00> : vector<256x1024xf32>
    %26 = tpu.matmul %0, %25, %cst_23 {dimension_numbers = #tpu.dot_dimension_numbers<[1], [0], [0], [1], [0, 0, 1, 1], [], []>} : vector<256x8xf32>, vector<8x1024xf32>, vector<256x1024xf32> -> vector<256x1024xf32>
    %27 = vector.broadcast %1 : vector<256x1xf32> to vector<256x1024xf32>
    %28 = arith.addf %26, %27 : vector<256x1024xf32>
    %cst_24 = arith.constant 0.000000e+00 : f32
    %29 = vector.broadcast %cst_24 : f32 to vector<256x1024xf32>
    %30 = arith.maximumf %28, %29 : vector<256x1024xf32>
    %cst_25 = arith.constant dense<0.000000e+00> : vector<64x1024xf32>
    %31 = tpu.matmul %2, %30, %cst_25 {dimension_numbers = #tpu.dot_dimension_numbers<[1], [0], [0], [1], [0, 0, 1, 1], [], []>} : vector<64x256xf32>, vector<256x1024xf32>, vector<64x1024xf32> -> vector<64x1024xf32>
    %32 = vector.broadcast %3 : vector<64x1xf32> to vector<64x1024xf32>
    %33 = arith.addf %31, %32 : vector<64x1024xf32>
    %cst_26 = arith.constant 0.000000e+00 : f32
    %34 = vector.broadcast %cst_26 : f32 to vector<64x1024xf32>
    %35 = arith.maximumf %33, %34 : vector<64x1024xf32>
    %cst_27 = arith.constant dense<0.000000e+00> : vector<3x1024xf32>
    %36 = tpu.matmul %4, %35, %cst_27 {dimension_numbers = #tpu.dot_dimension_numbers<[1], [0], [0], [1], [0, 0, 1, 1], [], []>} : vector<3x64xf32>, vector<64x1024xf32>, vector<3x1024xf32> -> vector<3x1024xf32>
    %37 = vector.broadcast %5 : vector<3x1xf32> to vector<3x1024xf32>
    %38 = arith.addf %36, %37 : vector<3x1024xf32>
    %c1_28 = arith.constant 1 : index
    %c0_29 = arith.constant 0 : index
    %c0_30 = arith.constant 0 : index
    %39 = vector.load %arg9[%c1_28, %c0_29, %c0_30] : memref<2x3x1024xf32, #tpu.memory_space<vmem>>, vector<1x3x1024xf32>
    %40 = vector.shape_cast %39 : vector<1x3x1024xf32> to vector<3x1024xf32>
    %41 = vector.shape_cast %38 : vector<3x1024xf32> to vector<1x3x1024xf32>
    tpu.vector_store %arg9[%c1_28, %c0_29, %c0_30], %41 {strides = array<i32>} : memref<2x3x1024xf32, #tpu.memory_space<vmem>>, vector<1x3x1024xf32>,
    return
  }
  func.func @transform_0(%arg0: i32, %arg1: i32) -> (i32, i32, i32) {
    %c0_i32 = arith.constant 0 : i32
    %c0_i32_0 = arith.constant 0 : i32
    return %arg0, %c0_i32, %arg1 : i32, i32, i32
  }
  func.func @transform_1(%arg0: i32, %arg1: i32) -> (i32, i32) {
    %c0_i32 = arith.constant 0 : i32
    %c0_i32_0 = arith.constant 0 : i32
    %c0_i32_1 = arith.constant 0 : i32
    return %c0_i32, %c0_i32_0 : i32, i32
  }
  func.func @transform_2(%arg0: i32, %arg1: i32) -> (i32, i32) {
    %c0_i32 = arith.constant 0 : i32
    %c0_i32_0 = arith.constant 0 : i32
    %c0_i32_1 = arith.constant 0 : i32
    return %c0_i32, %c0_i32_0 : i32, i32
  }
  func.func @transform_3(%arg0: i32, %arg1: i32) -> (i32, i32) {
    %c0_i32 = arith.constant 0 : i32
    %c0_i32_0 = arith.constant 0 : i32
    %c0_i32_1 = arith.constant 0 : i32
    return %c0_i32, %c0_i32_0 : i32, i32
  }
  func.func @transform_4(%arg0: i32, %arg1: i32) -> (i32, i32) {
    %c0_i32 = arith.constant 0 : i32
    %c0_i32_0 = arith.constant 0 : i32
    %c0_i32_1 = arith.constant 0 : i32
    return %c0_i32, %c0_i32_0 : i32, i32
  }
  func.func @transform_5(%arg0: i32, %arg1: i32) -> (i32, i32) {
    %c0_i32 = arith.constant 0 : i32
    %c0_i32_0 = arith.constant 0 : i32
    %c0_i32_1 = arith.constant 0 : i32
    return %c0_i32, %c0_i32_0 : i32, i32
  }
  func.func @transform_6(%arg0: i32, %arg1: i32) -> (i32, i32) {
    %c0_i32 = arith.constant 0 : i32
    %c0_i32_0 = arith.constant 0 : i32
    %c0_i32_1 = arith.constant 0 : i32
    return %c0_i32, %c0_i32_0 : i32, i32
  }
  func.func @transform_7(%arg0: i32, %arg1: i32) -> (i32, i32, i32) {
    %c0_i32 = arith.constant 0 : i32
    %c0_i32_0 = arith.constant 0 : i32
    return %arg0, %c0_i32, %arg1 : i32, i32, i32
  }
}

</mosaic_0001>

<llo_original>
// kernel: final_mlp_forward.1
$region0: #{final_mlp_forward.1}
  #allocation0 [shape = 'u32[]', space=smem, size = 0x4, offset = 0x4, fixed_abs, tag = 'smem constant byte address 0x4 - core index']
  #allocation1 [shape = 'u32[72,128]{1,0:T(1,128)}', space=vmem, size = 0x9000, scoped, tag = 'internal scratch']
  %s0 = inlined_call_operand.vmem [shape: f32[2,8,1024], index: 0, kind: input, shape index: {}]
  %s1 = inlined_call_operand.vmem [shape: f32[256,8], index: 1, kind: input, shape index: {}]
  %s2 = inlined_call_operand.vmem [shape: f32[256,1], index: 2, kind: input, shape index: {}]
  %s3 = inlined_call_operand.vmem [shape: f32[64,256], index: 3, kind: input, shape index: {}]
  %s4 = inlined_call_operand.vmem [shape: f32[64,1], index: 4, kind: input, shape index: {}]
  %s5 = inlined_call_operand.vmem [shape: f32[3,64], index: 5, kind: input, shape index: {}]
  %s6 = inlined_call_operand.vmem [shape: f32[3,1], index: 6, kind: input, shape index: {}]
  %s7 = inlined_call_operand.vmem [shape: f32[2,3,1024], index: 7, kind: output, shape index: {}]
  %s8 = sld [smem:[#allocation0]]
  $region38: #{final_mlp_forward.1} parent=0
    _
  %s10 = ssub.s32 1, %s8
  %s11 = scalar_select 0, %s10, %s8
  // Predicated region
  $region2: #{final_mlp_forward.1} parent=0 // pred_check
    _
  $region3: #{final_mlp_forward.1} parent=0 // pred_check_branch
    %13 = sbr.rel (0) target = $region5
  $region4: #{final_mlp_forward.1} parent=0 // pred_region
    _
  $region5: #{final_mlp_forward.1} parent=0 // pred_fallthru
    _
  // Predicated region
  $region6: #{final_mlp_forward.1} parent=0 // pred_check
    _
  $region7: #{final_mlp_forward.1} parent=0 // pred_check_branch
    %15 = sbr.rel (0) target = $region9
  $region8: #{final_mlp_forward.1} parent=0 // pred_region
    _
  $region9: #{final_mlp_forward.1} parent=0 // pred_fallthru
    _
  // Predicated region
  $region10: #{final_mlp_forward.1} parent=0 // pred_check
    _
  $region11: #{final_mlp_forward.1} parent=0 // pred_check_branch
    %17 = sbr.rel (0) target = $region13
  $region12: #{final_mlp_forward.1} parent=0 // pred_region
    _
  $region13: #{final_mlp_forward.1} parent=0 // pred_fallthru
    _
  // Predicated region
  $region14: #{final_mlp_forward.1} parent=0 // pred_check
    _
  $region15: #{final_mlp_forward.1} parent=0 // pred_check_branch
    %19 = sbr.rel (0) target = $region17
  $region16: #{final_mlp_forward.1} parent=0 // pred_region
    _
  $region17: #{final_mlp_forward.1} parent=0 // pred_fallthru
    _
  // Predicated region
  $region18: #{final_mlp_forward.1} parent=0 // pred_check
    _
  $region19: #{final_mlp_forward.1} parent=0 // pred_check_branch
    %21 = sbr.rel (0) target = $region21
  $region20: #{final_mlp_forward.1} parent=0 // pred_region
    _
  $region21: #{final_mlp_forward.1} parent=0 // pred_fallthru
    _
  // Predicated region
  $region22: #{final_mlp_forward.1} parent=0 // pred_check
    _
  $region23: #{final_mlp_forward.1} parent=0 // pred_check_branch
    %23 = sbr.rel (0) target = $region25
  $region24: #{final_mlp_forward.1} parent=0 // pred_region
    _
  $region25: #{final_mlp_forward.1} parent=0 // pred_fallthru
    _
  // Predicated region
  $region26: #{final_mlp_forward.1} parent=0 // pred_check
    _
  $region27: #{final_mlp_forward.1} parent=0 // pred_check_branch
    %25 = sbr.rel (0) target = $region29
  $region28: #{final_mlp_forward.1} parent=0 // pred_region
    _
  $region29: #{final_mlp_forward.1} parent=0 // pred_fallthru
    _
  %v26 = vld [vmem:[%s1] sm:$0xff]
  %v27 = vld [vmem:[%s1 + $0x8] sm:$0xff]
  %v28 = vld [vmem:[%s1 + $0x10] sm:$0xff]
  %v29 = vld [vmem:[%s1 + $0x18] sm:$0xff]
  %v30 = vld [vmem:[%s1 + $0x20] sm:$0xff]
  %v31 = vld [vmem:[%s1 + $0x28] sm:$0xff]
  %v32 = vld [vmem:[%s1 + $0x30] sm:$0xff]
  %v33 = vld [vmem:[%s1 + $0x38] sm:$0xff]
  %v34 = vld [vmem:[%s1 + $0x40] sm:$0xff]
  %v35 = vld [vmem:[%s1 + $0x48] sm:$0xff]
  %v36 = vld [vmem:[%s1 + $0x50] sm:$0xff]
  %v37 = vld [vmem:[%s1 + $0x58] sm:$0xff]
  %v38 = vld [vmem:[%s1 + $0x60] sm:$0xff]
  %v39 = vld [vmem:[%s1 + $0x68] sm:$0xff]
  %v40 = vld [vmem:[%s1 + $0x70] sm:$0xff]
  %v41 = vld [vmem:[%s1 + $0x78] sm:$0xff]
  %v42 = vld [vmem:[%s1 + $0x80] sm:$0xff]
  %v43 = vld [vmem:[%s1 + $0x88] sm:$0xff]
  %v44 = vld [vmem:[%s1 + $0x90] sm:$0xff]
  %v45 = vld [vmem:[%s1 + $0x98] sm:$0xff]
  %v46 = vld [vmem:[%s1 + $0xa0] sm:$0xff]
  %v47 = vld [vmem:[%s1 + $0xa8] sm:$0xff]
  %v48 = vld [vmem:[%s1 + $0xb0] sm:$0xff]
  %v49 = vld [vmem:[%s1 + $0xb8] sm:$0xff]
  %v50 = vld [vmem:[%s1 + $0xc0] sm:$0xff]
  %v51 = vld [vmem:[%s1 + $0xc8] sm:$0xff]
  %v52 = vld [vmem:[%s1 + $0xd0] sm:$0xff]
  %v53 = vld [vmem:[%s1 + $0xd8] sm:$0xff]
  %v54 = vld [vmem:[%s1 + $0xe0] sm:$0xff]
  %v55 = vld [vmem:[%s1 + $0xe8] sm:$0xff]
  %v56 = vld [vmem:[%s1 + $0xf0] sm:$0xff]
  %v57 = vld [vmem:[%s1 + $0xf8] sm:$0xff]
  %v58 = vld [vmem:[%s2] sm:$0xff]
  %v59 = vld [vmem:[%s2 + $0x8] sm:$0xff]
  %v60 = vld [vmem:[%s2 + $0x10] sm:$0xff]
  %v61 = vld [vmem:[%s2 + $0x18] sm:$0xff]
  %v62 = vld [vmem:[%s2 + $0x20] sm:$0xff]
  %v63 = vld [vmem:[%s2 + $0x28] sm:$0xff]
  %v64 = vld [vmem:[%s2 + $0x30] sm:$0xff]
  %v65 = vld [vmem:[%s2 + $0x38] sm:$0xff]
  %v66 = vld [vmem:[%s2 + $0x40] sm:$0xff]
  %v67 = vld [vmem:[%s2 + $0x48] sm:$0xff]
  %v68 = vld [vmem:[%s2 + $0x50] sm:$0xff]
  %v69 = vld [vmem:[%s2 + $0x58] sm:$0xff]
  %v70 = vld [vmem:[%s2 + $0x60] sm:$0xff]
  %v71 = vld [vmem:[%s2 + $0x68] sm:$0xff]
  %v72 = vld [vmem:[%s2 + $0x70] sm:$0xff]
  %v73 = vld [vmem:[%s2 + $0x78] sm:$0xff]
  %v74 = vld [vmem:[%s2 + $0x80] sm:$0xff]
  %v75 = vld [vmem:[%s2 + $0x88] sm:$0xff]
  %v76 = vld [vmem:[%s2 + $0x90] sm:$0xff]
  %v77 = vld [vmem:[%s2 + $0x98] sm:$0xff]
  %v78 = vld [vmem:[%s2 + $0xa0] sm:$0xff]
  %v79 = vld [vmem:[%s2 + $0xa8] sm:$0xff]
  %v80 = vld [vmem:[%s2 + $0xb0] sm:$0xff]
  %v81 = vld [vmem:[%s2 + $0xb8] sm:$0xff]
  %v82 = vld [vmem:[%s2 + $0xc0] sm:$0xff]
  %v83 = vld [vmem:[%s2 + $0xc8] sm:$0xff]
  %v84 = vld [vmem:[%s2 + $0xd0] sm:$0xff]
  %v85 = vld [vmem:[%s2 + $0xd8] sm:$0xff]
  %v86 = vld [vmem:[%s2 + $0xe0] sm:$0xff]
  %v87 = vld [vmem:[%s2 + $0xe8] sm:$0xff]
  %v88 = vld [vmem:[%s2 + $0xf0] sm:$0xff]
  %v89 = vld [vmem:[%s2 + $0xf8] sm:$0xff]
  %v90 = vld [vmem:[%s3] sm:$0xff]
  %v91 = vld [vmem:[%s3 + $0x8] sm:$0xff]
  %v92 = vld [vmem:[%s3 + $0x10] sm:$0xff]
  %v93 = vld [vmem:[%s3 + $0x18] sm:$0xff]
  %v94 = vld [vmem:[%s3 + $0x20] sm:$0xff]
  %v95 = vld [vmem:[%s3 + $0x28] sm:$0xff]
  %v96 = vld [vmem:[%s3 + $0x30] sm:$0xff]
  %v97 = vld [vmem:[%s3 + $0x38] sm:$0xff]
  %v98 = vld [vmem:[%s3 + $0x40] sm:$0xff]
  %v99 = vld [vmem:[%s3 + $0x48] sm:$0xff]
  %v100 = vld [vmem:[%s3 + $0x50] sm:$0xff]
  %v101 = vld [vmem:[%s3 + $0x58] sm:$0xff]
  %v102 = vld [vmem:[%s3 + $0x60] sm:$0xff]
  %v103 = vld [vmem:[%s3 + $0x68] sm:$0xff]
  %v104 = vld [vmem:[%s3 + $0x70] sm:$0xff]
  %v105 = vld [vmem:[%s3 + $0x78] sm:$0xff]
  %v106 = vld [vmem:[%s4] sm:$0xff]
  %v107 = vld [vmem:[%s4 + $0x8] sm:$0xff]
  %v108 = vld [vmem:[%s4 + $0x10] sm:$0xff]
  %v109 = vld [vmem:[%s4 + $0x18] sm:$0xff]
  %v110 = vld [vmem:[%s4 + $0x20] sm:$0xff]
  %v111 = vld [vmem:[%s4 + $0x28] sm:$0xff]
  %v112 = vld [vmem:[%s4 + $0x30] sm:$0xff]
  %v113 = vld [vmem:[%s4 + $0x38] sm:$0xff]
  %v114 = vld [vmem:[%s5] sm:$0x7]
  %v115 = vld [vmem:[%s6] sm:$0x7]
  %v116 = vld [vmem:[%s0] sm:$0xff]
  %v117 = vld [vmem:[%s0 + $0x8] sm:$0xff]
  %v118 = vld [vmem:[%s0 + $0x10] sm:$0xff]
  %v119 = vld [vmem:[%s0 + $0x18] sm:$0xff]
  %v120 = vld [vmem:[%s0 + $0x20] sm:$0xff]
  %v121 = vld [vmem:[%s0 + $0x28] sm:$0xff]
  %v122 = vld [vmem:[%s0 + $0x30] sm:$0xff]
  %v123 = vld [vmem:[%s0 + $0x38] sm:$0xff]
  %125 = vset.pattern.permute.xlu0 0
  %126 = vperm.xlu0 %125, %v58
  %v127 = vpop.permute.xlu0 %126
  %130 = vset.pattern.permute.xlu0 0
  %131 = vperm.xlu0 %130, %v59
  %v132 = vpop.permute.xlu0 %131
  %135 = vset.pattern.permute.xlu0 0
  %136 = vperm.xlu0 %135, %v60
  %v137 = vpop.permute.xlu0 %136
  %140 = vset.pattern.permute.xlu0 0
  %141 = vperm.xlu0 %140, %v61
  %v142 = vpop.permute.xlu0 %141
  %145 = vset.pattern.permute.xlu0 0
  %146 = vperm.xlu0 %145, %v62
  %v147 = vpop.permute.xlu0 %146
  %150 = vset.pattern.permute.xlu0 0
  %151 = vperm.xlu0 %150, %v63
  %v152 = vpop.permute.xlu0 %151
  %155 = vset.pattern.permute.xlu0 0
  %156 = vperm.xlu0 %155, %v64
  %v157 = vpop.permute.xlu0 %156
  %160 = vset.pattern.permute.xlu0 0
  %161 = vperm.xlu0 %160, %v65
  %v162 = vpop.permute.xlu0 %161
  %165 = vset.pattern.permute.xlu0 0
  %166 = vperm.xlu0 %165, %v66
  %v167 = vpop.permute.xlu0 %166
  %170 = vset.pattern.permute.xlu0 0
  %171 = vperm.xlu0 %170, %v67
  %v172 = vpop.permute.xlu0 %171
  %175 = vset.pattern.permute.xlu0 0
  %176 = vperm.xlu0 %175, %v68
  %v177 = vpop.permute.xlu0 %176
  %180 = vset.pattern.permute.xlu0 0
  %181 = vperm.xlu0 %180, %v69
  %v182 = vpop.permute.xlu0 %181
  %185 = vset.pattern.permute.xlu0 0
  %186 = vperm.xlu0 %185, %v70
  %v187 = vpop.permute.xlu0 %186
  %190 = vset.pattern.permute.xlu0 0
  %191 = vperm.xlu0 %190, %v71
  %v192 = vpop.permute.xlu0 %191
  %195 = vset.pattern.permute.xlu0 0
  %196 = vperm.xlu0 %195, %v72
  %v197 = vpop.permute.xlu0 %196
  %200 = vset.pattern.permute.xlu0 0
  %201 = vperm.xlu0 %200, %v73
  %v202 = vpop.permute.xlu0 %201
  %205 = vset.pattern.permute.xlu0 0
  %206 = vperm.xlu0 %205, %v74
  %v207 = vpop.permute.xlu0 %206
  %210 = vset.pattern.permute.xlu0 0
  %211 = vperm.xlu0 %210, %v75
  %v212 = vpop.permute.xlu0 %211
  %215 = vset.pattern.permute.xlu0 0
  %216 = vperm.xlu0 %215, %v76
  %v217 = vpop.permute.xlu0 %216
  %220 = vset.pattern.permute.xlu0 0
  %221 = vperm.xlu0 %220, %v77
  %v222 = vpop.permute.xlu0 %221
  %225 = vset.pattern.permute.xlu0 0
  %226 = vperm.xlu0 %225, %v78
  %v227 = vpop.permute.xlu0 %226
  %230 = vset.pattern.permute.xlu0 0
  %231 = vperm.xlu0 %230, %v79
  %v232 = vpop.permute.xlu0 %231
  %235 = vset.pattern.permute.xlu0 0
  %236 = vperm.xlu0 %235, %v80
  %v237 = vpop.permute.xlu0 %236
  %240 = vset.pattern.permute.xlu0 0
  %241 = vperm.xlu0 %240, %v81
  %v242 = vpop.permute.xlu0 %241
  %245 = vset.pattern.permute.xlu0 0
  %246 = vperm.xlu0 %245, %v82
  %v247 = vpop.permute.xlu0 %246
  %250 = vset.pattern.permute.xlu0 0
  %251 = vperm.xlu0 %250, %v83
  %v252 = vpop.permute.xlu0 %251
  %255 = vset.pattern.permute.xlu0 0
  %256 = vperm.xlu0 %255, %v84
  %v257 = vpop.permute.xlu0 %256
  %260 = vset.pattern.permute.xlu0 0
  %261 = vperm.xlu0 %260, %v85
  %v262 = vpop.permute.xlu0 %261
  %265 = vset.pattern.permute.xlu0 0
  %266 = vperm.xlu0 %265, %v86
  %v267 = vpop.permute.xlu0 %266
  %270 = vset.pattern.permute.xlu0 0
  %271 = vperm.xlu0 %270, %v87
  %v272 = vpop.permute.xlu0 %271
  %275 = vset.pattern.permute.xlu0 0
  %276 = vperm.xlu0 %275, %v88
  %v277 = vpop.permute.xlu0 %276
  %280 = vset.pattern.permute.xlu0 0
  %281 = vperm.xlu0 %280, %v89
  %v282 = vpop.permute.xlu0 %281
  %vm284 = vcmask 64512
  %v286 = vsel %vm284, %v26, 0
  %v289 = vsel %vm284, %v27, 0
  %v292 = vsel %vm284, %v28, 0
  %v295 = vsel %vm284, %v29, 0
  %v298 = vsel %vm284, %v30, 0
  %v301 = vsel %vm284, %v31, 0
  %v304 = vsel %vm284, %v32, 0
  %v307 = vsel %vm284, %v33, 0
  %v310 = vsel %vm284, %v34, 0
  %v313 = vsel %vm284, %v35, 0
  %v316 = vsel %vm284, %v36, 0
  %v319 = vsel %vm284, %v37, 0
  %v322 = vsel %vm284, %v38, 0
  %v325 = vsel %vm284, %v39, 0
  %v328 = vsel %vm284, %v40, 0
  %v331 = vsel %vm284, %v41, 0
  %v334 = vsel %vm284, %v42, 0
  %v337 = vsel %vm284, %v43, 0
  %v340 = vsel %vm284, %v44, 0
  %v343 = vsel %vm284, %v45, 0
  %v346 = vsel %vm284, %v46, 0
  %v349 = vsel %vm284, %v47, 0
  %v352 = vsel %vm284, %v48, 0
  %v355 = vsel %vm284, %v49, 0
  %v358 = vsel %vm284, %v50, 0
  %v361 = vsel %vm284, %v51, 0
  %v364 = vsel %vm284, %v52, 0
  %v367 = vsel %vm284, %v53, 0
  %v370 = vsel %vm284, %v54, 0
  %v373 = vsel %vm284, %v55, 0
  %v376 = vsel %vm284, %v56, 0
  %v379 = vsel %vm284, %v57, 0
  %381 = vmatpush.msra.mxu0 0.0
  %382 = vmatpush.msra.mxu0 0.0
  %383 = vmatpush.msra.mxu0 0.0
  %384 = vmatpush.msra.mxu0 0.0
  %385 = vmatpush.msra.mxu0 0.0
  %386 = vmatpush.msra.mxu0 0.0
  %387 = vmatpush.msra.mxu0 0.0
  %388 = vmatpush.msra.mxu0 0.0
  %389 = vmatpush.msra.mxu0 0.0
  %390 = vmatpush.msra.mxu0 0.0
  %391 = vmatpush.msra.mxu0 0.0
  %392 = vmatpush.msra.mxu0 0.0
  %393 = vmatpush.msra.mxu0 0.0
  %394 = vmatpush.msra.mxu0 0.0
  %395 = vmatpush.msra.mxu0 0.0
  %396 = vmatpush.msra.mxu0 %v116
  %397 = vmatmul.f32.gmra.mxu0 %v286
  %v398 = vpop.f32.mrf.mxu0
  %v399 = vadd.f32 %v127, %v398
  %400 = vmatmul.f32.gmra.mxu0 %v289
  %v401 = vpop.f32.mrf.mxu0
  %v402 = vadd.f32 %v132, %v401
  %403 = vmatmul.f32.gmra.mxu0 %v292
  %v404 = vpop.f32.mrf.mxu0
  %v405 = vadd.f32 %v137, %v404
  %406 = vmatmul.f32.gmra.mxu0 %v295
  %v407 = vpop.f32.mrf.mxu0
  %v408 = vadd.f32 %v142, %v407
  %409 = vmatmul.f32.gmra.mxu0 %v298
  %v410 = vpop.f32.mrf.mxu0
  %v411 = vadd.f32 %v147, %v410
  %412 = vmatmul.f32.gmra.mxu0 %v301
  %v413 = vpop.f32.mrf.mxu0
  %v414 = vadd.f32 %v152, %v413
  %415 = vmatmul.f32.gmra.mxu0 %v304
  %v416 = vpop.f32.mrf.mxu0
  %v417 = vadd.f32 %v157, %v416
  %418 = vmatmul.f32.gmra.mxu0 %v307
  %v419 = vpop.f32.mrf.mxu0
  %v420 = vadd.f32 %v162, %v419
  %421 = vmatmul.f32.gmra.mxu0 %v310
  %v422 = vpop.f32.mrf.mxu0
  %v423 = vadd.f32 %v167, %v422
  %424 = vmatmul.f32.gmra.mxu0 %v313
  %v425 = vpop.f32.mrf.mxu0
  %v426 = vadd.f32 %v172, %v425
  %427 = vmatmul.f32.gmra.mxu0 %v316
  %v428 = vpop.f32.mrf.mxu0
  %v429 = vadd.f32 %v177, %v428
  %430 = vmatmul.f32.gmra.mxu0 %v319
  %v431 = vpop.f32.mrf.mxu0
  %v432 = vadd.f32 %v182, %v431
  %433 = vmatmul.f32.gmra.mxu0 %v322
  %v434 = vpop.f32.mrf.mxu0
  %v435 = vadd.f32 %v187, %v434
  %436 = vmatmul.f32.gmra.mxu0 %v325
  %v437 = vpop.f32.mrf.mxu0
  %v438 = vadd.f32 %v192, %v437
  %439 = vmatmul.f32.gmra.mxu0 %v328
  %v440 = vpop.f32.mrf.mxu0
  %v441 = vadd.f32 %v197, %v440
  %442 = vmatmul.f32.gmra.mxu0 %v331
  %v443 = vpop.f32.mrf.mxu0
  %v444 = vadd.f32 %v202, %v443
  %445 = vmatmul.f32.gmra.mxu0 %v334
  %v446 = vpop.f32.mrf.mxu0
  %v447 = vadd.f32 %v207, %v446
  %448 = vmatmul.f32.gmra.mxu0 %v337
  %v449 = vpop.f32.mrf.mxu0
  %v450 = vadd.f32 %v212, %v449
  %451 = vmatmul.f32.gmra.mxu0 %v340
  %v452 = vpop.f32.mrf.mxu0
  %v453 = vadd.f32 %v217, %v452
  %454 = vmatmul.f32.gmra.mxu0 %v343
  %v455 = vpop.f32.mrf.mxu0
  %v456 = vadd.f32 %v222, %v455
  %457 = vmatmul.f32.gmra.mxu0 %v346
  %v458 = vpop.f32.mrf.mxu0
  %v459 = vadd.f32 %v227, %v458
  %460 = vmatmul.f32.gmra.mxu0 %v349
  %v461 = vpop.f32.mrf.mxu0
  %v462 = vadd.f32 %v232, %v461
  %463 = vmatmul.f32.gmra.mxu0 %v352
  %v464 = vpop.f32.mrf.mxu0
  %v465 = vadd.f32 %v237, %v464
  %466 = vmatmul.f32.gmra.mxu0 %v355
  %v467 = vpop.f32.mrf.mxu0
  %v468 = vadd.f32 %v242, %v467
  %469 = vmatmul.f32.gmra.mxu0 %v358
  %v470 = vpop.f32.mrf.mxu0
  %v471 = vadd.f32 %v247, %v470
  %472 = vmatmul.f32.gmra.mxu0 %v361
  %v473 = vpop.f32.mrf.mxu0
  %v474 = vadd.f32 %v252, %v473
  %475 = vmatmul.f32.gmra.mxu0 %v364
  %v476 = vpop.f32.mrf.mxu0
  %v477 = vadd.f32 %v257, %v476
  %478 = vmatmul.f32.gmra.mxu0 %v367
  %v479 = vpop.f32.mrf.mxu0
  %v480 = vadd.f32 %v262, %v479
  %481 = vmatmul.f32.gmra.mxu0 %v370
  %v482 = vpop.f32.mrf.mxu0
  %v483 = vadd.f32 %v267, %v482
  %484 = vmatmul.f32.gmra.mxu0 %v373
  %v485 = vpop.f32.mrf.mxu0
  %v486 = vadd.f32 %v272, %v485
  %487 = vmatmul.f32.gmra.mxu0 %v376
  %v488 = vpop.f32.mrf.mxu0
  %v489 = vadd.f32 %v277, %v488
  %490 = vmatmul.f32.gmra.mxu0 %v379
  %v491 = vpop.f32.mrf.mxu0
  %v492 = vadd.f32 %v282, %v491
  %493 = vdwg.mxu0
  %494 = vmatpush.msra.mxu0 0.0
  %495 = vmatpush.msra.mxu0 0.0
  %496 = vmatpush.msra.mxu0 0.0
  %497 = vmatpush.msra.mxu0 0.0
  %498 = vmatpush.msra.mxu0 0.0
  %499 = vmatpush.msra.mxu0 0.0
  %500 = vmatpush.msra.mxu0 0.0
  %501 = vmatpush.msra.mxu0 0.0
  %502 = vmatpush.msra.mxu0 0.0
  %503 = vmatpush.msra.mxu0 0.0
  %504 = vmatpush.msra.mxu0 0.0
  %505 = vmatpush.msra.mxu0 0.0
  %506 = vmatpush.msra.mxu0 0.0
  %507 = vmatpush.msra.mxu0 0.0
  %508 = vmatpush.msra.mxu0 0.0
  %509 = vmatpush.msra.mxu0 %v117
  %510 = vmatmul.f32.gmra.mxu0 %v286
  %v511 = vpop.f32.mrf.mxu0
  %v512 = vadd.f32 %v127, %v511
  %513 = vmatmul.f32.gmra.mxu0 %v289
  %v514 = vpop.f32.mrf.mxu0
  %v515 = vadd.f32 %v132, %v514
  %516 = vmatmul.f32.gmra.mxu0 %v292
  %v517 = vpop.f32.mrf.mxu0
  %v518 = vadd.f32 %v137, %v517
  %519 = vmatmul.f32.gmra.mxu0 %v295
  %v520 = vpop.f32.mrf.mxu0
  %v521 = vadd.f32 %v142, %v520
  %522 = vmatmul.f32.gmra.mxu0 %v298
  %v523 = vpop.f32.mrf.mxu0
  %v524 = vadd.f32 %v147, %v523
  %525 = vmatmul.f32.gmra.mxu0 %v301
  %v526 = vpop.f32.mrf.mxu0
  %v527 = vadd.f32 %v152, %v526
  %528 = vmatmul.f32.gmra.mxu0 %v304
  %v529 = vpop.f32.mrf.mxu0
  %v530 = vadd.f32 %v157, %v529
  %531 = vmatmul.f32.gmra.mxu0 %v307
  %v532 = vpop.f32.mrf.mxu0
  %v533 = vadd.f32 %v162, %v532
  %534 = vmatmul.f32.gmra.mxu0 %v310
  %v535 = vpop.f32.mrf.mxu0
  %v536 = vadd.f32 %v167, %v535
  %537 = vmatmul.f32.gmra.mxu0 %v313
  %v538 = vpop.f32.mrf.mxu0
  %v539 = vadd.f32 %v172, %v538
  %540 = vmatmul.f32.gmra.mxu0 %v316
  %v541 = vpop.f32.mrf.mxu0
  %v542 = vadd.f32 %v177, %v541
  %543 = vmatmul.f32.gmra.mxu0 %v319
  %v544 = vpop.f32.mrf.mxu0
  %v545 = vadd.f32 %v182, %v544
  %546 = vmatmul.f32.gmra.mxu0 %v322
  %v547 = vpop.f32.mrf.mxu0
  %v548 = vadd.f32 %v187, %v547
  %549 = vmatmul.f32.gmra.mxu0 %v325
  %v550 = vpop.f32.mrf.mxu0
  %v551 = vadd.f32 %v192, %v550
  %552 = vmatmul.f32.gmra.mxu0 %v328
  %v553 = vpop.f32.mrf.mxu0
  %v554 = vadd.f32 %v197, %v553
  %555 = vmatmul.f32.gmra.mxu0 %v331
  %v556 = vpop.f32.mrf.mxu0
  %v557 = vadd.f32 %v202, %v556
  %558 = vmatmul.f32.gmra.mxu0 %v334
  %v559 = vpop.f32.mrf.mxu0
  %v560 = vadd.f32 %v207, %v559
  %561 = vmatmul.f32.gmra.mxu0 %v337
  %v562 = vpop.f32.mrf.mxu0
  %v563 = vadd.f32 %v212, %v562
  %564 = vmatmul.f32.gmra.mxu0 %v340
  %v565 = vpop.f32.mrf.mxu0
  %v566 = vadd.f32 %v217, %v565
  %567 = vmatmul.f32.gmra.mxu0 %v343
  %v568 = vpop.f32.mrf.mxu0
  %v569 = vadd.f32 %v222, %v568
  %570 = vmatmul.f32.gmra.mxu0 %v346
  %v571 = vpop.f32.mrf.mxu0
  %v572 = vadd.f32 %v227, %v571
  %573 = vmatmul.f32.gmra.mxu0 %v349
  %v574 = vpop.f32.mrf.mxu0
  %v575 = vadd.f32 %v232, %v574
  %576 = vmatmul.f32.gmra.mxu0 %v352
  %v577 = vpop.f32.mrf.mxu0
  %v578 = vadd.f32 %v237, %v577
  %579 = vmatmul.f32.gmra.mxu0 %v355
  %v580 = vpop.f32.mrf.mxu0
  %v581 = vadd.f32 %v242, %v580
  %582 = vmatmul.f32.gmra.mxu0 %v358
  %v583 = vpop.f32.mrf.mxu0
  %v584 = vadd.f32 %v247, %v583
  %585 = vmatmul.f32.gmra.mxu0 %v361
  %v586 = vpop.f32.mrf.mxu0
  %v587 = vadd.f32 %v252, %v586
  %588 = vmatmul.f32.gmra.mxu0 %v364
  %v589 = vpop.f32.mrf.mxu0
  %v590 = vadd.f32 %v257, %v589
  %591 = vmatmul.f32.gmra.mxu0 %v367
  %v592 = vpop.f32.mrf.mxu0
  %v593 = vadd.f32 %v262, %v592
  %594 = vmatmul.f32.gmra.mxu0 %v370
  %v595 = vpop.f32.mrf.mxu0
  %v596 = vadd.f32 %v267, %v595
  %597 = vmatmul.f32.gmra.mxu0 %v373
  %v598 = vpop.f32.mrf.mxu0
  %v599 = vadd.f32 %v272, %v598
  %600 = vmatmul.f32.gmra.mxu0 %v376
  %v601 = vpop.f32.mrf.mxu0
  %v602 = vadd.f32 %v277, %v601
  %603 = vmatmul.f32.gmra.mxu0 %v379
  %v604 = vpop.f32.mrf.mxu0
  %v605 = vadd.f32 %v282, %v604
  %606 = vdwg.mxu0
  %607 = vmatpush.msra.mxu0 0.0
  %608 = vmatpush.msra.mxu0 0.0
  %609 = vmatpush.msra.mxu0 0.0
  %610 = vmatpush.msra.mxu0 0.0
  %611 = vmatpush.msra.mxu0 0.0
  %612 = vmatpush.msra.mxu0 0.0
  %613 = vmatpush.msra.mxu0 0.0
  %614 = vmatpush.msra.mxu0 0.0
  %615 = vmatpush.msra.mxu0 0.0
  %616 = vmatpush.msra.mxu0 0.0
  %617 = vmatpush.msra.mxu0 0.0
  %618 = vmatpush.msra.mxu0 0.0
  %619 = vmatpush.msra.mxu0 0.0
  %620 = vmatpush.msra.mxu0 0.0
  %621 = vmatpush.msra.mxu0 0.0
  %622 = vmatpush.msra.mxu0 %v118
  %623 = vmatmul.f32.gmra.mxu0 %v286
  %v624 = vpop.f32.mrf.mxu0
  %v625 = vadd.f32 %v127, %v624
  %626 = vmatmul.f32.gmra.mxu0 %v289
  %v627 = vpop.f32.mrf.mxu0
  %v628 = vadd.f32 %v132, %v627
  %629 = vmatmul.f32.gmra.mxu0 %v292
  %v630 = vpop.f32.mrf.mxu0
  %v631 = vadd.f32 %v137, %v630
  %632 = vmatmul.f32.gmra.mxu0 %v295
  %v633 = vpop.f32.mrf.mxu0
  %v634 = vadd.f32 %v142, %v633
  %635 = vmatmul.f32.gmra.mxu0 %v298
  %v636 = vpop.f32.mrf.mxu0
  %v637 = vadd.f32 %v147, %v636
  %638 = vmatmul.f32.gmra.mxu0 %v301
  %v639 = vpop.f32.mrf.mxu0
  %v640 = vadd.f32 %v152, %v639
  %641 = vmatmul.f32.gmra.mxu0 %v304
  %v642 = vpop.f32.mrf.mxu0
  %v643 = vadd.f32 %v157, %v642
  %644 = vmatmul.f32.gmra.mxu0 %v307
  %v645 = vpop.f32.mrf.mxu0
  %v646 = vadd.f32 %v162, %v645
  %647 = vmatmul.f32.gmra.mxu0 %v310
  %v648 = vpop.f32.mrf.mxu0
  %v649 = vadd.f32 %v167, %v648
  %650 = vmatmul.f32.gmra.mxu0 %v313
  %v651 = vpop.f32.mrf.mxu0
  %v652 = vadd.f32 %v172, %v651
  %653 = vmatmul.f32.gmra.mxu0 %v316
  %v654 = vpop.f32.mrf.mxu0
  %v655 = vadd.f32 %v177, %v654
  %656 = vmatmul.f32.gmra.mxu0 %v319
  %v657 = vpop.f32.mrf.mxu0
  %v658 = vadd.f32 %v182, %v657
  %659 = vmatmul.f32.gmra.mxu0 %v322
  %v660 = vpop.f32.mrf.mxu0
  %v661 = vadd.f32 %v187, %v660
  %662 = vmatmul.f32.gmra.mxu0 %v325
  %v663 = vpop.f32.mrf.mxu0
  %v664 = vadd.f32 %v192, %v663
  %665 = vmatmul.f32.gmra.mxu0 %v328
  %v666 = vpop.f32.mrf.mxu0
  %v667 = vadd.f32 %v197, %v666
  %668 = vmatmul.f32.gmra.mxu0 %v331
  %v669 = vpop.f32.mrf.mxu0
  %v670 = vadd.f32 %v202, %v669
  %671 = vmatmul.f32.gmra.mxu0 %v334
  %v672 = vpop.f32.mrf.mxu0
  %v673 = vadd.f32 %v207, %v672
  %674 = vmatmul.f32.gmra.mxu0 %v337
  %v675 = vpop.f32.mrf.mxu0
  %v676 = vadd.f32 %v212, %v675
  %677 = vmatmul.f32.gmra.mxu0 %v340
  %v678 = vpop.f32.mrf.mxu0
  %v679 = vadd.f32 %v217, %v678
  %680 = vmatmul.f32.gmra.mxu0 %v343
  %v681 = vpop.f32.mrf.mxu0
  %v682 = vadd.f32 %v222, %v681
  %683 = vmatmul.f32.gmra.mxu0 %v346
  %v684 = vpop.f32.mrf.mxu0
  %v685 = vadd.f32 %v227, %v684
  %686 = vmatmul.f32.gmra.mxu0 %v349
  %v687 = vpop.f32.mrf.mxu0
  %v688 = vadd.f32 %v232, %v687
  %689 = vmatmul.f32.gmra.mxu0 %v352
  %v690 = vpop.f32.mrf.mxu0
  %v691 = vadd.f32 %v237, %v690
  %692 = vmatmul.f32.gmra.mxu0 %v355
  %v693 = vpop.f32.mrf.mxu0
  %v694 = vadd.f32 %v242, %v693
  %695 = vmatmul.f32.gmra.mxu0 %v358
  %v696 = vpop.f32.mrf.mxu0
  %v697 = vadd.f32 %v247, %v696
  %698 = vmatmul.f32.gmra.mxu0 %v361
  %v699 = vpop.f32.mrf.mxu0
  %v700 = vadd.f32 %v252, %v699
  %701 = vmatmul.f32.gmra.mxu0 %v364
  %v702 = vpop.f32.mrf.mxu0
  %v703 = vadd.f32 %v257, %v702
  %704 = vmatmul.f32.gmra.mxu0 %v367
  %v705 = vpop.f32.mrf.mxu0
  %v706 = vadd.f32 %v262, %v705
  %707 = vmatmul.f32.gmra.mxu0 %v370
  %v708 = vpop.f32.mrf.mxu0
  %v709 = vadd.f32 %v267, %v708
  %710 = vmatmul.f32.gmra.mxu0 %v373
  %v711 = vpop.f32.mrf.mxu0
  %v712 = vadd.f32 %v272, %v711
  %713 = vmatmul.f32.gmra.mxu0 %v376
  %v714 = vpop.f32.mrf.mxu0
  %v715 = vadd.f32 %v277, %v714
  %716 = vmatmul.f32.gmra.mxu0 %v379
  %v717 = vpop.f32.mrf.mxu0
  %v718 = vadd.f32 %v282, %v717
  %719 = vdwg.mxu0
  %720 = vmatpush.msra.mxu0 0.0
  %721 = vmatpush.msra.mxu0 0.0
  %722 = vmatpush.msra.mxu0 0.0
  %723 = vmatpush.msra.mxu0 0.0
  %724 = vmatpush.msra.mxu0 0.0
  %725 = vmatpush.msra.mxu0 0.0
  %726 = vmatpush.msra.mxu0 0.0
  %727 = vmatpush.msra.mxu0 0.0
  %728 = vmatpush.msra.mxu0 0.0
  %729 = vmatpush.msra.mxu0 0.0
  %730 = vmatpush.msra.mxu0 0.0
  %731 = vmatpush.msra.mxu0 0.0
  %732 = vmatpush.msra.mxu0 0.0
  %733 = vmatpush.msra.mxu0 0.0
  %734 = vmatpush.msra.mxu0 0.0
  %735 = vmatpush.msra.mxu0 %v119
  %736 = vmatmul.f32.gmra.mxu0 %v286
  %v737 = vpop.f32.mrf.mxu0
  %v738 = vadd.f32 %v127, %v737
  %739 = vmatmul.f32.gmra.mxu0 %v289
  %v740 = vpop.f32.mrf.mxu0
  %v741 = vadd.f32 %v132, %v740
  %742 = vmatmul.f32.gmra.mxu0 %v292
  %v743 = vpop.f32.mrf.mxu0
  %v744 = vadd.f32 %v137, %v743
  %745 = vmatmul.f32.gmra.mxu0 %v295
  %v746 = vpop.f32.mrf.mxu0
  %v747 = vadd.f32 %v142, %v746
  %748 = vmatmul.f32.gmra.mxu0 %v298
  %v749 = vpop.f32.mrf.mxu0
  %v750 = vadd.f32 %v147, %v749
  %751 = vmatmul.f32.gmra.mxu0 %v301
  %v752 = vpop.f32.mrf.mxu0
  %v753 = vadd.f32 %v152, %v752
  %754 = vmatmul.f32.gmra.mxu0 %v304
  %v755 = vpop.f32.mrf.mxu0
  %v756 = vadd.f32 %v157, %v755
  %757 = vmatmul.f32.gmra.mxu0 %v307
  %v758 = vpop.f32.mrf.mxu0
  %v759 = vadd.f32 %v162, %v758
  %760 = vmatmul.f32.gmra.mxu0 %v310
  %v761 = vpop.f32.mrf.mxu0
  %v762 = vadd.f32 %v167, %v761
  %763 = vmatmul.f32.gmra.mxu0 %v313
  %v764 = vpop.f32.mrf.mxu0
  %v765 = vadd.f32 %v172, %v764
  %766 = vmatmul.f32.gmra.mxu0 %v316
  %v767 = vpop.f32.mrf.mxu0
  %v768 = vadd.f32 %v177, %v767
  %769 = vmatmul.f32.gmra.mxu0 %v319
  %v770 = vpop.f32.mrf.mxu0
  %v771 = vadd.f32 %v182, %v770
  %772 = vmatmul.f32.gmra.mxu0 %v322
  %v773 = vpop.f32.mrf.mxu0
  %v774 = vadd.f32 %v187, %v773
  %775 = vmatmul.f32.gmra.mxu0 %v325
  %v776 = vpop.f32.mrf.mxu0
  %v777 = vadd.f32 %v192, %v776
  %778 = vmatmul.f32.gmra.mxu0 %v328
  %v779 = vpop.f32.mrf.mxu0
  %v780 = vadd.f32 %v197, %v779
  %781 = vmatmul.f32.gmra.mxu0 %v331
  %v782 = vpop.f32.mrf.mxu0
  %v783 = vadd.f32 %v202, %v782
  %784 = vmatmul.f32.gmra.mxu0 %v334
  %v785 = vpop.f32.mrf.mxu0
  %v786 = vadd.f32 %v207, %v785
  %787 = vmatmul.f32.gmra.mxu0 %v337
  %v788 = vpop.f32.mrf.mxu0
  %v789 = vadd.f32 %v212, %v788
  %790 = vmatmul.f32.gmra.mxu0 %v340
  %v791 = vpop.f32.mrf.mxu0
  %v792 = vadd.f32 %v217, %v791
  %793 = vmatmul.f32.gmra.mxu0 %v343
  %v794 = vpop.f32.mrf.mxu0
  %v795 = vadd.f32 %v222, %v794
  %796 = vmatmul.f32.gmra.mxu0 %v346
  %v797 = vpop.f32.mrf.mxu0
  %v798 = vadd.f32 %v227, %v797
  %799 = vmatmul.f32.gmra.mxu0 %v349
  %v800 = vpop.f32.mrf.mxu0
  %v801 = vadd.f32 %v232, %v800
  %802 = vmatmul.f32.gmra.mxu0 %v352
  %v803 = vpop.f32.mrf.mxu0
  %v804 = vadd.f32 %v237, %v803
  %805 = vmatmul.f32.gmra.mxu0 %v355
  %v806 = vpop.f32.mrf.mxu0
  %v807 = vadd.f32 %v242, %v806
  %808 = vmatmul.f32.gmra.mxu0 %v358
  %v809 = vpop.f32.mrf.mxu0
  %v810 = vadd.f32 %v247, %v809
  %811 = vmatmul.f32.gmra.mxu0 %v361
  %v812 = vpop.f32.mrf.mxu0
  %v813 = vadd.f32 %v252, %v812
  %814 = vmatmul.f32.gmra.mxu0 %v364
  %v815 = vpop.f32.mrf.mxu0
  %v816 = vadd.f32 %v257, %v815
  %817 = vmatmul.f32.gmra.mxu0 %v367
  %v818 = vpop.f32.mrf.mxu0
  %v819 = vadd.f32 %v262, %v818
  %820 = vmatmul.f32.gmra.mxu0 %v370
  %v821 = vpop.f32.mrf.mxu0
  %v822 = vadd.f32 %v267, %v821
  %823 = vmatmul.f32.gmra.mxu0 %v373
  %v824 = vpop.f32.mrf.mxu0
  %v825 = vadd.f32 %v272, %v824
  %826 = vmatmul.f32.gmra.mxu0 %v376
  %v827 = vpop.f32.mrf.mxu0
  %v828 = vadd.f32 %v277, %v827
  %829 = vmatmul.f32.gmra.mxu0 %v379
  %v830 = vpop.f32.mrf.mxu0
  %v831 = vadd.f32 %v282, %v830
  %832 = vdwg.mxu0
  %833 = vmatpush.msra.mxu0 0.0
  %834 = vmatpush.msra.mxu0 0.0
  %835 = vmatpush.msra.mxu0 0.0
  %836 = vmatpush.msra.mxu0 0.0
  %837 = vmatpush.msra.mxu0 0.0
  %838 = vmatpush.msra.mxu0 0.0
  %839 = vmatpush.msra.mxu0 0.0
  %840 = vmatpush.msra.mxu0 0.0
  %841 = vmatpush.msra.mxu0 0.0
  %842 = vmatpush.msra.mxu0 0.0
  %843 = vmatpush.msra.mxu0 0.0
  %844 = vmatpush.msra.mxu0 0.0
  %845 = vmatpush.msra.mxu0 0.0
  %846 = vmatpush.msra.mxu0 0.0
  %847 = vmatpush.msra.mxu0 0.0
  %848 = vmatpush.msra.mxu0 %v120
  %849 = vmatmul.f32.gmra.mxu0 %v286
  %v850 = vpop.f32.mrf.mxu0
  %v851 = vadd.f32 %v127, %v850
  %852 = vmatmul.f32.gmra.mxu0 %v289
  %v853 = vpop.f32.mrf.mxu0
  %v854 = vadd.f32 %v132, %v853
  %855 = vmatmul.f32.gmra.mxu0 %v292
  %v856 = vpop.f32.mrf.mxu0
  %v857 = vadd.f32 %v137, %v856
  %858 = vmatmul.f32.gmra.mxu0 %v295
  %v859 = vpop.f32.mrf.mxu0
  %v860 = vadd.f32 %v142, %v859
  %861 = vmatmul.f32.gmra.mxu0 %v298
  %v862 = vpop.f32.mrf.mxu0
  %v863 = vadd.f32 %v147, %v862
  %864 = vmatmul.f32.gmra.mxu0 %v301
  %v865 = vpop.f32.mrf.mxu0
  %v866 = vadd.f32 %v152, %v865
  %867 = vmatmul.f32.gmra.mxu0 %v304
  %v868 = vpop.f32.mrf.mxu0
  %v869 = vadd.f32 %v157, %v868
  %870 = vmatmul.f32.gmra.mxu0 %v307
  %v871 = vpop.f32.mrf.mxu0
  %v872 = vadd.f32 %v162, %v871
  %873 = vmatmul.f32.gmra.mxu0 %v310
  %v874 = vpop.f32.mrf.mxu0
  %v875 = vadd.f32 %v167, %v874
  %876 = vmatmul.f32.gmra.mxu0 %v313
  %v877 = vpop.f32.mrf.mxu0
  %v878 = vadd.f32 %v172, %v877
  %879 = vmatmul.f32.gmra.mxu0 %v316
  %v880 = vpop.f32.mrf.mxu0
  %v881 = vadd.f32 %v177, %v880
  %882 = vmatmul.f32.gmra.mxu0 %v319
  %v883 = vpop.f32.mrf.mxu0
  %v884 = vadd.f32 %v182, %v883
  %885 = vmatmul.f32.gmra.mxu0 %v322
  %v886 = vpop.f32.mrf.mxu0
  %v887 = vadd.f32 %v187, %v886
  %888 = vmatmul.f32.gmra.mxu0 %v325
  %v889 = vpop.f32.mrf.mxu0
  %v890 = vadd.f32 %v192, %v889
  %891 = vmatmul.f32.gmra.mxu0 %v328
  %v892 = vpop.f32.mrf.mxu0
  %v893 = vadd.f32 %v197, %v892
  %894 = vmatmul.f32.gmra.mxu0 %v331
  %v895 = vpop.f32.mrf.mxu0
  %v896 = vadd.f32 %v202, %v895
  %897 = vmatmul.f32.gmra.mxu0 %v334
  %v898 = vpop.f32.mrf.mxu0
  %v899 = vadd.f32 %v207, %v898
  %900 = vmatmul.f32.gmra.mxu0 %v337
  %v901 = vpop.f32.mrf.mxu0
  %v902 = vadd.f32 %v212, %v901
  %903 = vmatmul.f32.gmra.mxu0 %v340
  %v904 = vpop.f32.mrf.mxu0
  %v905 = vadd.f32 %v217, %v904
  %906 = vmatmul.f32.gmra.mxu0 %v343
  %v907 = vpop.f32.mrf.mxu0
  %v908 = vadd.f32 %v222, %v907
  %909 = vmatmul.f32.gmra.mxu0 %v346
  %v910 = vpop.f32.mrf.mxu0
  %v911 = vadd.f32 %v227, %v910
  %912 = vmatmul.f32.gmra.mxu0 %v349
  %v913 = vpop.f32.mrf.mxu0
  %v914 = vadd.f32 %v232, %v913
  %915 = vmatmul.f32.gmra.mxu0 %v352
  %v916 = vpop.f32.mrf.mxu0
  %v917 = vadd.f32 %v237, %v916
  %918 = vmatmul.f32.gmra.mxu0 %v355
  %v919 = vpop.f32.mrf.mxu0
  %v920 = vadd.f32 %v242, %v919
  %921 = vmatmul.f32.gmra.mxu0 %v358
  %v922 = vpop.f32.mrf.mxu0
  %v923 = vadd.f32 %v247, %v922
  %924 = vmatmul.f32.gmra.mxu0 %v361
  %v925 = vpop.f32.mrf.mxu0
  %v926 = vadd.f32 %v252, %v925
  %927 = vmatmul.f32.gmra.mxu0 %v364
  %v928 = vpop.f32.mrf.mxu0
  %v929 = vadd.f32 %v257, %v928
  %930 = vmatmul.f32.gmra.mxu0 %v367
  %v931 = vpop.f32.mrf.mxu0
  %v932 = vadd.f32 %v262, %v931
  %933 = vmatmul.f32.gmra.mxu0 %v370
  %v934 = vpop.f32.mrf.mxu0
  %v935 = vadd.f32 %v267, %v934
  %936 = vmatmul.f32.gmra.mxu0 %v373
  %v937 = vpop.f32.mrf.mxu0
  %v938 = vadd.f32 %v272, %v937
  %939 = vmatmul.f32.gmra.mxu0 %v376
  %v940 = vpop.f32.mrf.mxu0
  %v941 = vadd.f32 %v277, %v940
  %942 = vmatmul.f32.gmra.mxu0 %v379
  %v943 = vpop.f32.mrf.mxu0
  %v944 = vadd.f32 %v282, %v943
  %945 = vdwg.mxu0
  %946 = vmatpush.msra.mxu0 0.0
  %947 = vmatpush.msra.mxu0 0.0
  %948 = vmatpush.msra.mxu0 0.0
  %949 = vmatpush.msra.mxu0 0.0
  %950 = vmatpush.msra.mxu0 0.0
  %951 = vmatpush.msra.mxu0 0.0
  %952 = vmatpush.msra.mxu0 0.0
  %953 = vmatpush.msra.mxu0 0.0
  %954 = vmatpush.msra.mxu0 0.0
  %955 = vmatpush.msra.mxu0 0.0
  %956 = vmatpush.msra.mxu0 0.0
  %957 = vmatpush.msra.mxu0 0.0
  %958 = vmatpush.msra.mxu0 0.0
  %959 = vmatpush.msra.mxu0 0.0
  %960 = vmatpush.msra.mxu0 0.0
  %961 = vmatpush.msra.mxu0 %v121
  %962 = vmatmul.f32.gmra.mxu0 %v286
  %v963 = vpop.f32.mrf.mxu0
  %v964 = vadd.f32 %v127, %v963
  %965 = vmatmul.f32.gmra.mxu0 %v289
  %v966 = vpop.f32.mrf.mxu0
  %v967 = vadd.f32 %v132, %v966
  %968 = vmatmul.f32.gmra.mxu0 %v292
  %v969 = vpop.f32.mrf.mxu0
  %v970 = vadd.f32 %v137, %v969
  %971 = vmatmul.f32.gmra.mxu0 %v295
  %v972 = vpop.f32.mrf.mxu0
  %v973 = vadd.f32 %v142, %v972
  %974 = vmatmul.f32.gmra.mxu0 %v298
  %v975 = vpop.f32.mrf.mxu0
  %v976 = vadd.f32 %v147, %v975
  %977 = vmatmul.f32.gmra.mxu0 %v301
  %v978 = vpop.f32.mrf.mxu0
  %v979 = vadd.f32 %v152, %v978
  %980 = vmatmul.f32.gmra.mxu0 %v304
  %v981 = vpop.f32.mrf.mxu0
  %v982 = vadd.f32 %v157, %v981
  %983 = vmatmul.f32.gmra.mxu0 %v307
  %v984 = vpop.f32.mrf.mxu0
  %v985 = vadd.f32 %v162, %v984
  %986 = vmatmul.f32.gmra.mxu0 %v310
  %v987 = vpop.f32.mrf.mxu0
  %v988 = vadd.f32 %v167, %v987
  %989 = vmatmul.f32.gmra.mxu0 %v313
  %v990 = vpop.f32.mrf.mxu0
  %v991 = vadd.f32 %v172, %v990
  %992 = vmatmul.f32.gmra.mxu0 %v316
  %v993 = vpop.f32.mrf.mxu0
  %v994 = vadd.f32 %v177, %v993
  %995 = vmatmul.f32.gmra.mxu0 %v319
  %v996 = vpop.f32.mrf.mxu0
  %v997 = vadd.f32 %v182, %v996
  %998 = vmatmul.f32.gmra.mxu0 %v322
  %v999 = vpop.f32.mrf.mxu0
  %v1000 = vadd.f32 %v187, %v999
  %1001 = vmatmul.f32.gmra.mxu0 %v325
  %v1002 = vpop.f32.mrf.mxu0
  %v1003 = vadd.f32 %v192, %v1002
  %1004 = vmatmul.f32.gmra.mxu0 %v328
  %v1005 = vpop.f32.mrf.mxu0
  %v1006 = vadd.f32 %v197, %v1005
  %1007 = vmatmul.f32.gmra.mxu0 %v331
  %v1008 = vpop.f32.mrf.mxu0
  %v1009 = vadd.f32 %v202, %v1008
  %1010 = vmatmul.f32.gmra.mxu0 %v334
  %v1011 = vpop.f32.mrf.mxu0
  %v1012 = vadd.f32 %v207, %v1011
  %1013 = vmatmul.f32.gmra.mxu0 %v337
  %v1014 = vpop.f32.mrf.mxu0
  %v1015 = vadd.f32 %v212, %v1014
  %1016 = vmatmul.f32.gmra.mxu0 %v340
  %v1017 = vpop.f32.mrf.mxu0
  %v1018 = vadd.f32 %v217, %v1017
  %1019 = vmatmul.f32.gmra.mxu0 %v343
  %v1020 = vpop.f32.mrf.mxu0
  %v1021 = vadd.f32 %v222, %v1020
  %1022 = vmatmul.f32.gmra.mxu0 %v346
  %v1023 = vpop.f32.mrf.mxu0
  %v1024 = vadd.f32 %v227, %v1023
  %1025 = vmatmul.f32.gmra.mxu0 %v349
  %v1026 = vpop.f32.mrf.mxu0
  %v1027 = vadd.f32 %v232, %v1026
  %1028 = vmatmul.f32.gmra.mxu0 %v352
  %v1029 = vpop.f32.mrf.mxu0
  %v1030 = vadd.f32 %v237, %v1029
  %1031 = vmatmul.f32.gmra.mxu0 %v355
  %v1032 = vpop.f32.mrf.mxu0
  %v1033 = vadd.f32 %v242, %v1032
  %1034 = vmatmul.f32.gmra.mxu0 %v358
  %v1035 = vpop.f32.mrf.mxu0
  %v1036 = vadd.f32 %v247, %v1035
  %1037 = vmatmul.f32.gmra.mxu0 %v361
  %v1038 = vpop.f32.mrf.mxu0
  %v1039 = vadd.f32 %v252, %v1038
  %1040 = vmatmul.f32.gmra.mxu0 %v364
  %v1041 = vpop.f32.mrf.mxu0
  %v1042 = vadd.f32 %v257, %v1041
  %1043 = vmatmul.f32.gmra.mxu0 %v367
  %v1044 = vpop.f32.mrf.mxu0
  %v1045 = vadd.f32 %v262, %v1044
  %1046 = vmatmul.f32.gmra.mxu0 %v370
  %v1047 = vpop.f32.mrf.mxu0
  %v1048 = vadd.f32 %v267, %v1047
  %1049 = vmatmul.f32.gmra.mxu0 %v373
  %v1050 = vpop.f32.mrf.mxu0
  %v1051 = vadd.f32 %v272, %v1050
  %1052 = vmatmul.f32.gmra.mxu0 %v376
  %v1053 = vpop.f32.mrf.mxu0
  %v1054 = vadd.f32 %v277, %v1053
  %1055 = vmatmul.f32.gmra.mxu0 %v379
  %v1056 = vpop.f32.mrf.mxu0
  %v1057 = vadd.f32 %v282, %v1056
  %1058 = vdwg.mxu0
  %1059 = vmatpush.msra.mxu0 0.0
  %1060 = vmatpush.msra.mxu0 0.0
  %1061 = vmatpush.msra.mxu0 0.0
  %1062 = vmatpush.msra.mxu0 0.0
  %1063 = vmatpush.msra.mxu0 0.0
  %1064 = vmatpush.msra.mxu0 0.0
  %1065 = vmatpush.msra.mxu0 0.0
  %1066 = vmatpush.msra.mxu0 0.0
  %1067 = vmatpush.msra.mxu0 0.0
  %1068 = vmatpush.msra.mxu0 0.0
  %1069 = vmatpush.msra.mxu0 0.0
  %1070 = vmatpush.msra.mxu0 0.0
  %1071 = vmatpush.msra.mxu0 0.0
  %1072 = vmatpush.msra.mxu0 0.0
  %1073 = vmatpush.msra.mxu0 0.0
  %1074 = vmatpush.msra.mxu0 %v122
  %1075 = vmatmul.f32.gmra.mxu0 %v286
  %v1076 = vpop.f32.mrf.mxu0
  %v1077 = vadd.f32 %v127, %v1076
  %1078 = vmatmul.f32.gmra.mxu0 %v289
  %v1079 = vpop.f32.mrf.mxu0
  %v1080 = vadd.f32 %v132, %v1079
  %1081 = vmatmul.f32.gmra.mxu0 %v292
  %v1082 = vpop.f32.mrf.mxu0
  %v1083 = vadd.f32 %v137, %v1082
  %1084 = vmatmul.f32.gmra.mxu0 %v295
  %v1085 = vpop.f32.mrf.mxu0
  %v1086 = vadd.f32 %v142, %v1085
  %1087 = vmatmul.f32.gmra.mxu0 %v298
  %v1088 = vpop.f32.mrf.mxu0
  %v1089 = vadd.f32 %v147, %v1088
  %1090 = vmatmul.f32.gmra.mxu0 %v301
  %v1091 = vpop.f32.mrf.mxu0
  %v1092 = vadd.f32 %v152, %v1091
  %1093 = vmatmul.f32.gmra.mxu0 %v304
  %v1094 = vpop.f32.mrf.mxu0
  %v1095 = vadd.f32 %v157, %v1094
  %1096 = vmatmul.f32.gmra.mxu0 %v307
  %v1097 = vpop.f32.mrf.mxu0
  %v1098 = vadd.f32 %v162, %v1097
  %1099 = vmatmul.f32.gmra.mxu0 %v310
  %v1100 = vpop.f32.mrf.mxu0
  %v1101 = vadd.f32 %v167, %v1100
  %1102 = vmatmul.f32.gmra.mxu0 %v313
  %v1103 = vpop.f32.mrf.mxu0
  %v1104 = vadd.f32 %v172, %v1103
  %1105 = vmatmul.f32.gmra.mxu0 %v316
  %v1106 = vpop.f32.mrf.mxu0
  %v1107 = vadd.f32 %v177, %v1106
  %1108 = vmatmul.f32.gmra.mxu0 %v319
  %v1109 = vpop.f32.mrf.mxu0
  %v1110 = vadd.f32 %v182, %v1109
  %1111 = vmatmul.f32.gmra.mxu0 %v322
  %v1112 = vpop.f32.mrf.mxu0
  %v1113 = vadd.f32 %v187, %v1112
  %1114 = vmatmul.f32.gmra.mxu0 %v325
  %v1115 = vpop.f32.mrf.mxu0
  %v1116 = vadd.f32 %v192, %v1115
  %1117 = vmatmul.f32.gmra.mxu0 %v328
  %v1118 = vpop.f32.mrf.mxu0
  %v1119 = vadd.f32 %v197, %v1118
  %1120 = vmatmul.f32.gmra.mxu0 %v331
  %v1121 = vpop.f32.mrf.mxu0
  %v1122 = vadd.f32 %v202, %v1121
  %1123 = vmatmul.f32.gmra.mxu0 %v334
  %v1124 = vpop.f32.mrf.mxu0
  %v1125 = vadd.f32 %v207, %v1124
  %1126 = vmatmul.f32.gmra.mxu0 %v337
  %v1127 = vpop.f32.mrf.mxu0
  %v1128 = vadd.f32 %v212, %v1127
  %1129 = vmatmul.f32.gmra.mxu0 %v340
  %v1130 = vpop.f32.mrf.mxu0
  %v1131 = vadd.f32 %v217, %v1130
  %1132 = vmatmul.f32.gmra.mxu0 %v343
  %v1133 = vpop.f32.mrf.mxu0
  %v1134 = vadd.f32 %v222, %v1133
  %1135 = vmatmul.f32.gmra.mxu0 %v346
  %v1136 = vpop.f32.mrf.mxu0
  %v1137 = vadd.f32 %v227, %v1136
  %1138 = vmatmul.f32.gmra.mxu0 %v349
  %v1139 = vpop.f32.mrf.mxu0
  %v1140 = vadd.f32 %v232, %v1139
  %1141 = vmatmul.f32.gmra.mxu0 %v352
  %v1142 = vpop.f32.mrf.mxu0
  %v1143 = vadd.f32 %v237, %v1142
  %1144 = vmatmul.f32.gmra.mxu0 %v355
  %v1145 = vpop.f32.mrf.mxu0
  %v1146 = vadd.f32 %v242, %v1145
  %1147 = vmatmul.f32.gmra.mxu0 %v358
  %v1148 = vpop.f32.mrf.mxu0
  %v1149 = vadd.f32 %v247, %v1148
  %1150 = vmatmul.f32.gmra.mxu0 %v361
  %v1151 = vpop.f32.mrf.mxu0
  %v1152 = vadd.f32 %v252, %v1151
  %1153 = vmatmul.f32.gmra.mxu0 %v364
  %v1154 = vpop.f32.mrf.mxu0
  %v1155 = vadd.f32 %v257, %v1154
  %1156 = vmatmul.f32.gmra.mxu0 %v367
  %v1157 = vpop.f32.mrf.mxu0
  %v1158 = vadd.f32 %v262, %v1157
  %1159 = vmatmul.f32.gmra.mxu0 %v370
  %v1160 = vpop.f32.mrf.mxu0
  %v1161 = vadd.f32 %v267, %v1160
  %1162 = vmatmul.f32.gmra.mxu0 %v373
  %v1163 = vpop.f32.mrf.mxu0
  %v1164 = vadd.f32 %v272, %v1163
  %1165 = vmatmul.f32.gmra.mxu0 %v376
  %v1166 = vpop.f32.mrf.mxu0
  %v1167 = vadd.f32 %v277, %v1166
  %1168 = vmatmul.f32.gmra.mxu0 %v379
  %v1169 = vpop.f32.mrf.mxu0
  %v1170 = vadd.f32 %v282, %v1169
  %1171 = vdwg.mxu0
  %1172 = vmatpush.msra.mxu0 0.0
  %1173 = vmatpush.msra.mxu0 0.0
  %1174 = vmatpush.msra.mxu0 0.0
  %1175 = vmatpush.msra.mxu0 0.0
  %1176 = vmatpush.msra.mxu0 0.0
  %1177 = vmatpush.msra.mxu0 0.0
  %1178 = vmatpush.msra.mxu0 0.0
  %1179 = vmatpush.msra.mxu0 0.0
  %1180 = vmatpush.msra.mxu0 0.0
  %1181 = vmatpush.msra.mxu0 0.0
  %1182 = vmatpush.msra.mxu0 0.0
  %1183 = vmatpush.msra.mxu0 0.0
  %1184 = vmatpush.msra.mxu0 0.0
  %1185 = vmatpush.msra.mxu0 0.0
  %1186 = vmatpush.msra.mxu0 0.0
  %1187 = vmatpush.msra.mxu0 %v123
  %1188 = vmatmul.f32.gmra.mxu0 %v286
  %v1189 = vpop.f32.mrf.mxu0
  %v1190 = vadd.f32 %v127, %v1189
  %1191 = vmatmul.f32.gmra.mxu0 %v289
  %v1192 = vpop.f32.mrf.mxu0
  %v1193 = vadd.f32 %v132, %v1192
  %1194 = vmatmul.f32.gmra.mxu0 %v292
  %v1195 = vpop.f32.mrf.mxu0
  %v1196 = vadd.f32 %v137, %v1195
  %1197 = vmatmul.f32.gmra.mxu0 %v295
  %v1198 = vpop.f32.mrf.mxu0
  %v1199 = vadd.f32 %v142, %v1198
  %1200 = vmatmul.f32.gmra.mxu0 %v298
  %v1201 = vpop.f32.mrf.mxu0
  %v1202 = vadd.f32 %v147, %v1201
  %1203 = vmatmul.f32.gmra.mxu0 %v301
  %v1204 = vpop.f32.mrf.mxu0
  %v1205 = vadd.f32 %v152, %v1204
  %1206 = vmatmul.f32.gmra.mxu0 %v304
  %v1207 = vpop.f32.mrf.mxu0
  %v1208 = vadd.f32 %v157, %v1207
  %1209 = vmatmul.f32.gmra.mxu0 %v307
  %v1210 = vpop.f32.mrf.mxu0
  %v1211 = vadd.f32 %v162, %v1210
  %1212 = vmatmul.f32.gmra.mxu0 %v310
  %v1213 = vpop.f32.mrf.mxu0
  %v1214 = vadd.f32 %v167, %v1213
  %1215 = vmatmul.f32.gmra.mxu0 %v313
  %v1216 = vpop.f32.mrf.mxu0
  %v1217 = vadd.f32 %v172, %v1216
  %1218 = vmatmul.f32.gmra.mxu0 %v316
  %v1219 = vpop.f32.mrf.mxu0
  %v1220 = vadd.f32 %v177, %v1219
  %1221 = vmatmul.f32.gmra.mxu0 %v319
  %v1222 = vpop.f32.mrf.mxu0
  %v1223 = vadd.f32 %v182, %v1222
  %1224 = vmatmul.f32.gmra.mxu0 %v322
  %v1225 = vpop.f32.mrf.mxu0
  %v1226 = vadd.f32 %v187, %v1225
  %1227 = vmatmul.f32.gmra.mxu0 %v325
  %v1228 = vpop.f32.mrf.mxu0
  %v1229 = vadd.f32 %v192, %v1228
  %1230 = vmatmul.f32.gmra.mxu0 %v328
  %v1231 = vpop.f32.mrf.mxu0
  %v1232 = vadd.f32 %v197, %v1231
  %1233 = vmatmul.f32.gmra.mxu0 %v331
  %v1234 = vpop.f32.mrf.mxu0
  %v1235 = vadd.f32 %v202, %v1234
  %1236 = vmatmul.f32.gmra.mxu0 %v334
  %v1237 = vpop.f32.mrf.mxu0
  %v1238 = vadd.f32 %v207, %v1237
  %1239 = vmatmul.f32.gmra.mxu0 %v337
  %v1240 = vpop.f32.mrf.mxu0
  %v1241 = vadd.f32 %v212, %v1240
  %1242 = vmatmul.f32.gmra.mxu0 %v340
  %v1243 = vpop.f32.mrf.mxu0
  %v1244 = vadd.f32 %v217, %v1243
  %1245 = vmatmul.f32.gmra.mxu0 %v343
  %v1246 = vpop.f32.mrf.mxu0
  %v1247 = vadd.f32 %v222, %v1246
  %1248 = vmatmul.f32.gmra.mxu0 %v346
  %v1249 = vpop.f32.mrf.mxu0
  %v1250 = vadd.f32 %v227, %v1249
  %1251 = vmatmul.f32.gmra.mxu0 %v349
  %v1252 = vpop.f32.mrf.mxu0
  %v1253 = vadd.f32 %v232, %v1252
  %1254 = vmatmul.f32.gmra.mxu0 %v352
  %v1255 = vpop.f32.mrf.mxu0
  %v1256 = vadd.f32 %v237, %v1255
  %1257 = vmatmul.f32.gmra.mxu0 %v355
  %v1258 = vpop.f32.mrf.mxu0
  %v1259 = vadd.f32 %v242, %v1258
  %1260 = vmatmul.f32.gmra.mxu0 %v358
  %v1261 = vpop.f32.mrf.mxu0
  %v1262 = vadd.f32 %v247, %v1261
  %1263 = vmatmul.f32.gmra.mxu0 %v361
  %v1264 = vpop.f32.mrf.mxu0
  %v1265 = vadd.f32 %v252, %v1264
  %1266 = vmatmul.f32.gmra.mxu0 %v364
  %v1267 = vpop.f32.mrf.mxu0
  %v1268 = vadd.f32 %v257, %v1267
  %1269 = vmatmul.f32.gmra.mxu0 %v367
  %v1270 = vpop.f32.mrf.mxu0
  %v1271 = vadd.f32 %v262, %v1270
  %1272 = vmatmul.f32.gmra.mxu0 %v370
  %v1273 = vpop.f32.mrf.mxu0
  %v1274 = vadd.f32 %v267, %v1273
  %1275 = vmatmul.f32.gmra.mxu0 %v373
  %v1276 = vpop.f32.mrf.mxu0
  %v1277 = vadd.f32 %v272, %v1276
  %1278 = vmatmul.f32.gmra.mxu0 %v376
  %v1279 = vpop.f32.mrf.mxu0
  %v1280 = vadd.f32 %v277, %v1279
  %1281 = vmatmul.f32.gmra.mxu0 %v379
  %v1282 = vpop.f32.mrf.mxu0
  %v1283 = vadd.f32 %v282, %v1282
  %1284 = vdwg.mxu0
  %v1285 = vmax.f32 %v399, 0.0
  %v1286 = vmax.f32 %v512, 0.0
  %v1287 = vmax.f32 %v625, 0.0
  %v1288 = vmax.f32 %v738, 0.0
  %v1289 = vmax.f32 %v851, 0.0
  %v1290 = vmax.f32 %v964, 0.0
  %v1291 = vmax.f32 %v1077, 0.0
  %v1292 = vmax.f32 %v1190, 0.0
  %v1293 = vmax.f32 %v402, 0.0
  %v1294 = vmax.f32 %v515, 0.0
  %v1295 = vmax.f32 %v628, 0.0
  %v1296 = vmax.f32 %v741, 0.0
  %v1297 = vmax.f32 %v854, 0.0
  %v1298 = vmax.f32 %v967, 0.0
  %v1299 = vmax.f32 %v1080, 0.0
  %v1300 = vmax.f32 %v1193, 0.0
  %v1301 = vmax.f32 %v405, 0.0
  %v1302 = vmax.f32 %v518, 0.0
  %v1303 = vmax.f32 %v631, 0.0
  %v1304 = vmax.f32 %v744, 0.0
  %v1305 = vmax.f32 %v857, 0.0
  %v1306 = vmax.f32 %v970, 0.0
  %v1307 = vmax.f32 %v1083, 0.0
  %v1308 = vmax.f32 %v1196, 0.0
  %v1309 = vmax.f32 %v408, 0.0
  %v1310 = vmax.f32 %v521, 0.0
  %v1311 = vmax.f32 %v634, 0.0
  %v1312 = vmax.f32 %v747, 0.0
  %v1313 = vmax.f32 %v860, 0.0
  %v1314 = vmax.f32 %v973, 0.0
  %v1315 = vmax.f32 %v1086, 0.0
  %v1316 = vmax.f32 %v1199, 0.0
  %v1317 = vmax.f32 %v411, 0.0
  %v1318 = vmax.f32 %v524, 0.0
  %v1319 = vmax.f32 %v637, 0.0
  %v1320 = vmax.f32 %v750, 0.0
  %v1321 = vmax.f32 %v863, 0.0
  %v1322 = vmax.f32 %v976, 0.0
  %v1323 = vmax.f32 %v1089, 0.0
  %v1324 = vmax.f32 %v1202, 0.0
  %v1325 = vmax.f32 %v414, 0.0
  %v1326 = vmax.f32 %v527, 0.0
  %v1327 = vmax.f32 %v640, 0.0
  %v1328 = vmax.f32 %v753, 0.0
  %v1329 = vmax.f32 %v866, 0.0
  %v1330 = vmax.f32 %v979, 0.0
  %v1331 = vmax.f32 %v1092, 0.0
  %v1332 = vmax.f32 %v1205, 0.0
  %v1333 = vmax.f32 %v417, 0.0
  %v1334 = vmax.f32 %v530, 0.0
  %v1335 = vmax.f32 %v643, 0.0
  %v1336 = vmax.f32 %v756, 0.0
  %v1337 = vmax.f32 %v869, 0.0
  %v1338 = vmax.f32 %v982, 0.0
  %v1339 = vmax.f32 %v1095, 0.0
  %v1340 = vmax.f32 %v1208, 0.0
  %v1341 = vmax.f32 %v420, 0.0
  %v1342 = vmax.f32 %v533, 0.0
  %v1343 = vmax.f32 %v646, 0.0
  %v1344 = vmax.f32 %v759, 0.0
  %v1345 = vmax.f32 %v872, 0.0
  %v1346 = vmax.f32 %v985, 0.0
  %v1347 = vmax.f32 %v1098, 0.0
  %v1348 = vmax.f32 %v1211, 0.0
  %v1349 = vmax.f32 %v423, 0.0
  %v1350 = vmax.f32 %v536, 0.0
  %v1351 = vmax.f32 %v649, 0.0
  %v1352 = vmax.f32 %v762, 0.0
  %v1353 = vmax.f32 %v875, 0.0
  %v1354 = vmax.f32 %v988, 0.0
  %v1355 = vmax.f32 %v1101, 0.0
  %v1356 = vmax.f32 %v1214, 0.0
  %v1357 = vmax.f32 %v426, 0.0
  %v1358 = vmax.f32 %v539, 0.0
  %v1359 = vmax.f32 %v652, 0.0
  %v1360 = vmax.f32 %v765, 0.0
  %v1361 = vmax.f32 %v878, 0.0
  %v1362 = vmax.f32 %v991, 0.0
  %v1363 = vmax.f32 %v1104, 0.0
  %v1364 = vmax.f32 %v1217, 0.0
  %v1365 = vmax.f32 %v429, 0.0
  %v1366 = vmax.f32 %v542, 0.0
  %v1367 = vmax.f32 %v655, 0.0
  %v1368 = vmax.f32 %v768, 0.0
  %v1369 = vmax.f32 %v881, 0.0
  %v1370 = vmax.f32 %v994, 0.0
  %v1371 = vmax.f32 %v1107, 0.0
  %v1372 = vmax.f32 %v1220, 0.0
  %v1373 = vmax.f32 %v432, 0.0
  %v1374 = vmax.f32 %v545, 0.0
  %v1375 = vmax.f32 %v658, 0.0
  %v1376 = vmax.f32 %v771, 0.0
  %v1377 = vmax.f32 %v884, 0.0
  %v1378 = vmax.f32 %v997, 0.0
  %v1379 = vmax.f32 %v1110, 0.0
  %v1380 = vmax.f32 %v1223, 0.0
  %v1381 = vmax.f32 %v435, 0.0
  %v1382 = vmax.f32 %v548, 0.0
  %v1383 = vmax.f32 %v661, 0.0
  %v1384 = vmax.f32 %v774, 0.0
  %v1385 = vmax.f32 %v887, 0.0
  %v1386 = vmax.f32 %v1000, 0.0
  %v1387 = vmax.f32 %v1113, 0.0
  %v1388 = vmax.f32 %v1226, 0.0
  %v1389 = vmax.f32 %v438, 0.0
  %v1390 = vmax.f32 %v551, 0.0
  %v1391 = vmax.f32 %v664, 0.0
  %v1392 = vmax.f32 %v777, 0.0
  %v1393 = vmax.f32 %v890, 0.0
  %v1394 = vmax.f32 %v1003, 0.0
  %v1395 = vmax.f32 %v1116, 0.0
  %v1396 = vmax.f32 %v1229, 0.0
  %v1397 = vmax.f32 %v441, 0.0
  %v1398 = vmax.f32 %v554, 0.0
  %v1399 = vmax.f32 %v667, 0.0
  %v1400 = vmax.f32 %v780, 0.0
  %v1401 = vmax.f32 %v893, 0.0
  %v1402 = vmax.f32 %v1006, 0.0
  %v1403 = vmax.f32 %v1119, 0.0
  %v1404 = vmax.f32 %v1232, 0.0
  %v1405 = vmax.f32 %v444, 0.0
  %v1406 = vmax.f32 %v557, 0.0
  %v1407 = vmax.f32 %v670, 0.0
  %v1408 = vmax.f32 %v783, 0.0
  %v1409 = vmax.f32 %v896, 0.0
  %v1410 = vmax.f32 %v1009, 0.0
  %v1411 = vmax.f32 %v1122, 0.0
  %v1412 = vmax.f32 %v1235, 0.0
  %v1413 = vmax.f32 %v447, 0.0
  %v1414 = vmax.f32 %v560, 0.0
  %v1415 = vmax.f32 %v673, 0.0
  %v1416 = vmax.f32 %v786, 0.0
  %v1417 = vmax.f32 %v899, 0.0
  %v1418 = vmax.f32 %v1012, 0.0
  %v1419 = vmax.f32 %v1125, 0.0
  %v1420 = vmax.f32 %v1238, 0.0
  %v1421 = vmax.f32 %v450, 0.0
  %v1422 = vmax.f32 %v563, 0.0
  %v1423 = vmax.f32 %v676, 0.0
  %v1424 = vmax.f32 %v789, 0.0
  %v1425 = vmax.f32 %v902, 0.0
  %v1426 = vmax.f32 %v1015, 0.0
  %v1427 = vmax.f32 %v1128, 0.0
  %v1428 = vmax.f32 %v1241, 0.0
  %v1429 = vmax.f32 %v453, 0.0
  %v1430 = vmax.f32 %v566, 0.0
  %v1431 = vmax.f32 %v679, 0.0
  %v1432 = vmax.f32 %v792, 0.0
  %v1433 = vmax.f32 %v905, 0.0
  %v1434 = vmax.f32 %v1018, 0.0
  %v1435 = vmax.f32 %v1131, 0.0
  %v1436 = vmax.f32 %v1244, 0.0
  %v1437 = vmax.f32 %v456, 0.0
  %v1438 = vmax.f32 %v569, 0.0
  %v1439 = vmax.f32 %v682, 0.0
  %v1440 = vmax.f32 %v795, 0.0
  %v1441 = vmax.f32 %v908, 0.0
  %v1442 = vmax.f32 %v1021, 0.0
  %v1443 = vmax.f32 %v1134, 0.0
  %v1444 = vmax.f32 %v1247, 0.0
  %v1445 = vmax.f32 %v459, 0.0
  %v1446 = vmax.f32 %v572, 0.0
  %v1447 = vmax.f32 %v685, 0.0
  %v1448 = vmax.f32 %v798, 0.0
  %v1449 = vmax.f32 %v911, 0.0
  %v1450 = vmax.f32 %v1024, 0.0
  %v1451 = vmax.f32 %v1137, 0.0
  %v1452 = vmax.f32 %v1250, 0.0
  %v1453 = vmax.f32 %v462, 0.0
  %v1454 = vmax.f32 %v575, 0.0
  %v1455 = vmax.f32 %v688, 0.0
  %v1456 = vmax.f32 %v801, 0.0
  %v1457 = vmax.f32 %v914, 0.0
  %v1458 = vmax.f32 %v1027, 0.0
  %v1459 = vmax.f32 %v1140, 0.0
  %v1460 = vmax.f32 %v1253, 0.0
  %v1461 = vmax.f32 %v465, 0.0
  %v1462 = vmax.f32 %v578, 0.0
  %v1463 = vmax.f32 %v691, 0.0
  %v1464 = vmax.f32 %v804, 0.0
  %v1465 = vmax.f32 %v917, 0.0
  %v1466 = vmax.f32 %v1030, 0.0
  %v1467 = vmax.f32 %v1143, 0.0
  %v1468 = vmax.f32 %v1256, 0.0
  %v1469 = vmax.f32 %v468, 0.0
  %v1470 = vmax.f32 %v581, 0.0
  %v1471 = vmax.f32 %v694, 0.0
  %v1472 = vmax.f32 %v807, 0.0
  %v1473 = vmax.f32 %v920, 0.0
  %v1474 = vmax.f32 %v1033, 0.0
  %v1475 = vmax.f32 %v1146, 0.0
  %v1476 = vmax.f32 %v1259, 0.0
  %v1477 = vmax.f32 %v471, 0.0
  %v1478 = vmax.f32 %v584, 0.0
  %v1479 = vmax.f32 %v697, 0.0
  %v1480 = vmax.f32 %v810, 0.0
  %v1481 = vmax.f32 %v923, 0.0
  %v1482 = vmax.f32 %v1036, 0.0
  %v1483 = vmax.f32 %v1149, 0.0
  %v1484 = vmax.f32 %v1262, 0.0
  %v1485 = vmax.f32 %v474, 0.0
  %v1486 = vmax.f32 %v587, 0.0
  %v1487 = vmax.f32 %v700, 0.0
  %v1488 = vmax.f32 %v813, 0.0
  %v1489 = vmax.f32 %v926, 0.0
  %v1490 = vmax.f32 %v1039, 0.0
  %v1491 = vmax.f32 %v1152, 0.0
  %v1492 = vmax.f32 %v1265, 0.0
  %v1493 = vmax.f32 %v477, 0.0
  %v1494 = vmax.f32 %v590, 0.0
  %v1495 = vmax.f32 %v703, 0.0
  %v1496 = vmax.f32 %v816, 0.0
  %v1497 = vmax.f32 %v929, 0.0
  %v1498 = vmax.f32 %v1042, 0.0
  %v1499 = vmax.f32 %v1155, 0.0
  %v1500 = vmax.f32 %v1268, 0.0
  %v1501 = vmax.f32 %v480, 0.0
  %v1502 = vmax.f32 %v593, 0.0
  %v1503 = vmax.f32 %v706, 0.0
  %v1504 = vmax.f32 %v819, 0.0
  %v1505 = vmax.f32 %v932, 0.0
  %v1506 = vmax.f32 %v1045, 0.0
  %v1507 = vmax.f32 %v1158, 0.0
  %v1508 = vmax.f32 %v1271, 0.0
  %v1509 = vmax.f32 %v483, 0.0
  %v1510 = vmax.f32 %v596, 0.0
  %v1511 = vmax.f32 %v709, 0.0
  %v1512 = vmax.f32 %v822, 0.0
  %v1513 = vmax.f32 %v935, 0.0
  %v1514 = vmax.f32 %v1048, 0.0
  %v1515 = vmax.f32 %v1161, 0.0
  %v1516 = vmax.f32 %v1274, 0.0
  %v1517 = vmax.f32 %v486, 0.0
  %v1518 = vmax.f32 %v599, 0.0
  %v1519 = vmax.f32 %v712, 0.0
  %v1520 = vmax.f32 %v825, 0.0
  %v1521 = vmax.f32 %v938, 0.0
  %v1522 = vmax.f32 %v1051, 0.0
  %v1523 = vmax.f32 %v1164, 0.0
  %v1524 = vmax.f32 %v1277, 0.0
  %v1525 = vmax.f32 %v489, 0.0
  %v1526 = vmax.f32 %v602, 0.0
  %v1527 = vmax.f32 %v715, 0.0
  %v1528 = vmax.f32 %v828, 0.0
  %v1529 = vmax.f32 %v941, 0.0
  %v1530 = vmax.f32 %v1054, 0.0
  %v1531 = vmax.f32 %v1167, 0.0
  %v1532 = vmax.f32 %v1280, 0.0
  %v1533 = vmax.f32 %v492, 0.0
  %v1534 = vmax.f32 %v605, 0.0
  %v1535 = vmax.f32 %v718, 0.0
  %v1536 = vmax.f32 %v831, 0.0
  %v1537 = vmax.f32 %v944, 0.0
  %v1538 = vmax.f32 %v1057, 0.0
  %v1539 = vmax.f32 %v1170, 0.0
  %v1540 = vmax.f32 %v1283, 0.0
  %1542 = vset.pattern.permute.xlu0 0
  %1543 = vperm.xlu0 %1542, %v106
  %v1544 = vpop.permute.xlu0 %1543
  %1547 = vset.pattern.permute.xlu0 0
  %1548 = vperm.xlu0 %1547, %v107
  %v1549 = vpop.permute.xlu0 %1548
  %1552 = vset.pattern.permute.xlu0 0
  %1553 = vperm.xlu0 %1552, %v108
  %v1554 = vpop.permute.xlu0 %1553
  %1557 = vset.pattern.permute.xlu0 0
  %1558 = vperm.xlu0 %1557, %v109
  %v1559 = vpop.permute.xlu0 %1558
  %1562 = vset.pattern.permute.xlu0 0
  %1563 = vperm.xlu0 %1562, %v110
  %v1564 = vpop.permute.xlu0 %1563
  %1567 = vset.pattern.permute.xlu0 0
  %1568 = vperm.xlu0 %1567, %v111
  %v1569 = vpop.permute.xlu0 %1568
  %1572 = vset.pattern.permute.xlu0 0
  %1573 = vperm.xlu0 %1572, %v112
  %v1574 = vpop.permute.xlu0 %1573
  %1577 = vset.pattern.permute.xlu0 0
  %1578 = vperm.xlu0 %1577, %v113
  %v1579 = vpop.permute.xlu0 %1578
  %1581 = vmatpush.msra.mxu0 %v1405
  %1582 = vmatpush.msra.mxu0 %v1397
  %1583 = vmatpush.msra.mxu0 %v1389
  %1584 = vmatpush.msra.mxu0 %v1381
  %1585 = vmatpush.msra.mxu0 %v1373
  %1586 = vmatpush.msra.mxu0 %v1365
  %1587 = vmatpush.msra.mxu0 %v1357
  %1588 = vmatpush.msra.mxu0 %v1349
  %1589 = vmatpush.msra.mxu0 %v1341
  %1590 = vmatpush.msra.mxu0 %v1333
  %1591 = vmatpush.msra.mxu0 %v1325
  %1592 = vmatpush.msra.mxu0 %v1317
  %1593 = vmatpush.msra.mxu0 %v1309
  %1594 = vmatpush.msra.mxu0 %v1301
  %1595 = vmatpush.msra.mxu0 %v1293
  %1596 = vmatpush.msra.mxu0 %v1285
  %1597 = vmatmul.f32.gmra.mxu0 %v90
  %v1598 = vpop.f32.mrf.mxu0
  %v1599 = vadd.f32 %v1544, %v1598
  %1600 = vmatmul.f32.gmra.mxu0 %v92
  %v1601 = vpop.f32.mrf.mxu0
  %v1602 = vadd.f32 %v1549, %v1601
  %1603 = vmatmul.f32.gmra.mxu0 %v94
  %v1604 = vpop.f32.mrf.mxu0
  %v1605 = vadd.f32 %v1554, %v1604
  %1606 = vmatmul.f32.gmra.mxu0 %v96
  %v1607 = vpop.f32.mrf.mxu0
  %v1608 = vadd.f32 %v1559, %v1607
  %1609 = vmatmul.f32.gmra.mxu0 %v98
  %v1610 = vpop.f32.mrf.mxu0
  %v1611 = vadd.f32 %v1564, %v1610
  %1612 = vmatmul.f32.gmra.mxu0 %v100
  %v1613 = vpop.f32.mrf.mxu0
  %v1614 = vadd.f32 %v1569, %v1613
  %1615 = vmatmul.f32.gmra.mxu0 %v102
  %v1616 = vpop.f32.mrf.mxu0
  %v1617 = vadd.f32 %v1574, %v1616
  %1618 = vmatmul.f32.gmra.mxu0 %v104
  %v1619 = vpop.f32.mrf.mxu0
  %v1620 = vadd.f32 %v1579, %v1619
  %1621 = vdwg.mxu0
  %1622 = vmatpush.msra.mxu0 %v1533
  %1623 = vmatpush.msra.mxu0 %v1525
  %1624 = vmatpush.msra.mxu0 %v1517
  %1625 = vmatpush.msra.mxu0 %v1509
  %1626 = vmatpush.msra.mxu0 %v1501
  %1627 = vmatpush.msra.mxu0 %v1493
  %1628 = vmatpush.msra.mxu0 %v1485
  %1629 = vmatpush.msra.mxu0 %v1477
  %1630 = vmatpush.msra.mxu0 %v1469
  %1631 = vmatpush.msra.mxu0 %v1461
  %1632 = vmatpush.msra.mxu0 %v1453
  %1633 = vmatpush.msra.mxu0 %v1445
  %1634 = vmatpush.msra.mxu0 %v1437
  %1635 = vmatpush.msra.mxu0 %v1429
  %1636 = vmatpush.msra.mxu0 %v1421
  %1637 = vmatpush.msra.mxu0 %v1413
  %1638 = vmatmul.f32.gmra.mxu0 %v91
  %v1639 = vpop.f32.mrf.mxu0
  %v1640 = vadd.f32 %v1599, %v1639
  %1641 = vmatmul.f32.gmra.mxu0 %v93
  %v1642 = vpop.f32.mrf.mxu0
  %v1643 = vadd.f32 %v1602, %v1642
  %1644 = vmatmul.f32.gmra.mxu0 %v95
  %v1645 = vpop.f32.mrf.mxu0
  %v1646 = vadd.f32 %v1605, %v1645
  %1647 = vmatmul.f32.gmra.mxu0 %v97
  %v1648 = vpop.f32.mrf.mxu0
  %v1649 = vadd.f32 %v1608, %v1648
  %1650 = vmatmul.f32.gmra.mxu0 %v99
  %v1651 = vpop.f32.mrf.mxu0
  %v1652 = vadd.f32 %v1611, %v1651
  %1653 = vmatmul.f32.gmra.mxu0 %v101
  %v1654 = vpop.f32.mrf.mxu0
  %v1655 = vadd.f32 %v1614, %v1654
  %1656 = vmatmul.f32.gmra.mxu0 %v103
  %v1657 = vpop.f32.mrf.mxu0
  %v1658 = vadd.f32 %v1617, %v1657
  %1659 = vmatmul.f32.gmra.mxu0 %v105
  %v1660 = vpop.f32.mrf.mxu0
  %v1661 = vadd.f32 %v1620, %v1660
  %1662 = vdwg.mxu0
  %1663 = vmatpush.msra.mxu0 %v1406
  %1664 = vmatpush.msra.mxu0 %v1398
  %1665 = vmatpush.msra.mxu0 %v1390
  %1666 = vmatpush.msra.mxu0 %v1382
  %1667 = vmatpush.msra.mxu0 %v1374
  %1668 = vmatpush.msra.mxu0 %v1366
  %1669 = vmatpush.msra.mxu0 %v1358
  %1670 = vmatpush.msra.mxu0 %v1350
  %1671 = vmatpush.msra.mxu0 %v1342
  %1672 = vmatpush.msra.mxu0 %v1334
  %1673 = vmatpush.msra.mxu0 %v1326
  %1674 = vmatpush.msra.mxu0 %v1318
  %1675 = vmatpush.msra.mxu0 %v1310
  %1676 = vmatpush.msra.mxu0 %v1302
  %1677 = vmatpush.msra.mxu0 %v1294
  %1678 = vmatpush.msra.mxu0 %v1286
  %1679 = vmatmul.f32.gmra.mxu0 %v90
  %v1680 = vpop.f32.mrf.mxu0
  %v1681 = vadd.f32 %v1544, %v1680
  %1682 = vmatmul.f32.gmra.mxu0 %v92
  %v1683 = vpop.f32.mrf.mxu0
  %v1684 = vadd.f32 %v1549, %v1683
  %1685 = vmatmul.f32.gmra.mxu0 %v94
  %v1686 = vpop.f32.mrf.mxu0
  %v1687 = vadd.f32 %v1554, %v1686
  %1688 = vmatmul.f32.gmra.mxu0 %v96
  %v1689 = vpop.f32.mrf.mxu0
  %v1690 = vadd.f32 %v1559, %v1689
  %1691 = vmatmul.f32.gmra.mxu0 %v98
  %v1692 = vpop.f32.mrf.mxu0
  %v1693 = vadd.f32 %v1564, %v1692
  %1694 = vmatmul.f32.gmra.mxu0 %v100
  %v1695 = vpop.f32.mrf.mxu0
  %v1696 = vadd.f32 %v1569, %v1695
  %1697 = vmatmul.f32.gmra.mxu0 %v102
  %v1698 = vpop.f32.mrf.mxu0
  %v1699 = vadd.f32 %v1574, %v1698
  %1700 = vmatmul.f32.gmra.mxu0 %v104
  %v1701 = vpop.f32.mrf.mxu0
  %v1702 = vadd.f32 %v1579, %v1701
  %1703 = vdwg.mxu0
  %1704 = vmatpush.msra.mxu0 %v1534
  %1705 = vmatpush.msra.mxu0 %v1526
  %1706 = vmatpush.msra.mxu0 %v1518
  %1707 = vmatpush.msra.mxu0 %v1510
  %1708 = vmatpush.msra.mxu0 %v1502
  %1709 = vmatpush.msra.mxu0 %v1494
  %1710 = vmatpush.msra.mxu0 %v1486
  %1711 = vmatpush.msra.mxu0 %v1478
  %1712 = vmatpush.msra.mxu0 %v1470
  %1713 = vmatpush.msra.mxu0 %v1462
  %1714 = vmatpush.msra.mxu0 %v1454
  %1715 = vmatpush.msra.mxu0 %v1446
  %1716 = vmatpush.msra.mxu0 %v1438
  %1717 = vmatpush.msra.mxu0 %v1430
  %1718 = vmatpush.msra.mxu0 %v1422
  %1719 = vmatpush.msra.mxu0 %v1414
  %1720 = vmatmul.f32.gmra.mxu0 %v91
  %v1721 = vpop.f32.mrf.mxu0
  %v1722 = vadd.f32 %v1681, %v1721
  %1723 = vmatmul.f32.gmra.mxu0 %v93
  %v1724 = vpop.f32.mrf.mxu0
  %v1725 = vadd.f32 %v1684, %v1724
  %1726 = vmatmul.f32.gmra.mxu0 %v95
  %v1727 = vpop.f32.mrf.mxu0
  %v1728 = vadd.f32 %v1687, %v1727
  %1729 = vmatmul.f32.gmra.mxu0 %v97
  %v1730 = vpop.f32.mrf.mxu0
  %v1731 = vadd.f32 %v1690, %v1730
  %1732 = vmatmul.f32.gmra.mxu0 %v99
  %v1733 = vpop.f32.mrf.mxu0
  %v1734 = vadd.f32 %v1693, %v1733
  %1735 = vmatmul.f32.gmra.mxu0 %v101
  %v1736 = vpop.f32.mrf.mxu0
  %v1737 = vadd.f32 %v1696, %v1736
  %1738 = vmatmul.f32.gmra.mxu0 %v103
  %v1739 = vpop.f32.mrf.mxu0
  %v1740 = vadd.f32 %v1699, %v1739
  %1741 = vmatmul.f32.gmra.mxu0 %v105
  %v1742 = vpop.f32.mrf.mxu0
  %v1743 = vadd.f32 %v1702, %v1742
  %1744 = vdwg.mxu0
  %1745 = vmatpush.msra.mxu0 %v1407
  %1746 = vmatpush.msra.mxu0 %v1399
  %1747 = vmatpush.msra.mxu0 %v1391
  %1748 = vmatpush.msra.mxu0 %v1383
  %1749 = vmatpush.msra.mxu0 %v1375
  %1750 = vmatpush.msra.mxu0 %v1367
  %1751 = vmatpush.msra.mxu0 %v1359
  %1752 = vmatpush.msra.mxu0 %v1351
  %1753 = vmatpush.msra.mxu0 %v1343
  %1754 = vmatpush.msra.mxu0 %v1335
  %1755 = vmatpush.msra.mxu0 %v1327
  %1756 = vmatpush.msra.mxu0 %v1319
  %1757 = vmatpush.msra.mxu0 %v1311
  %1758 = vmatpush.msra.mxu0 %v1303
  %1759 = vmatpush.msra.mxu0 %v1295
  %1760 = vmatpush.msra.mxu0 %v1287
  %1761 = vmatmul.f32.gmra.mxu0 %v90
  %v1762 = vpop.f32.mrf.mxu0
  %v1763 = vadd.f32 %v1544, %v1762
  %1764 = vmatmul.f32.gmra.mxu0 %v92
  %v1765 = vpop.f32.mrf.mxu0
  %v1766 = vadd.f32 %v1549, %v1765
  %1767 = vmatmul.f32.gmra.mxu0 %v94
  %v1768 = vpop.f32.mrf.mxu0
  %v1769 = vadd.f32 %v1554, %v1768
  %1770 = vmatmul.f32.gmra.mxu0 %v96
  %v1771 = vpop.f32.mrf.mxu0
  %v1772 = vadd.f32 %v1559, %v1771
  %1773 = vmatmul.f32.gmra.mxu0 %v98
  %v1774 = vpop.f32.mrf.mxu0
  %v1775 = vadd.f32 %v1564, %v1774
  %1776 = vmatmul.f32.gmra.mxu0 %v100
  %v1777 = vpop.f32.mrf.mxu0
  %v1778 = vadd.f32 %v1569, %v1777
  %1779 = vmatmul.f32.gmra.mxu0 %v102
  %v1780 = vpop.f32.mrf.mxu0
  %v1781 = vadd.f32 %v1574, %v1780
  %1782 = vmatmul.f32.gmra.mxu0 %v104
  %v1783 = vpop.f32.mrf.mxu0
  %v1784 = vadd.f32 %v1579, %v1783
  %1785 = vdwg.mxu0
  %1786 = vmatpush.msra.mxu0 %v1535
  %1787 = vmatpush.msra.mxu0 %v1527
  %1788 = vmatpush.msra.mxu0 %v1519
  %1789 = vmatpush.msra.mxu0 %v1511
  %1790 = vmatpush.msra.mxu0 %v1503
  %1791 = vmatpush.msra.mxu0 %v1495
  %1792 = vmatpush.msra.mxu0 %v1487
  %1793 = vmatpush.msra.mxu0 %v1479
  %1794 = vmatpush.msra.mxu0 %v1471
  %1795 = vmatpush.msra.mxu0 %v1463
  %1796 = vmatpush.msra.mxu0 %v1455
  %1797 = vmatpush.msra.mxu0 %v1447
  %1798 = vmatpush.msra.mxu0 %v1439
  %1799 = vmatpush.msra.mxu0 %v1431
  %1800 = vmatpush.msra.mxu0 %v1423
  %1801 = vmatpush.msra.mxu0 %v1415
  %1802 = vmatmul.f32.gmra.mxu0 %v91
  %v1803 = vpop.f32.mrf.mxu0
  %v1804 = vadd.f32 %v1763, %v1803
  %1805 = vmatmul.f32.gmra.mxu0 %v93
  %v1806 = vpop.f32.mrf.mxu0
  %v1807 = vadd.f32 %v1766, %v1806
  %1808 = vmatmul.f32.gmra.mxu0 %v95
  %v1809 = vpop.f32.mrf.mxu0
  %v1810 = vadd.f32 %v1769, %v1809
  %1811 = vmatmul.f32.gmra.mxu0 %v97
  %v1812 = vpop.f32.mrf.mxu0
  %v1813 = vadd.f32 %v1772, %v1812
  %1814 = vmatmul.f32.gmra.mxu0 %v99
  %v1815 = vpop.f32.mrf.mxu0
  %v1816 = vadd.f32 %v1775, %v1815
  %1817 = vmatmul.f32.gmra.mxu0 %v101
  %v1818 = vpop.f32.mrf.mxu0
  %v1819 = vadd.f32 %v1778, %v1818
  %1820 = vmatmul.f32.gmra.mxu0 %v103
  %v1821 = vpop.f32.mrf.mxu0
  %v1822 = vadd.f32 %v1781, %v1821
  %1823 = vmatmul.f32.gmra.mxu0 %v105
  %v1824 = vpop.f32.mrf.mxu0
  %v1825 = vadd.f32 %v1784, %v1824
  %1826 = vdwg.mxu0
  %1827 = vmatpush.msra.mxu0 %v1408
  %1828 = vmatpush.msra.mxu0 %v1400
  %1829 = vmatpush.msra.mxu0 %v1392
  %1830 = vmatpush.msra.mxu0 %v1384
  %1831 = vmatpush.msra.mxu0 %v1376
  %1832 = vmatpush.msra.mxu0 %v1368
  %1833 = vmatpush.msra.mxu0 %v1360
  %1834 = vmatpush.msra.mxu0 %v1352
  %1835 = vmatpush.msra.mxu0 %v1344
  %1836 = vmatpush.msra.mxu0 %v1336
  %1837 = vmatpush.msra.mxu0 %v1328
  %1838 = vmatpush.msra.mxu0 %v1320
  %1839 = vmatpush.msra.mxu0 %v1312
  %1840 = vmatpush.msra.mxu0 %v1304
  %1841 = vmatpush.msra.mxu0 %v1296
  %1842 = vmatpush.msra.mxu0 %v1288
  %1843 = vmatmul.f32.gmra.mxu0 %v90
  %v1844 = vpop.f32.mrf.mxu0
  %v1845 = vadd.f32 %v1544, %v1844
  %1846 = vmatmul.f32.gmra.mxu0 %v92
  %v1847 = vpop.f32.mrf.mxu0
  %v1848 = vadd.f32 %v1549, %v1847
  %1849 = vmatmul.f32.gmra.mxu0 %v94
  %v1850 = vpop.f32.mrf.mxu0
  %v1851 = vadd.f32 %v1554, %v1850
  %1852 = vmatmul.f32.gmra.mxu0 %v96
  %v1853 = vpop.f32.mrf.mxu0
  %v1854 = vadd.f32 %v1559, %v1853
  %1855 = vmatmul.f32.gmra.mxu0 %v98
  %v1856 = vpop.f32.mrf.mxu0
  %v1857 = vadd.f32 %v1564, %v1856
  %1858 = vmatmul.f32.gmra.mxu0 %v100
  %v1859 = vpop.f32.mrf.mxu0
  %v1860 = vadd.f32 %v1569, %v1859
  %1861 = vmatmul.f32.gmra.mxu0 %v102
  %v1862 = vpop.f32.mrf.mxu0
  %v1863 = vadd.f32 %v1574, %v1862
  %1864 = vmatmul.f32.gmra.mxu0 %v104
  %v1865 = vpop.f32.mrf.mxu0
  %v1866 = vadd.f32 %v1579, %v1865
  %1867 = vdwg.mxu0
  %1868 = vmatpush.msra.mxu0 %v1536
  %1869 = vmatpush.msra.mxu0 %v1528
  %1870 = vmatpush.msra.mxu0 %v1520
  %1871 = vmatpush.msra.mxu0 %v1512
  %1872 = vmatpush.msra.mxu0 %v1504
  %1873 = vmatpush.msra.mxu0 %v1496
  %1874 = vmatpush.msra.mxu0 %v1488
  %1875 = vmatpush.msra.mxu0 %v1480
  %1876 = vmatpush.msra.mxu0 %v1472
  %1877 = vmatpush.msra.mxu0 %v1464
  %1878 = vmatpush.msra.mxu0 %v1456
  %1879 = vmatpush.msra.mxu0 %v1448
  %1880 = vmatpush.msra.mxu0 %v1440
  %1881 = vmatpush.msra.mxu0 %v1432
  %1882 = vmatpush.msra.mxu0 %v1424
  %1883 = vmatpush.msra.mxu0 %v1416
  %1884 = vmatmul.f32.gmra.mxu0 %v91
  %v1885 = vpop.f32.mrf.mxu0
  %v1886 = vadd.f32 %v1845, %v1885
  %1887 = vmatmul.f32.gmra.mxu0 %v93
  %v1888 = vpop.f32.mrf.mxu0
  %v1889 = vadd.f32 %v1848, %v1888
  %1890 = vmatmul.f32.gmra.mxu0 %v95
  %v1891 = vpop.f32.mrf.mxu0
  %v1892 = vadd.f32 %v1851, %v1891
  %1893 = vmatmul.f32.gmra.mxu0 %v97
  %v1894 = vpop.f32.mrf.mxu0
  %v1895 = vadd.f32 %v1854, %v1894
  %1896 = vmatmul.f32.gmra.mxu0 %v99
  %v1897 = vpop.f32.mrf.mxu0
  %v1898 = vadd.f32 %v1857, %v1897
  %1899 = vmatmul.f32.gmra.mxu0 %v101
  %v1900 = vpop.f32.mrf.mxu0
  %v1901 = vadd.f32 %v1860, %v1900
  %1902 = vmatmul.f32.gmra.mxu0 %v103
  %v1903 = vpop.f32.mrf.mxu0
  %v1904 = vadd.f32 %v1863, %v1903
  %1905 = vmatmul.f32.gmra.mxu0 %v105
  %v1906 = vpop.f32.mrf.mxu0
  %v1907 = vadd.f32 %v1866, %v1906
  %1908 = vdwg.mxu0
  %1909 = vmatpush.msra.mxu0 %v1409
  %1910 = vmatpush.msra.mxu0 %v1401
  %1911 = vmatpush.msra.mxu0 %v1393
  %1912 = vmatpush.msra.mxu0 %v1385
  %1913 = vmatpush.msra.mxu0 %v1377
  %1914 = vmatpush.msra.mxu0 %v1369
  %1915 = vmatpush.msra.mxu0 %v1361
  %1916 = vmatpush.msra.mxu0 %v1353
  %1917 = vmatpush.msra.mxu0 %v1345
  %1918 = vmatpush.msra.mxu0 %v1337
  %1919 = vmatpush.msra.mxu0 %v1329
  %1920 = vmatpush.msra.mxu0 %v1321
  %1921 = vmatpush.msra.mxu0 %v1313
  %1922 = vmatpush.msra.mxu0 %v1305
  %1923 = vmatpush.msra.mxu0 %v1297
  %1924 = vmatpush.msra.mxu0 %v1289
  %1925 = vmatmul.f32.gmra.mxu0 %v90
  %v1926 = vpop.f32.mrf.mxu0
  %v1927 = vadd.f32 %v1544, %v1926
  %1928 = vmatmul.f32.gmra.mxu0 %v92
  %v1929 = vpop.f32.mrf.mxu0
  %v1930 = vadd.f32 %v1549, %v1929
  %1931 = vmatmul.f32.gmra.mxu0 %v94
  %v1932 = vpop.f32.mrf.mxu0
  %v1933 = vadd.f32 %v1554, %v1932
  %1934 = vmatmul.f32.gmra.mxu0 %v96
  %v1935 = vpop.f32.mrf.mxu0
  %v1936 = vadd.f32 %v1559, %v1935
  %1937 = vmatmul.f32.gmra.mxu0 %v98
  %v1938 = vpop.f32.mrf.mxu0
  %v1939 = vadd.f32 %v1564, %v1938
  %1940 = vmatmul.f32.gmra.mxu0 %v100
  %v1941 = vpop.f32.mrf.mxu0
  %v1942 = vadd.f32 %v1569, %v1941
  %1943 = vmatmul.f32.gmra.mxu0 %v102
  %v1944 = vpop.f32.mrf.mxu0
  %v1945 = vadd.f32 %v1574, %v1944
  %1946 = vmatmul.f32.gmra.mxu0 %v104
  %v1947 = vpop.f32.mrf.mxu0
  %v1948 = vadd.f32 %v1579, %v1947
  %1949 = vdwg.mxu0
  %1950 = vmatpush.msra.mxu0 %v1537
  %1951 = vmatpush.msra.mxu0 %v1529
  %1952 = vmatpush.msra.mxu0 %v1521
  %1953 = vmatpush.msra.mxu0 %v1513
  %1954 = vmatpush.msra.mxu0 %v1505
  %1955 = vmatpush.msra.mxu0 %v1497
  %1956 = vmatpush.msra.mxu0 %v1489
  %1957 = vmatpush.msra.mxu0 %v1481
  %1958 = vmatpush.msra.mxu0 %v1473
  %1959 = vmatpush.msra.mxu0 %v1465
  %1960 = vmatpush.msra.mxu0 %v1457
  %1961 = vmatpush.msra.mxu0 %v1449
  %1962 = vmatpush.msra.mxu0 %v1441
  %1963 = vmatpush.msra.mxu0 %v1433
  %1964 = vmatpush.msra.mxu0 %v1425
  %1965 = vmatpush.msra.mxu0 %v1417
  %1966 = vmatmul.f32.gmra.mxu0 %v91
  %v1967 = vpop.f32.mrf.mxu0
  %v1968 = vadd.f32 %v1927, %v1967
  %1969 = vmatmul.f32.gmra.mxu0 %v93
  %v1970 = vpop.f32.mrf.mxu0
  %v1971 = vadd.f32 %v1930, %v1970
  %1972 = vmatmul.f32.gmra.mxu0 %v95
  %v1973 = vpop.f32.mrf.mxu0
  %v1974 = vadd.f32 %v1933, %v1973
  %1975 = vmatmul.f32.gmra.mxu0 %v97
  %v1976 = vpop.f32.mrf.mxu0
  %v1977 = vadd.f32 %v1936, %v1976
  %1978 = vmatmul.f32.gmra.mxu0 %v99
  %v1979 = vpop.f32.mrf.mxu0
  %v1980 = vadd.f32 %v1939, %v1979
  %1981 = vmatmul.f32.gmra.mxu0 %v101
  %v1982 = vpop.f32.mrf.mxu0
  %v1983 = vadd.f32 %v1942, %v1982
  %1984 = vmatmul.f32.gmra.mxu0 %v103
  %v1985 = vpop.f32.mrf.mxu0
  %v1986 = vadd.f32 %v1945, %v1985
  %1987 = vmatmul.f32.gmra.mxu0 %v105
  %v1988 = vpop.f32.mrf.mxu0
  %v1989 = vadd.f32 %v1948, %v1988
  %1990 = vdwg.mxu0
  %1991 = vmatpush.msra.mxu0 %v1410
  %1992 = vmatpush.msra.mxu0 %v1402
  %1993 = vmatpush.msra.mxu0 %v1394
  %1994 = vmatpush.msra.mxu0 %v1386
  %1995 = vmatpush.msra.mxu0 %v1378
  %1996 = vmatpush.msra.mxu0 %v1370
  %1997 = vmatpush.msra.mxu0 %v1362
  %1998 = vmatpush.msra.mxu0 %v1354
  %1999 = vmatpush.msra.mxu0 %v1346
  %2000 = vmatpush.msra.mxu0 %v1338
  %2001 = vmatpush.msra.mxu0 %v1330
  %2002 = vmatpush.msra.mxu0 %v1322
  %2003 = vmatpush.msra.mxu0 %v1314
  %2004 = vmatpush.msra.mxu0 %v1306
  %2005 = vmatpush.msra.mxu0 %v1298
  %2006 = vmatpush.msra.mxu0 %v1290
  %2007 = vmatmul.f32.gmra.mxu0 %v90
  %v2008 = vpop.f32.mrf.mxu0
  %v2009 = vadd.f32 %v1544, %v2008
  %2010 = vmatmul.f32.gmra.mxu0 %v92
  %v2011 = vpop.f32.mrf.mxu0
  %v2012 = vadd.f32 %v1549, %v2011
  %2013 = vmatmul.f32.gmra.mxu0 %v94
  %v2014 = vpop.f32.mrf.mxu0
  %v2015 = vadd.f32 %v1554, %v2014
  %2016 = vmatmul.f32.gmra.mxu0 %v96
  %v2017 = vpop.f32.mrf.mxu0
  %v2018 = vadd.f32 %v1559, %v2017
  %2019 = vmatmul.f32.gmra.mxu0 %v98
  %v2020 = vpop.f32.mrf.mxu0
  %v2021 = vadd.f32 %v1564, %v2020
  %2022 = vmatmul.f32.gmra.mxu0 %v100
  %v2023 = vpop.f32.mrf.mxu0
  %v2024 = vadd.f32 %v1569, %v2023
  %2025 = vmatmul.f32.gmra.mxu0 %v102
  %v2026 = vpop.f32.mrf.mxu0
  %v2027 = vadd.f32 %v1574, %v2026
  %2028 = vmatmul.f32.gmra.mxu0 %v104
  %v2029 = vpop.f32.mrf.mxu0
  %v2030 = vadd.f32 %v1579, %v2029
  %2031 = vdwg.mxu0
  %2032 = vmatpush.msra.mxu0 %v1538
  %2033 = vmatpush.msra.mxu0 %v1530
  %2034 = vmatpush.msra.mxu0 %v1522
  %2035 = vmatpush.msra.mxu0 %v1514
  %2036 = vmatpush.msra.mxu0 %v1506
  %2037 = vmatpush.msra.mxu0 %v1498
  %2038 = vmatpush.msra.mxu0 %v1490
  %2039 = vmatpush.msra.mxu0 %v1482
  %2040 = vmatpush.msra.mxu0 %v1474
  %2041 = vmatpush.msra.mxu0 %v1466
  %2042 = vmatpush.msra.mxu0 %v1458
  %2043 = vmatpush.msra.mxu0 %v1450
  %2044 = vmatpush.msra.mxu0 %v1442
  %2045 = vmatpush.msra.mxu0 %v1434
  %2046 = vmatpush.msra.mxu0 %v1426
  %2047 = vmatpush.msra.mxu0 %v1418
  %2048 = vmatmul.f32.gmra.mxu0 %v91
  %v2049 = vpop.f32.mrf.mxu0
  %v2050 = vadd.f32 %v2009, %v2049
  %2051 = vmatmul.f32.gmra.mxu0 %v93
  %v2052 = vpop.f32.mrf.mxu0
  %v2053 = vadd.f32 %v2012, %v2052
  %2054 = vmatmul.f32.gmra.mxu0 %v95
  %v2055 = vpop.f32.mrf.mxu0
  %v2056 = vadd.f32 %v2015, %v2055
  %2057 = vmatmul.f32.gmra.mxu0 %v97
  %v2058 = vpop.f32.mrf.mxu0
  %v2059 = vadd.f32 %v2018, %v2058
  %2060 = vmatmul.f32.gmra.mxu0 %v99
  %v2061 = vpop.f32.mrf.mxu0
  %v2062 = vadd.f32 %v2021, %v2061
  %2063 = vmatmul.f32.gmra.mxu0 %v101
  %v2064 = vpop.f32.mrf.mxu0
  %v2065 = vadd.f32 %v2024, %v2064
  %2066 = vmatmul.f32.gmra.mxu0 %v103
  %v2067 = vpop.f32.mrf.mxu0
  %v2068 = vadd.f32 %v2027, %v2067
  %2069 = vmatmul.f32.gmra.mxu0 %v105
  %v2070 = vpop.f32.mrf.mxu0
  %v2071 = vadd.f32 %v2030, %v2070
  %2072 = vdwg.mxu0
  %2073 = vmatpush.msra.mxu0 %v1411
  %2074 = vmatpush.msra.mxu0 %v1403
  %2075 = vmatpush.msra.mxu0 %v1395
  %2076 = vmatpush.msra.mxu0 %v1387
  %2077 = vmatpush.msra.mxu0 %v1379
  %2078 = vmatpush.msra.mxu0 %v1371
  %2079 = vmatpush.msra.mxu0 %v1363
  %2080 = vmatpush.msra.mxu0 %v1355
  %2081 = vmatpush.msra.mxu0 %v1347
  %2082 = vmatpush.msra.mxu0 %v1339
  %2083 = vmatpush.msra.mxu0 %v1331
  %2084 = vmatpush.msra.mxu0 %v1323
  %2085 = vmatpush.msra.mxu0 %v1315
  %2086 = vmatpush.msra.mxu0 %v1307
  %2087 = vmatpush.msra.mxu0 %v1299
  %2088 = vmatpush.msra.mxu0 %v1291
  %2089 = vmatmul.f32.gmra.mxu0 %v90
  %v2090 = vpop.f32.mrf.mxu0
  %v2091 = vadd.f32 %v1544, %v2090
  %2092 = vmatmul.f32.gmra.mxu0 %v92
  %v2093 = vpop.f32.mrf.mxu0
  %v2094 = vadd.f32 %v1549, %v2093
  %2095 = vmatmul.f32.gmra.mxu0 %v94
  %v2096 = vpop.f32.mrf.mxu0
  %v2097 = vadd.f32 %v1554, %v2096
  %2098 = vmatmul.f32.gmra.mxu0 %v96
  %v2099 = vpop.f32.mrf.mxu0
  %v2100 = vadd.f32 %v1559, %v2099
  %2101 = vmatmul.f32.gmra.mxu0 %v98
  %v2102 = vpop.f32.mrf.mxu0
  %v2103 = vadd.f32 %v1564, %v2102
  %2104 = vmatmul.f32.gmra.mxu0 %v100
  %v2105 = vpop.f32.mrf.mxu0
  %v2106 = vadd.f32 %v1569, %v2105
  %2107 = vmatmul.f32.gmra.mxu0 %v102
  %v2108 = vpop.f32.mrf.mxu0
  %v2109 = vadd.f32 %v1574, %v2108
  %2110 = vmatmul.f32.gmra.mxu0 %v104
  %v2111 = vpop.f32.mrf.mxu0
  %v2112 = vadd.f32 %v1579, %v2111
  %2113 = vdwg.mxu0
  %2114 = vmatpush.msra.mxu0 %v1539
  %2115 = vmatpush.msra.mxu0 %v1531
  %2116 = vmatpush.msra.mxu0 %v1523
  %2117 = vmatpush.msra.mxu0 %v1515
  %2118 = vmatpush.msra.mxu0 %v1507
  %2119 = vmatpush.msra.mxu0 %v1499
  %2120 = vmatpush.msra.mxu0 %v1491
  %2121 = vmatpush.msra.mxu0 %v1483
  %2122 = vmatpush.msra.mxu0 %v1475
  %2123 = vmatpush.msra.mxu0 %v1467
  %2124 = vmatpush.msra.mxu0 %v1459
  %2125 = vmatpush.msra.mxu0 %v1451
  %2126 = vmatpush.msra.mxu0 %v1443
  %2127 = vmatpush.msra.mxu0 %v1435
  %2128 = vmatpush.msra.mxu0 %v1427
  %2129 = vmatpush.msra.mxu0 %v1419
  %2130 = vmatmul.f32.gmra.mxu0 %v91
  %v2131 = vpop.f32.mrf.mxu0
  %v2132 = vadd.f32 %v2091, %v2131
  %2133 = vmatmul.f32.gmra.mxu0 %v93
  %v2134 = vpop.f32.mrf.mxu0
  %v2135 = vadd.f32 %v2094, %v2134
  %2136 = vmatmul.f32.gmra.mxu0 %v95
  %v2137 = vpop.f32.mrf.mxu0
  %v2138 = vadd.f32 %v2097, %v2137
  %2139 = vmatmul.f32.gmra.mxu0 %v97
  %v2140 = vpop.f32.mrf.mxu0
  %v2141 = vadd.f32 %v2100, %v2140
  %2142 = vmatmul.f32.gmra.mxu0 %v99
  %v2143 = vpop.f32.mrf.mxu0
  %v2144 = vadd.f32 %v2103, %v2143
  %2145 = vmatmul.f32.gmra.mxu0 %v101
  %v2146 = vpop.f32.mrf.mxu0
  %v2147 = vadd.f32 %v2106, %v2146
  %2148 = vmatmul.f32.gmra.mxu0 %v103
  %v2149 = vpop.f32.mrf.mxu0
  %v2150 = vadd.f32 %v2109, %v2149
  %2151 = vmatmul.f32.gmra.mxu0 %v105
  %v2152 = vpop.f32.mrf.mxu0
  %v2153 = vadd.f32 %v2112, %v2152
  %2154 = vdwg.mxu0
  %2155 = vmatpush.msra.mxu0 %v1412
  %2156 = vmatpush.msra.mxu0 %v1404
  %2157 = vmatpush.msra.mxu0 %v1396
  %2158 = vmatpush.msra.mxu0 %v1388
  %2159 = vmatpush.msra.mxu0 %v1380
  %2160 = vmatpush.msra.mxu0 %v1372
  %2161 = vmatpush.msra.mxu0 %v1364
  %2162 = vmatpush.msra.mxu0 %v1356
  %2163 = vmatpush.msra.mxu0 %v1348
  %2164 = vmatpush.msra.mxu0 %v1340
  %2165 = vmatpush.msra.mxu0 %v1332
  %2166 = vmatpush.msra.mxu0 %v1324
  %2167 = vmatpush.msra.mxu0 %v1316
  %2168 = vmatpush.msra.mxu0 %v1308
  %2169 = vmatpush.msra.mxu0 %v1300
  %2170 = vmatpush.msra.mxu0 %v1292
  %2171 = vmatmul.f32.gmra.mxu0 %v90
  %v2172 = vpop.f32.mrf.mxu0
  %v2173 = vadd.f32 %v1544, %v2172
  %2174 = vmatmul.f32.gmra.mxu0 %v92
  %v2175 = vpop.f32.mrf.mxu0
  %v2176 = vadd.f32 %v1549, %v2175
  %2177 = vmatmul.f32.gmra.mxu0 %v94
  %v2178 = vpop.f32.mrf.mxu0
  %v2179 = vadd.f32 %v1554, %v2178
  %2180 = vmatmul.f32.gmra.mxu0 %v96
  %v2181 = vpop.f32.mrf.mxu0
  %v2182 = vadd.f32 %v1559, %v2181
  %2183 = vmatmul.f32.gmra.mxu0 %v98
  %v2184 = vpop.f32.mrf.mxu0
  %v2185 = vadd.f32 %v1564, %v2184
  %2186 = vmatmul.f32.gmra.mxu0 %v100
  %v2187 = vpop.f32.mrf.mxu0
  %v2188 = vadd.f32 %v1569, %v2187
  %2189 = vmatmul.f32.gmra.mxu0 %v102
  %v2190 = vpop.f32.mrf.mxu0
  %v2191 = vadd.f32 %v1574, %v2190
  %2192 = vmatmul.f32.gmra.mxu0 %v104
  %v2193 = vpop.f32.mrf.mxu0
  %v2194 = vadd.f32 %v1579, %v2193
  %2195 = vdwg.mxu0
  %2196 = vmatpush.msra.mxu0 %v1540
  %2197 = vmatpush.msra.mxu0 %v1532
  %2198 = vmatpush.msra.mxu0 %v1524
  %2199 = vmatpush.msra.mxu0 %v1516
  %2200 = vmatpush.msra.mxu0 %v1508
  %2201 = vmatpush.msra.mxu0 %v1500
  %2202 = vmatpush.msra.mxu0 %v1492
  %2203 = vmatpush.msra.mxu0 %v1484
  %2204 = vmatpush.msra.mxu0 %v1476
  %2205 = vmatpush.msra.mxu0 %v1468
  %2206 = vmatpush.msra.mxu0 %v1460
  %2207 = vmatpush.msra.mxu0 %v1452
  %2208 = vmatpush.msra.mxu0 %v1444
  %2209 = vmatpush.msra.mxu0 %v1436
  %2210 = vmatpush.msra.mxu0 %v1428
  %2211 = vmatpush.msra.mxu0 %v1420
  %2212 = vmatmul.f32.gmra.mxu0 %v91
  %v2213 = vpop.f32.mrf.mxu0
  %v2214 = vadd.f32 %v2173, %v2213
  %2215 = vmatmul.f32.gmra.mxu0 %v93
  %v2216 = vpop.f32.mrf.mxu0
  %v2217 = vadd.f32 %v2176, %v2216
  %2218 = vmatmul.f32.gmra.mxu0 %v95
  %v2219 = vpop.f32.mrf.mxu0
  %v2220 = vadd.f32 %v2179, %v2219
  %2221 = vmatmul.f32.gmra.mxu0 %v97
  %v2222 = vpop.f32.mrf.mxu0
  %v2223 = vadd.f32 %v2182, %v2222
  %2224 = vmatmul.f32.gmra.mxu0 %v99
  %v2225 = vpop.f32.mrf.mxu0
  %v2226 = vadd.f32 %v2185, %v2225
  %2227 = vmatmul.f32.gmra.mxu0 %v101
  %v2228 = vpop.f32.mrf.mxu0
  %v2229 = vadd.f32 %v2188, %v2228
  %2230 = vmatmul.f32.gmra.mxu0 %v103
  %v2231 = vpop.f32.mrf.mxu0
  %v2232 = vadd.f32 %v2191, %v2231
  %2233 = vmatmul.f32.gmra.mxu0 %v105
  %v2234 = vpop.f32.mrf.mxu0
  %v2235 = vadd.f32 %v2194, %v2234
  %2236 = vdwg.mxu0
  %v2237 = vmax.f32 %v1640, 0.0
  %v2238 = vmax.f32 %v1722, 0.0
  %v2239 = vmax.f32 %v1804, 0.0
  %v2240 = vmax.f32 %v1886, 0.0
  %v2241 = vmax.f32 %v1968, 0.0
  %v2242 = vmax.f32 %v2050, 0.0
  %v2243 = vmax.f32 %v2132, 0.0
  %v2244 = vmax.f32 %v2214, 0.0
  %v2245 = vmax.f32 %v1643, 0.0
  %v2246 = vmax.f32 %v1725, 0.0
  %v2247 = vmax.f32 %v1807, 0.0
  %v2248 = vmax.f32 %v1889, 0.0
  %v2249 = vmax.f32 %v1971, 0.0
  %v2250 = vmax.f32 %v2053, 0.0
  %v2251 = vmax.f32 %v2135, 0.0
  %v2252 = vmax.f32 %v2217, 0.0
  %v2253 = vmax.f32 %v1646, 0.0
  %v2254 = vmax.f32 %v1728, 0.0
  %v2255 = vmax.f32 %v1810, 0.0
  %v2256 = vmax.f32 %v1892, 0.0
  %v2257 = vmax.f32 %v1974, 0.0
  %v2258 = vmax.f32 %v2056, 0.0
  %v2259 = vmax.f32 %v2138, 0.0
  %v2260 = vmax.f32 %v2220, 0.0
  %v2261 = vmax.f32 %v1649, 0.0
  %v2262 = vmax.f32 %v1731, 0.0
  %v2263 = vmax.f32 %v1813, 0.0
  %v2264 = vmax.f32 %v1895, 0.0
  %v2265 = vmax.f32 %v1977, 0.0
  %v2266 = vmax.f32 %v2059, 0.0
  %v2267 = vmax.f32 %v2141, 0.0
  %v2268 = vmax.f32 %v2223, 0.0
  %v2269 = vmax.f32 %v1652, 0.0
  %v2270 = vmax.f32 %v1734, 0.0
  %v2271 = vmax.f32 %v1816, 0.0
  %v2272 = vmax.f32 %v1898, 0.0
  %v2273 = vmax.f32 %v1980, 0.0
  %v2274 = vmax.f32 %v2062, 0.0
  %v2275 = vmax.f32 %v2144, 0.0
  %v2276 = vmax.f32 %v2226, 0.0
  %v2277 = vmax.f32 %v1655, 0.0
  %v2278 = vmax.f32 %v1737, 0.0
  %v2279 = vmax.f32 %v1819, 0.0
  %v2280 = vmax.f32 %v1901, 0.0
  %v2281 = vmax.f32 %v1983, 0.0
  %v2282 = vmax.f32 %v2065, 0.0
  %v2283 = vmax.f32 %v2147, 0.0
  %v2284 = vmax.f32 %v2229, 0.0
  %v2285 = vmax.f32 %v1658, 0.0
  %v2286 = vmax.f32 %v1740, 0.0
  %v2287 = vmax.f32 %v1822, 0.0
  %v2288 = vmax.f32 %v1904, 0.0
  %v2289 = vmax.f32 %v1986, 0.0
  %v2290 = vmax.f32 %v2068, 0.0
  %v2291 = vmax.f32 %v2150, 0.0
  %v2292 = vmax.f32 %v2232, 0.0
  %v2293 = vmax.f32 %v1661, 0.0
  %v2294 = vmax.f32 %v1743, 0.0
  %v2295 = vmax.f32 %v1825, 0.0
  %v2296 = vmax.f32 %v1907, 0.0
  %v2297 = vmax.f32 %v1989, 0.0
  %v2298 = vmax.f32 %v2071, 0.0
  %v2299 = vmax.f32 %v2153, 0.0
  %v2300 = vmax.f32 %v2235, 0.0
  %2302 = vset.pattern.permute.xlu0 0
  %2303 = vperm.xlu0 %2302, %v115
  %v2304 = vpop.permute.xlu0 %2303
  %vm2306 = vcmask 523264
  %v2308 = vsel %vm2306, %v114, 0
  %2310 = vmatpush.msra.mxu0 0.0
  %2311 = vmatpush.msra.mxu0 0.0
  %2312 = vmatpush.msra.mxu0 0.0
  %2313 = vmatpush.msra.mxu0 0.0
  %2314 = vmatpush.msra.mxu0 0.0
  %2315 = vmatpush.msra.mxu0 0.0
  %2316 = vmatpush.msra.mxu0 0.0
  %2317 = vmatpush.msra.mxu0 0.0
  %2318 = vmatpush.msra.mxu0 %v2293
  %2319 = vmatpush.msra.mxu0 %v2285
  %2320 = vmatpush.msra.mxu0 %v2277
  %2321 = vmatpush.msra.mxu0 %v2269
  %2322 = vmatpush.msra.mxu0 %v2261
  %2323 = vmatpush.msra.mxu0 %v2253
  %2324 = vmatpush.msra.mxu0 %v2245
  %2325 = vmatpush.msra.mxu0 %v2237
  %2326 = vmatmul.f32.gmra.mxu0 %v2308
  %v2327 = vpop.f32.mrf.mxu0
  %v2328 = vadd.f32 %v2304, %v2327
  %2329 = vdwg.mxu0
  %2330 = vmatpush.msra.mxu0 0.0
  %2331 = vmatpush.msra.mxu0 0.0
  %2332 = vmatpush.msra.mxu0 0.0
  %2333 = vmatpush.msra.mxu0 0.0
  %2334 = vmatpush.msra.mxu0 0.0
  %2335 = vmatpush.msra.mxu0 0.0
  %2336 = vmatpush.msra.mxu0 0.0
  %2337 = vmatpush.msra.mxu0 0.0
  %2338 = vmatpush.msra.mxu0 %v2294
  %2339 = vmatpush.msra.mxu0 %v2286
  %2340 = vmatpush.msra.mxu0 %v2278
  %2341 = vmatpush.msra.mxu0 %v2270
  %2342 = vmatpush.msra.mxu0 %v2262
  %2343 = vmatpush.msra.mxu0 %v2254
  %2344 = vmatpush.msra.mxu0 %v2246
  %2345 = vmatpush.msra.mxu0 %v2238
  %2346 = vmatmul.f32.gmra.mxu0 %v2308
  %v2347 = vpop.f32.mrf.mxu0
  %v2348 = vadd.f32 %v2304, %v2347
  %2349 = vdwg.mxu0
  %2350 = vmatpush.msra.mxu0 0.0
  %2351 = vmatpush.msra.mxu0 0.0
  %2352 = vmatpush.msra.mxu0 0.0
  %2353 = vmatpush.msra.mxu0 0.0
  %2354 = vmatpush.msra.mxu0 0.0
  %2355 = vmatpush.msra.mxu0 0.0
  %2356 = vmatpush.msra.mxu0 0.0
  %2357 = vmatpush.msra.mxu0 0.0
  %2358 = vmatpush.msra.mxu0 %v2295
  %2359 = vmatpush.msra.mxu0 %v2287
  %2360 = vmatpush.msra.mxu0 %v2279
  %2361 = vmatpush.msra.mxu0 %v2271
  %2362 = vmatpush.msra.mxu0 %v2263
  %2363 = vmatpush.msra.mxu0 %v2255
  %2364 = vmatpush.msra.mxu0 %v2247
  %2365 = vmatpush.msra.mxu0 %v2239
  %2366 = vmatmul.f32.gmra.mxu0 %v2308
  %v2367 = vpop.f32.mrf.mxu0
  %v2368 = vadd.f32 %v2304, %v2367
  %2369 = vdwg.mxu0
  %2370 = vmatpush.msra.mxu0 0.0
  %2371 = vmatpush.msra.mxu0 0.0
  %2372 = vmatpush.msra.mxu0 0.0
  %2373 = vmatpush.msra.mxu0 0.0
  %2374 = vmatpush.msra.mxu0 0.0
  %2375 = vmatpush.msra.mxu0 0.0
  %2376 = vmatpush.msra.mxu0 0.0
  %2377 = vmatpush.msra.mxu0 0.0
  %2378 = vmatpush.msra.mxu0 %v2296
  %2379 = vmatpush.msra.mxu0 %v2288
  %2380 = vmatpush.msra.mxu0 %v2280
  %2381 = vmatpush.msra.mxu0 %v2272
  %2382 = vmatpush.msra.mxu0 %v2264
  %2383 = vmatpush.msra.mxu0 %v2256
  %2384 = vmatpush.msra.mxu0 %v2248
  %2385 = vmatpush.msra.mxu0 %v2240
  %2386 = vmatmul.f32.gmra.mxu0 %v2308
  %v2387 = vpop.f32.mrf.mxu0
  %v2388 = vadd.f32 %v2304, %v2387
  %2389 = vdwg.mxu0
  %2390 = vmatpush.msra.mxu0 0.0
  %2391 = vmatpush.msra.mxu0 0.0
  %2392 = vmatpush.msra.mxu0 0.0
  %2393 = vmatpush.msra.mxu0 0.0
  %2394 = vmatpush.msra.mxu0 0.0
  %2395 = vmatpush.msra.mxu0 0.0
  %2396 = vmatpush.msra.mxu0 0.0
  %2397 = vmatpush.msra.mxu0 0.0
  %2398 = vmatpush.msra.mxu0 %v2297
  %2399 = vmatpush.msra.mxu0 %v2289
  %2400 = vmatpush.msra.mxu0 %v2281
  %2401 = vmatpush.msra.mxu0 %v2273
  %2402 = vmatpush.msra.mxu0 %v2265
  %2403 = vmatpush.msra.mxu0 %v2257
  %2404 = vmatpush.msra.mxu0 %v2249
  %2405 = vmatpush.msra.mxu0 %v2241
  %2406 = vmatmul.f32.gmra.mxu0 %v2308
  %v2407 = vpop.f32.mrf.mxu0
  %v2408 = vadd.f32 %v2304, %v2407
  %2409 = vdwg.mxu0
  %2410 = vmatpush.msra.mxu0 0.0
  %2411 = vmatpush.msra.mxu0 0.0
  %2412 = vmatpush.msra.mxu0 0.0
  %2413 = vmatpush.msra.mxu0 0.0
  %2414 = vmatpush.msra.mxu0 0.0
  %2415 = vmatpush.msra.mxu0 0.0
  %2416 = vmatpush.msra.mxu0 0.0
  %2417 = vmatpush.msra.mxu0 0.0
  %2418 = vmatpush.msra.mxu0 %v2298
  %2419 = vmatpush.msra.mxu0 %v2290
  %2420 = vmatpush.msra.mxu0 %v2282
  %2421 = vmatpush.msra.mxu0 %v2274
  %2422 = vmatpush.msra.mxu0 %v2266
  %2423 = vmatpush.msra.mxu0 %v2258
  %2424 = vmatpush.msra.mxu0 %v2250
  %2425 = vmatpush.msra.mxu0 %v2242
  %2426 = vmatmul.f32.gmra.mxu0 %v2308
  %v2427 = vpop.f32.mrf.mxu0
  %v2428 = vadd.f32 %v2304, %v2427
  %2429 = vdwg.mxu0
  %2430 = vmatpush.msra.mxu0 0.0
  %2431 = vmatpush.msra.mxu0 0.0
  %2432 = vmatpush.msra.mxu0 0.0
  %2433 = vmatpush.msra.mxu0 0.0
  %2434 = vmatpush.msra.mxu0 0.0
  %2435 = vmatpush.msra.mxu0 0.0
  %2436 = vmatpush.msra.mxu0 0.0
  %2437 = vmatpush.msra.mxu0 0.0
  %2438 = vmatpush.msra.mxu0 %v2299
  %2439 = vmatpush.msra.mxu0 %v2291
  %2440 = vmatpush.msra.mxu0 %v2283
  %2441 = vmatpush.msra.mxu0 %v2275
  %2442 = vmatpush.msra.mxu0 %v2267
  %2443 = vmatpush.msra.mxu0 %v2259
  %2444 = vmatpush.msra.mxu0 %v2251
  %2445 = vmatpush.msra.mxu0 %v2243
  %2446 = vmatmul.f32.gmra.mxu0 %v2308
  %v2447 = vpop.f32.mrf.mxu0
  %v2448 = vadd.f32 %v2304, %v2447
  %2449 = vdwg.mxu0
  %2450 = vmatpush.msra.mxu0 0.0
  %2451 = vmatpush.msra.mxu0 0.0
  %2452 = vmatpush.msra.mxu0 0.0
  %2453 = vmatpush.msra.mxu0 0.0
  %2454 = vmatpush.msra.mxu0 0.0
  %2455 = vmatpush.msra.mxu0 0.0
  %2456 = vmatpush.msra.mxu0 0.0
  %2457 = vmatpush.msra.mxu0 0.0
  %2458 = vmatpush.msra.mxu0 %v2300
  %2459 = vmatpush.msra.mxu0 %v2292
  %2460 = vmatpush.msra.mxu0 %v2284
  %2461 = vmatpush.msra.mxu0 %v2276
  %2462 = vmatpush.msra.mxu0 %v2268
  %2463 = vmatpush.msra.mxu0 %v2260
  %2464 = vmatpush.msra.mxu0 %v2252
  %2465 = vmatpush.msra.mxu0 %v2244
  %2466 = vmatmul.f32.gmra.mxu0 %v2308
  %v2467 = vpop.f32.mrf.mxu0
  %v2468 = vadd.f32 %v2304, %v2467
  %2469 = vdwg.mxu0
  %v2478 = vrot.slane %v2348, 4
  %v2479 = vrot.slane %v2388, 4
  %v2480 = vrot.slane %v2428, 4
  %v2481 = vrot.slane %v2468, 4
  %vm2482 = vcmask 1043456
  %v2483 = vsel %vm2482, %v2328, %v2478
  %v2484 = vsel %vm2482, %v2368, %v2479
  %v2485 = vsel %vm2482, %v2408, %v2480
  %v2486 = vsel %vm2482, %v2448, %v2481
  %2491 = vst [vmem:[%s7] sm:$0x77] %v2483
  %2492 = vst [vmem:[%s7 + $0x8] sm:$0x77] %v2484
  %2493 = vst [vmem:[%s7 + $0x10] sm:$0x77] %v2485
  %2494 = vst [vmem:[%s7 + $0x18] sm:$0x77] %v2486
  %s2495 = scalar_lea.vmem %s0, 64
  %v2496 = vld [vmem:[%s2495] sm:$0xff]
  %v2497 = vld [vmem:[%s2495 + $0x8] sm:$0xff]
  %v2498 = vld [vmem:[%s2495 + $0x10] sm:$0xff]
  %v2499 = vld [vmem:[%s2495 + $0x18] sm:$0xff]
  %v2500 = vld [vmem:[%s2495 + $0x20] sm:$0xff]
  %v2501 = vld [vmem:[%s2495 + $0x28] sm:$0xff]
  %v2502 = vld [vmem:[%s2495 + $0x30] sm:$0xff]
  %v2503 = vld [vmem:[%s2495 + $0x38] sm:$0xff]
  %2504 = vmatpush.msra.mxu0 0.0
  %2505 = vmatpush.msra.mxu0 0.0
  %2506 = vmatpush.msra.mxu0 0.0
  %2507 = vmatpush.msra.mxu0 0.0
  %2508 = vmatpush.msra.mxu0 0.0
  %2509 = vmatpush.msra.mxu0 0.0
  %2510 = vmatpush.msra.mxu0 0.0
  %2511 = vmatpush.msra.mxu0 0.0
  %2512 = vmatpush.msra.mxu0 0.0
  %2513 = vmatpush.msra.mxu0 0.0
  %2514 = vmatpush.msra.mxu0 0.0
  %2515 = vmatpush.msra.mxu0 0.0
  %2516 = vmatpush.msra.mxu0 0.0
  %2517 = vmatpush.msra.mxu0 0.0
  %2518 = vmatpush.msra.mxu0 0.0
  %2519 = vmatpush.msra.mxu0 %v2496
  %2520 = vmatmul.f32.gmra.mxu0 %v286
  %v2521 = vpop.f32.mrf.mxu0
  %v2522 = vadd.f32 %v127, %v2521
  %2523 = vmatmul.f32.gmra.mxu0 %v289
  %v2524 = vpop.f32.mrf.mxu0
  %v2525 = vadd.f32 %v132, %v2524
  %2526 = vmatmul.f32.gmra.mxu0 %v292
  %v2527 = vpop.f32.mrf.mxu0
  %v2528 = vadd.f32 %v137, %v2527
  %2529 = vmatmul.f32.gmra.mxu0 %v295
  %v2530 = vpop.f32.mrf.mxu0
  %v2531 = vadd.f32 %v142, %v2530
  %2532 = vmatmul.f32.gmra.mxu0 %v298
  %v2533 = vpop.f32.mrf.mxu0
  %v2534 = vadd.f32 %v147, %v2533
  %2535 = vmatmul.f32.gmra.mxu0 %v301
  %v2536 = vpop.f32.mrf.mxu0
  %v2537 = vadd.f32 %v152, %v2536
  %2538 = vmatmul.f32.gmra.mxu0 %v304
  %v2539 = vpop.f32.mrf.mxu0
  %v2540 = vadd.f32 %v157, %v2539
  %2541 = vmatmul.f32.gmra.mxu0 %v307
  %v2542 = vpop.f32.mrf.mxu0
  %v2543 = vadd.f32 %v162, %v2542
  %2544 = vmatmul.f32.gmra.mxu0 %v310
  %v2545 = vpop.f32.mrf.mxu0
  %v2546 = vadd.f32 %v167, %v2545
  %2547 = vmatmul.f32.gmra.mxu0 %v313
  %v2548 = vpop.f32.mrf.mxu0
  %v2549 = vadd.f32 %v172, %v2548
  %2550 = vmatmul.f32.gmra.mxu0 %v316
  %v2551 = vpop.f32.mrf.mxu0
  %v2552 = vadd.f32 %v177, %v2551
  %2553 = vmatmul.f32.gmra.mxu0 %v319
  %v2554 = vpop.f32.mrf.mxu0
  %v2555 = vadd.f32 %v182, %v2554
  %2556 = vmatmul.f32.gmra.mxu0 %v322
  %v2557 = vpop.f32.mrf.mxu0
  %v2558 = vadd.f32 %v187, %v2557
  %2559 = vmatmul.f32.gmra.mxu0 %v325
  %v2560 = vpop.f32.mrf.mxu0
  %v2561 = vadd.f32 %v192, %v2560
  %2562 = vmatmul.f32.gmra.mxu0 %v328
  %v2563 = vpop.f32.mrf.mxu0
  %v2564 = vadd.f32 %v197, %v2563
  %2565 = vmatmul.f32.gmra.mxu0 %v331
  %v2566 = vpop.f32.mrf.mxu0
  %v2567 = vadd.f32 %v202, %v2566
  %2568 = vmatmul.f32.gmra.mxu0 %v334
  %v2569 = vpop.f32.mrf.mxu0
  %v2570 = vadd.f32 %v207, %v2569
  %2571 = vmatmul.f32.gmra.mxu0 %v337
  %v2572 = vpop.f32.mrf.mxu0
  %v2573 = vadd.f32 %v212, %v2572
  %2574 = vmatmul.f32.gmra.mxu0 %v340
  %v2575 = vpop.f32.mrf.mxu0
  %v2576 = vadd.f32 %v217, %v2575
  %2577 = vmatmul.f32.gmra.mxu0 %v343
  %v2578 = vpop.f32.mrf.mxu0
  %v2579 = vadd.f32 %v222, %v2578
  %2580 = vmatmul.f32.gmra.mxu0 %v346
  %v2581 = vpop.f32.mrf.mxu0
  %v2582 = vadd.f32 %v227, %v2581
  %2583 = vmatmul.f32.gmra.mxu0 %v349
  %v2584 = vpop.f32.mrf.mxu0
  %v2585 = vadd.f32 %v232, %v2584
  %2586 = vmatmul.f32.gmra.mxu0 %v352
  %v2587 = vpop.f32.mrf.mxu0
  %v2588 = vadd.f32 %v237, %v2587
  %2589 = vmatmul.f32.gmra.mxu0 %v355
  %v2590 = vpop.f32.mrf.mxu0
  %v2591 = vadd.f32 %v242, %v2590
  %2592 = vmatmul.f32.gmra.mxu0 %v358
  %v2593 = vpop.f32.mrf.mxu0
  %v2594 = vadd.f32 %v247, %v2593
  %2595 = vmatmul.f32.gmra.mxu0 %v361
  %v2596 = vpop.f32.mrf.mxu0
  %v2597 = vadd.f32 %v252, %v2596
  %2598 = vmatmul.f32.gmra.mxu0 %v364
  %v2599 = vpop.f32.mrf.mxu0
  %v2600 = vadd.f32 %v257, %v2599
  %2601 = vmatmul.f32.gmra.mxu0 %v367
  %v2602 = vpop.f32.mrf.mxu0
  %v2603 = vadd.f32 %v262, %v2602
  %2604 = vmatmul.f32.gmra.mxu0 %v370
  %v2605 = vpop.f32.mrf.mxu0
  %v2606 = vadd.f32 %v267, %v2605
  %2607 = vmatmul.f32.gmra.mxu0 %v373
  %v2608 = vpop.f32.mrf.mxu0
  %v2609 = vadd.f32 %v272, %v2608
  %2610 = vmatmul.f32.gmra.mxu0 %v376
  %v2611 = vpop.f32.mrf.mxu0
  %v2612 = vadd.f32 %v277, %v2611
  %2613 = vmatmul.f32.gmra.mxu0 %v379
  %v2614 = vpop.f32.mrf.mxu0
  %v2615 = vadd.f32 %v282, %v2614
  %2616 = vdwg.mxu0
  %2617 = vmatpush.msra.mxu0 0.0
  %2618 = vmatpush.msra.mxu0 0.0
  %2619 = vmatpush.msra.mxu0 0.0
  %2620 = vmatpush.msra.mxu0 0.0
  %2621 = vmatpush.msra.mxu0 0.0
  %2622 = vmatpush.msra.mxu0 0.0
  %2623 = vmatpush.msra.mxu0 0.0
  %2624 = vmatpush.msra.mxu0 0.0
  %2625 = vmatpush.msra.mxu0 0.0
  %2626 = vmatpush.msra.mxu0 0.0
  %2627 = vmatpush.msra.mxu0 0.0
  %2628 = vmatpush.msra.mxu0 0.0
  %2629 = vmatpush.msra.mxu0 0.0
  %2630 = vmatpush.msra.mxu0 0.0
  %2631 = vmatpush.msra.mxu0 0.0
  %2632 = vmatpush.msra.mxu0 %v2497
  %2633 = vmatmul.f32.gmra.mxu0 %v286
  %v2634 = vpop.f32.mrf.mxu0
  %v2635 = vadd.f32 %v127, %v2634
  %2636 = vmatmul.f32.gmra.mxu0 %v289
  %v2637 = vpop.f32.mrf.mxu0
  %v2638 = vadd.f32 %v132, %v2637
  %2639 = vmatmul.f32.gmra.mxu0 %v292
  %v2640 = vpop.f32.mrf.mxu0
  %v2641 = vadd.f32 %v137, %v2640
  %2642 = vmatmul.f32.gmra.mxu0 %v295
  %v2643 = vpop.f32.mrf.mxu0
  %v2644 = vadd.f32 %v142, %v2643
  %2645 = vmatmul.f32.gmra.mxu0 %v298
  %v2646 = vpop.f32.mrf.mxu0
  %v2647 = vadd.f32 %v147, %v2646
  %2648 = vmatmul.f32.gmra.mxu0 %v301
  %v2649 = vpop.f32.mrf.mxu0
  %v2650 = vadd.f32 %v152, %v2649
  %2651 = vmatmul.f32.gmra.mxu0 %v304
  %v2652 = vpop.f32.mrf.mxu0
  %v2653 = vadd.f32 %v157, %v2652
  %2654 = vmatmul.f32.gmra.mxu0 %v307
  %v2655 = vpop.f32.mrf.mxu0
  %v2656 = vadd.f32 %v162, %v2655
  %2657 = vmatmul.f32.gmra.mxu0 %v310
  %v2658 = vpop.f32.mrf.mxu0
  %v2659 = vadd.f32 %v167, %v2658
  %2660 = vmatmul.f32.gmra.mxu0 %v313
  %v2661 = vpop.f32.mrf.mxu0
  %v2662 = vadd.f32 %v172, %v2661
  %2663 = vmatmul.f32.gmra.mxu0 %v316
  %v2664 = vpop.f32.mrf.mxu0
  %v2665 = vadd.f32 %v177, %v2664
  %2666 = vmatmul.f32.gmra.mxu0 %v319
  %v2667 = vpop.f32.mrf.mxu0
  %v2668 = vadd.f32 %v182, %v2667
  %2669 = vmatmul.f32.gmra.mxu0 %v322
  %v2670 = vpop.f32.mrf.mxu0
  %v2671 = vadd.f32 %v187, %v2670
  %2672 = vmatmul.f32.gmra.mxu0 %v325
  %v2673 = vpop.f32.mrf.mxu0
  %v2674 = vadd.f32 %v192, %v2673
  %2675 = vmatmul.f32.gmra.mxu0 %v328
  %v2676 = vpop.f32.mrf.mxu0
  %v2677 = vadd.f32 %v197, %v2676
  %2678 = vmatmul.f32.gmra.mxu0 %v331
  %v2679 = vpop.f32.mrf.mxu0
  %v2680 = vadd.f32 %v202, %v2679
  %2681 = vmatmul.f32.gmra.mxu0 %v334
  %v2682 = vpop.f32.mrf.mxu0
  %v2683 = vadd.f32 %v207, %v2682
  %2684 = vmatmul.f32.gmra.mxu0 %v337
  %v2685 = vpop.f32.mrf.mxu0
  %v2686 = vadd.f32 %v212, %v2685
  %2687 = vmatmul.f32.gmra.mxu0 %v340
  %v2688 = vpop.f32.mrf.mxu0
  %v2689 = vadd.f32 %v217, %v2688
  %2690 = vmatmul.f32.gmra.mxu0 %v343
  %v2691 = vpop.f32.mrf.mxu0
  %v2692 = vadd.f32 %v222, %v2691
  %2693 = vmatmul.f32.gmra.mxu0 %v346
  %v2694 = vpop.f32.mrf.mxu0
  %v2695 = vadd.f32 %v227, %v2694
  %2696 = vmatmul.f32.gmra.mxu0 %v349
  %v2697 = vpop.f32.mrf.mxu0
  %v2698 = vadd.f32 %v232, %v2697
  %2699 = vmatmul.f32.gmra.mxu0 %v352
  %v2700 = vpop.f32.mrf.mxu0
  %v2701 = vadd.f32 %v237, %v2700
  %2702 = vmatmul.f32.gmra.mxu0 %v355
  %v2703 = vpop.f32.mrf.mxu0
  %v2704 = vadd.f32 %v242, %v2703
  %2705 = vmatmul.f32.gmra.mxu0 %v358
  %v2706 = vpop.f32.mrf.mxu0
  %v2707 = vadd.f32 %v247, %v2706
  %2708 = vmatmul.f32.gmra.mxu0 %v361
  %v2709 = vpop.f32.mrf.mxu0
  %v2710 = vadd.f32 %v252, %v2709
  %2711 = vmatmul.f32.gmra.mxu0 %v364
  %v2712 = vpop.f32.mrf.mxu0
  %v2713 = vadd.f32 %v257, %v2712
  %2714 = vmatmul.f32.gmra.mxu0 %v367
  %v2715 = vpop.f32.mrf.mxu0
  %v2716 = vadd.f32 %v262, %v2715
  %2717 = vmatmul.f32.gmra.mxu0 %v370
  %v2718 = vpop.f32.mrf.mxu0
  %v2719 = vadd.f32 %v267, %v2718
  %2720 = vmatmul.f32.gmra.mxu0 %v373
  %v2721 = vpop.f32.mrf.mxu0
  %v2722 = vadd.f32 %v272, %v2721
  %2723 = vmatmul.f32.gmra.mxu0 %v376
  %v2724 = vpop.f32.mrf.mxu0
  %v2725 = vadd.f32 %v277, %v2724
  %2726 = vmatmul.f32.gmra.mxu0 %v379
  %v2727 = vpop.f32.mrf.mxu0
  %v2728 = vadd.f32 %v282, %v2727
  %2729 = vdwg.mxu0
  %2730 = vmatpush.msra.mxu0 0.0
  %2731 = vmatpush.msra.mxu0 0.0
  %2732 = vmatpush.msra.mxu0 0.0
  %2733 = vmatpush.msra.mxu0 0.0
  %2734 = vmatpush.msra.mxu0 0.0
  %2735 = vmatpush.msra.mxu0 0.0
  %2736 = vmatpush.msra.mxu0 0.0
  %2737 = vmatpush.msra.mxu0 0.0
  %2738 = vmatpush.msra.mxu0 0.0
  %2739 = vmatpush.msra.mxu0 0.0
  %2740 = vmatpush.msra.mxu0 0.0
  %2741 = vmatpush.msra.mxu0 0.0
  %2742 = vmatpush.msra.mxu0 0.0
  %2743 = vmatpush.msra.mxu0 0.0
  %2744 = vmatpush.msra.mxu0 0.0
  %2745 = vmatpush.msra.mxu0 %v2498
  %2746 = vmatmul.f32.gmra.mxu0 %v286
  %v2747 = vpop.f32.mrf.mxu0
  %v2748 = vadd.f32 %v127, %v2747
  %2749 = vmatmul.f32.gmra.mxu0 %v289
  %v2750 = vpop.f32.mrf.mxu0
  %v2751 = vadd.f32 %v132, %v2750
  %2752 = vmatmul.f32.gmra.mxu0 %v292
  %v2753 = vpop.f32.mrf.mxu0
  %v2754 = vadd.f32 %v137, %v2753
  %2755 = vmatmul.f32.gmra.mxu0 %v295
  %v2756 = vpop.f32.mrf.mxu0
  %v2757 = vadd.f32 %v142, %v2756
  %2758 = vmatmul.f32.gmra.mxu0 %v298
  %v2759 = vpop.f32.mrf.mxu0
  %v2760 = vadd.f32 %v147, %v2759
  %2761 = vmatmul.f32.gmra.mxu0 %v301
  %v2762 = vpop.f32.mrf.mxu0
  %v2763 = vadd.f32 %v152, %v2762
  %2764 = vmatmul.f32.gmra.mxu0 %v304
  %v2765 = vpop.f32.mrf.mxu0
  %v2766 = vadd.f32 %v157, %v2765
  %2767 = vmatmul.f32.gmra.mxu0 %v307
  %v2768 = vpop.f32.mrf.mxu0
  %v2769 = vadd.f32 %v162, %v2768
  %2770 = vmatmul.f32.gmra.mxu0 %v310
  %v2771 = vpop.f32.mrf.mxu0
  %v2772 = vadd.f32 %v167, %v2771
  %2773 = vmatmul.f32.gmra.mxu0 %v313
  %v2774 = vpop.f32.mrf.mxu0
  %v2775 = vadd.f32 %v172, %v2774
  %2776 = vmatmul.f32.gmra.mxu0 %v316
  %v2777 = vpop.f32.mrf.mxu0
  %v2778 = vadd.f32 %v177, %v2777
  %2779 = vmatmul.f32.gmra.mxu0 %v319
  %v2780 = vpop.f32.mrf.mxu0
  %v2781 = vadd.f32 %v182, %v2780
  %2782 = vmatmul.f32.gmra.mxu0 %v322
  %v2783 = vpop.f32.mrf.mxu0
  %v2784 = vadd.f32 %v187, %v2783
  %2785 = vmatmul.f32.gmra.mxu0 %v325
  %v2786 = vpop.f32.mrf.mxu0
  %v2787 = vadd.f32 %v192, %v2786
  %2788 = vmatmul.f32.gmra.mxu0 %v328
  %v2789 = vpop.f32.mrf.mxu0
  %v2790 = vadd.f32 %v197, %v2789
  %2791 = vmatmul.f32.gmra.mxu0 %v331
  %v2792 = vpop.f32.mrf.mxu0
  %v2793 = vadd.f32 %v202, %v2792
  %2794 = vmatmul.f32.gmra.mxu0 %v334
  %v2795 = vpop.f32.mrf.mxu0
  %v2796 = vadd.f32 %v207, %v2795
  %2797 = vmatmul.f32.gmra.mxu0 %v337
  %v2798 = vpop.f32.mrf.mxu0
  %v2799 = vadd.f32 %v212, %v2798
  %2800 = vmatmul.f32.gmra.mxu0 %v340
  %v2801 = vpop.f32.mrf.mxu0
  %v2802 = vadd.f32 %v217, %v2801
  %2803 = vmatmul.f32.gmra.mxu0 %v343
  %v2804 = vpop.f32.mrf.mxu0
  %v2805 = vadd.f32 %v222, %v2804
  %2806 = vmatmul.f32.gmra.mxu0 %v346
  %v2807 = vpop.f32.mrf.mxu0
  %v2808 = vadd.f32 %v227, %v2807
  %2809 = vmatmul.f32.gmra.mxu0 %v349
  %v2810 = vpop.f32.mrf.mxu0
  %v2811 = vadd.f32 %v232, %v2810
  %2812 = vmatmul.f32.gmra.mxu0 %v352
  %v2813 = vpop.f32.mrf.mxu0
  %v2814 = vadd.f32 %v237, %v2813
  %2815 = vmatmul.f32.gmra.mxu0 %v355
  %v2816 = vpop.f32.mrf.mxu0
  %v2817 = vadd.f32 %v242, %v2816
  %2818 = vmatmul.f32.gmra.mxu0 %v358
  %v2819 = vpop.f32.mrf.mxu0
  %v2820 = vadd.f32 %v247, %v2819
  %2821 = vmatmul.f32.gmra.mxu0 %v361
  %v2822 = vpop.f32.mrf.mxu0
  %v2823 = vadd.f32 %v252, %v2822
  %2824 = vmatmul.f32.gmra.mxu0 %v364
  %v2825 = vpop.f32.mrf.mxu0
  %v2826 = vadd.f32 %v257, %v2825
  %2827 = vmatmul.f32.gmra.mxu0 %v367
  %v2828 = vpop.f32.mrf.mxu0
  %v2829 = vadd.f32 %v262, %v2828
  %2830 = vmatmul.f32.gmra.mxu0 %v370
  %v2831 = vpop.f32.mrf.mxu0
  %v2832 = vadd.f32 %v267, %v2831
  %2833 = vmatmul.f32.gmra.mxu0 %v373
  %v2834 = vpop.f32.mrf.mxu0
  %v2835 = vadd.f32 %v272, %v2834
  %2836 = vmatmul.f32.gmra.mxu0 %v376
  %v2837 = vpop.f32.mrf.mxu0
  %v2838 = vadd.f32 %v277, %v2837
  %2839 = vmatmul.f32.gmra.mxu0 %v379
  %v2840 = vpop.f32.mrf.mxu0
  %v2841 = vadd.f32 %v282, %v2840
  %2842 = vdwg.mxu0
  %2843 = vmatpush.msra.mxu0 0.0
  %2844 = vmatpush.msra.mxu0 0.0
  %2845 = vmatpush.msra.mxu0 0.0
  %2846 = vmatpush.msra.mxu0 0.0
  %2847 = vmatpush.msra.mxu0 0.0
  %2848 = vmatpush.msra.mxu0 0.0
  %2849 = vmatpush.msra.mxu0 0.0
  %2850 = vmatpush.msra.mxu0 0.0
  %2851 = vmatpush.msra.mxu0 0.0
  %2852 = vmatpush.msra.mxu0 0.0
  %2853 = vmatpush.msra.mxu0 0.0
  %2854 = vmatpush.msra.mxu0 0.0
  %2855 = vmatpush.msra.mxu0 0.0
  %2856 = vmatpush.msra.mxu0 0.0
  %2857 = vmatpush.msra.mxu0 0.0
  %2858 = vmatpush.msra.mxu0 %v2499
  %2859 = vmatmul.f32.gmra.mxu0 %v286
  %v2860 = vpop.f32.mrf.mxu0
  %v2861 = vadd.f32 %v127, %v2860
  %2862 = vmatmul.f32.gmra.mxu0 %v289
  %v2863 = vpop.f32.mrf.mxu0
  %v2864 = vadd.f32 %v132, %v2863
  %2865 = vmatmul.f32.gmra.mxu0 %v292
  %v2866 = vpop.f32.mrf.mxu0
  %v2867 = vadd.f32 %v137, %v2866
  %2868 = vmatmul.f32.gmra.mxu0 %v295
  %v2869 = vpop.f32.mrf.mxu0
  %v2870 = vadd.f32 %v142, %v2869
  %2871 = vmatmul.f32.gmra.mxu0 %v298
  %v2872 = vpop.f32.mrf.mxu0
  %v2873 = vadd.f32 %v147, %v2872
  %2874 = vmatmul.f32.gmra.mxu0 %v301
  %v2875 = vpop.f32.mrf.mxu0
  %v2876 = vadd.f32 %v152, %v2875
  %2877 = vmatmul.f32.gmra.mxu0 %v304
  %v2878 = vpop.f32.mrf.mxu0
  %v2879 = vadd.f32 %v157, %v2878
  %2880 = vmatmul.f32.gmra.mxu0 %v307
  %v2881 = vpop.f32.mrf.mxu0
  %v2882 = vadd.f32 %v162, %v2881
  %2883 = vmatmul.f32.gmra.mxu0 %v310
  %v2884 = vpop.f32.mrf.mxu0
  %v2885 = vadd.f32 %v167, %v2884
  %2886 = vmatmul.f32.gmra.mxu0 %v313
  %v2887 = vpop.f32.mrf.mxu0
  %v2888 = vadd.f32 %v172, %v2887
  %2889 = vmatmul.f32.gmra.mxu0 %v316
  %v2890 = vpop.f32.mrf.mxu0
  %v2891 = vadd.f32 %v177, %v2890
  %2892 = vmatmul.f32.gmra.mxu0 %v319
  %v2893 = vpop.f32.mrf.mxu0
  %v2894 = vadd.f32 %v182, %v2893
  %2895 = vmatmul.f32.gmra.mxu0 %v322
  %v2896 = vpop.f32.mrf.mxu0
  %v2897 = vadd.f32 %v187, %v2896
  %2898 = vmatmul.f32.gmra.mxu0 %v325
  %v2899 = vpop.f32.mrf.mxu0
  %v2900 = vadd.f32 %v192, %v2899
  %2901 = vmatmul.f32.gmra.mxu0 %v328
  %v2902 = vpop.f32.mrf.mxu0
  %v2903 = vadd.f32 %v197, %v2902
  %2904 = vmatmul.f32.gmra.mxu0 %v331
  %v2905 = vpop.f32.mrf.mxu0
  %v2906 = vadd.f32 %v202, %v2905
  %2907 = vmatmul.f32.gmra.mxu0 %v334
  %v2908 = vpop.f32.mrf.mxu0
  %v2909 = vadd.f32 %v207, %v2908
  %2910 = vmatmul.f32.gmra.mxu0 %v337
  %v2911 = vpop.f32.mrf.mxu0
  %v2912 = vadd.f32 %v212, %v2911
  %2913 = vmatmul.f32.gmra.mxu0 %v340
  %v2914 = vpop.f32.mrf.mxu0
  %v2915 = vadd.f32 %v217, %v2914
  %2916 = vmatmul.f32.gmra.mxu0 %v343
  %v2917 = vpop.f32.mrf.mxu0
  %v2918 = vadd.f32 %v222, %v2917
  %2919 = vmatmul.f32.gmra.mxu0 %v346
  %v2920 = vpop.f32.mrf.mxu0
  %v2921 = vadd.f32 %v227, %v2920
  %2922 = vmatmul.f32.gmra.mxu0 %v349
  %v2923 = vpop.f32.mrf.mxu0
  %v2924 = vadd.f32 %v232, %v2923
  %2925 = vmatmul.f32.gmra.mxu0 %v352
  %v2926 = vpop.f32.mrf.mxu0
  %v2927 = vadd.f32 %v237, %v2926
  %2928 = vmatmul.f32.gmra.mxu0 %v355
  %v2929 = vpop.f32.mrf.mxu0
  %v2930 = vadd.f32 %v242, %v2929
  %2931 = vmatmul.f32.gmra.mxu0 %v358
  %v2932 = vpop.f32.mrf.mxu0
  %v2933 = vadd.f32 %v247, %v2932
  %2934 = vmatmul.f32.gmra.mxu0 %v361
  %v2935 = vpop.f32.mrf.mxu0
  %v2936 = vadd.f32 %v252, %v2935
  %2937 = vmatmul.f32.gmra.mxu0 %v364
  %v2938 = vpop.f32.mrf.mxu0
  %v2939 = vadd.f32 %v257, %v2938
  %2940 = vmatmul.f32.gmra.mxu0 %v367
  %v2941 = vpop.f32.mrf.mxu0
  %v2942 = vadd.f32 %v262, %v2941
  %2943 = vmatmul.f32.gmra.mxu0 %v370
  %v2944 = vpop.f32.mrf.mxu0
  %v2945 = vadd.f32 %v267, %v2944
  %2946 = vmatmul.f32.gmra.mxu0 %v373
  %v2947 = vpop.f32.mrf.mxu0
  %v2948 = vadd.f32 %v272, %v2947
  %2949 = vmatmul.f32.gmra.mxu0 %v376
  %v2950 = vpop.f32.mrf.mxu0
  %v2951 = vadd.f32 %v277, %v2950
  %2952 = vmatmul.f32.gmra.mxu0 %v379
  %v2953 = vpop.f32.mrf.mxu0
  %v2954 = vadd.f32 %v282, %v2953
  %2955 = vdwg.mxu0
  %2956 = vmatpush.msra.mxu0 0.0
  %2957 = vmatpush.msra.mxu0 0.0
  %2958 = vmatpush.msra.mxu0 0.0
  %2959 = vmatpush.msra.mxu0 0.0
  %2960 = vmatpush.msra.mxu0 0.0
  %2961 = vmatpush.msra.mxu0 0.0
  %2962 = vmatpush.msra.mxu0 0.0
  %2963 = vmatpush.msra.mxu0 0.0
  %2964 = vmatpush.msra.mxu0 0.0
  %2965 = vmatpush.msra.mxu0 0.0
  %2966 = vmatpush.msra.mxu0 0.0
  %2967 = vmatpush.msra.mxu0 0.0
  %2968 = vmatpush.msra.mxu0 0.0
  %2969 = vmatpush.msra.mxu0 0.0
  %2970 = vmatpush.msra.mxu0 0.0
  %2971 = vmatpush.msra.mxu0 %v2500
  %2972 = vmatmul.f32.gmra.mxu0 %v286
  %v2973 = vpop.f32.mrf.mxu0
  %v2974 = vadd.f32 %v127, %v2973
  %2975 = vmatmul.f32.gmra.mxu0 %v289
  %v2976 = vpop.f32.mrf.mxu0
  %v2977 = vadd.f32 %v132, %v2976
  %2978 = vmatmul.f32.gmra.mxu0 %v292
  %v2979 = vpop.f32.mrf.mxu0
  %v2980 = vadd.f32 %v137, %v2979
  %2981 = vmatmul.f32.gmra.mxu0 %v295
  %v2982 = vpop.f32.mrf.mxu0
  %v2983 = vadd.f32 %v142, %v2982
  %2984 = vmatmul.f32.gmra.mxu0 %v298
  %v2985 = vpop.f32.mrf.mxu0
  %v2986 = vadd.f32 %v147, %v2985
  %2987 = vmatmul.f32.gmra.mxu0 %v301
  %v2988 = vpop.f32.mrf.mxu0
  %v2989 = vadd.f32 %v152, %v2988
  %2990 = vmatmul.f32.gmra.mxu0 %v304
  %v2991 = vpop.f32.mrf.mxu0
  %v2992 = vadd.f32 %v157, %v2991
  %2993 = vmatmul.f32.gmra.mxu0 %v307
  %v2994 = vpop.f32.mrf.mxu0
  %v2995 = vadd.f32 %v162, %v2994
  %2996 = vmatmul.f32.gmra.mxu0 %v310
  %v2997 = vpop.f32.mrf.mxu0
  %v2998 = vadd.f32 %v167, %v2997
  %2999 = vmatmul.f32.gmra.mxu0 %v313
  %v3000 = vpop.f32.mrf.mxu0
  %v3001 = vadd.f32 %v172, %v3000
  %3002 = vmatmul.f32.gmra.mxu0 %v316
  %v3003 = vpop.f32.mrf.mxu0
  %v3004 = vadd.f32 %v177, %v3003
  %3005 = vmatmul.f32.gmra.mxu0 %v319
  %v3006 = vpop.f32.mrf.mxu0
  %v3007 = vadd.f32 %v182, %v3006
  %3008 = vmatmul.f32.gmra.mxu0 %v322
  %v3009 = vpop.f32.mrf.mxu0
  %v3010 = vadd.f32 %v187, %v3009
  %3011 = vmatmul.f32.gmra.mxu0 %v325
  %v3012 = vpop.f32.mrf.mxu0
  %v3013 = vadd.f32 %v192, %v3012
  %3014 = vmatmul.f32.gmra.mxu0 %v328
  %v3015 = vpop.f32.mrf.mxu0
  %v3016 = vadd.f32 %v197, %v3015
  %3017 = vmatmul.f32.gmra.mxu0 %v331
  %v3018 = vpop.f32.mrf.mxu0
  %v3019 = vadd.f32 %v202, %v3018
  %3020 = vmatmul.f32.gmra.mxu0 %v334
  %v3021 = vpop.f32.mrf.mxu0
  %v3022 = vadd.f32 %v207, %v3021
  %3023 = vmatmul.f32.gmra.mxu0 %v337
  %v3024 = vpop.f32.mrf.mxu0
  %v3025 = vadd.f32 %v212, %v3024
  %3026 = vmatmul.f32.gmra.mxu0 %v340
  %v3027 = vpop.f32.mrf.mxu0
  %v3028 = vadd.f32 %v217, %v3027
  %3029 = vmatmul.f32.gmra.mxu0 %v343
  %v3030 = vpop.f32.mrf.mxu0
  %v3031 = vadd.f32 %v222, %v3030
  %3032 = vmatmul.f32.gmra.mxu0 %v346
  %v3033 = vpop.f32.mrf.mxu0
  %v3034 = vadd.f32 %v227, %v3033
  %3035 = vmatmul.f32.gmra.mxu0 %v349
  %v3036 = vpop.f32.mrf.mxu0
  %v3037 = vadd.f32 %v232, %v3036
  %3038 = vmatmul.f32.gmra.mxu0 %v352
  %v3039 = vpop.f32.mrf.mxu0
  %v3040 = vadd.f32 %v237, %v3039
  %3041 = vmatmul.f32.gmra.mxu0 %v355
  %v3042 = vpop.f32.mrf.mxu0
  %v3043 = vadd.f32 %v242, %v3042
  %3044 = vmatmul.f32.gmra.mxu0 %v358
  %v3045 = vpop.f32.mrf.mxu0
  %v3046 = vadd.f32 %v247, %v3045
  %3047 = vmatmul.f32.gmra.mxu0 %v361
  %v3048 = vpop.f32.mrf.mxu0
  %v3049 = vadd.f32 %v252, %v3048
  %3050 = vmatmul.f32.gmra.mxu0 %v364
  %v3051 = vpop.f32.mrf.mxu0
  %v3052 = vadd.f32 %v257, %v3051
  %3053 = vmatmul.f32.gmra.mxu0 %v367
  %v3054 = vpop.f32.mrf.mxu0
  %v3055 = vadd.f32 %v262, %v3054
  %3056 = vmatmul.f32.gmra.mxu0 %v370
  %v3057 = vpop.f32.mrf.mxu0
  %v3058 = vadd.f32 %v267, %v3057
  %3059 = vmatmul.f32.gmra.mxu0 %v373
  %v3060 = vpop.f32.mrf.mxu0
  %v3061 = vadd.f32 %v272, %v3060
  %3062 = vmatmul.f32.gmra.mxu0 %v376
  %v3063 = vpop.f32.mrf.mxu0
  %v3064 = vadd.f32 %v277, %v3063
  %3065 = vmatmul.f32.gmra.mxu0 %v379
  %v3066 = vpop.f32.mrf.mxu0
  %v3067 = vadd.f32 %v282, %v3066
  %3068 = vdwg.mxu0
  %3069 = vmatpush.msra.mxu0 0.0
  %3070 = vmatpush.msra.mxu0 0.0
  %3071 = vmatpush.msra.mxu0 0.0
  %3072 = vmatpush.msra.mxu0 0.0
  %3073 = vmatpush.msra.mxu0 0.0
  %3074 = vmatpush.msra.mxu0 0.0
  %3075 = vmatpush.msra.mxu0 0.0
  %3076 = vmatpush.msra.mxu0 0.0
  %3077 = vmatpush.msra.mxu0 0.0
  %3078 = vmatpush.msra.mxu0 0.0
  %3079 = vmatpush.msra.mxu0 0.0
  %3080 = vmatpush.msra.mxu0 0.0
  %3081 = vmatpush.msra.mxu0 0.0
  %3082 = vmatpush.msra.mxu0 0.0
  %3083 = vmatpush.msra.mxu0 0.0
  %3084 = vmatpush.msra.mxu0 %v2501
  %3085 = vmatmul.f32.gmra.mxu0 %v286
  %v3086 = vpop.f32.mrf.mxu0
  %v3087 = vadd.f32 %v127, %v3086
  %3088 = vmatmul.f32.gmra.mxu0 %v289
  %v3089 = vpop.f32.mrf.mxu0
  %v3090 = vadd.f32 %v132, %v3089
  %3091 = vmatmul.f32.gmra.mxu0 %v292
  %v3092 = vpop.f32.mrf.mxu0
  %v3093 = vadd.f32 %v137, %v3092
  %3094 = vmatmul.f32.gmra.mxu0 %v295
  %v3095 = vpop.f32.mrf.mxu0
  %v3096 = vadd.f32 %v142, %v3095
  %3097 = vmatmul.f32.gmra.mxu0 %v298
  %v3098 = vpop.f32.mrf.mxu0
  %v3099 = vadd.f32 %v147, %v3098
  %3100 = vmatmul.f32.gmra.mxu0 %v301
  %v3101 = vpop.f32.mrf.mxu0
  %v3102 = vadd.f32 %v152, %v3101
  %3103 = vmatmul.f32.gmra.mxu0 %v304
  %v3104 = vpop.f32.mrf.mxu0
  %v3105 = vadd.f32 %v157, %v3104
  %3106 = vmatmul.f32.gmra.mxu0 %v307
  %v3107 = vpop.f32.mrf.mxu0
  %v3108 = vadd.f32 %v162, %v3107
  %3109 = vmatmul.f32.gmra.mxu0 %v310
  %v3110 = vpop.f32.mrf.mxu0
  %v3111 = vadd.f32 %v167, %v3110
  %3112 = vmatmul.f32.gmra.mxu0 %v313
  %v3113 = vpop.f32.mrf.mxu0
  %v3114 = vadd.f32 %v172, %v3113
  %3115 = vmatmul.f32.gmra.mxu0 %v316
  %v3116 = vpop.f32.mrf.mxu0
  %v3117 = vadd.f32 %v177, %v3116
  %3118 = vmatmul.f32.gmra.mxu0 %v319
  %v3119 = vpop.f32.mrf.mxu0
  %v3120 = vadd.f32 %v182, %v3119
  %3121 = vmatmul.f32.gmra.mxu0 %v322
  %v3122 = vpop.f32.mrf.mxu0
  %v3123 = vadd.f32 %v187, %v3122
  %3124 = vmatmul.f32.gmra.mxu0 %v325
  %v3125 = vpop.f32.mrf.mxu0
  %v3126 = vadd.f32 %v192, %v3125
  %3127 = vmatmul.f32.gmra.mxu0 %v328
  %v3128 = vpop.f32.mrf.mxu0
  %v3129 = vadd.f32 %v197, %v3128
  %3130 = vmatmul.f32.gmra.mxu0 %v331
  %v3131 = vpop.f32.mrf.mxu0
  %v3132 = vadd.f32 %v202, %v3131
  %3133 = vmatmul.f32.gmra.mxu0 %v334
  %v3134 = vpop.f32.mrf.mxu0
  %v3135 = vadd.f32 %v207, %v3134
  %3136 = vmatmul.f32.gmra.mxu0 %v337
  %v3137 = vpop.f32.mrf.mxu0
  %v3138 = vadd.f32 %v212, %v3137
  %3139 = vmatmul.f32.gmra.mxu0 %v340
  %v3140 = vpop.f32.mrf.mxu0
  %v3141 = vadd.f32 %v217, %v3140
  %3142 = vmatmul.f32.gmra.mxu0 %v343
  %v3143 = vpop.f32.mrf.mxu0
  %v3144 = vadd.f32 %v222, %v3143
  %3145 = vmatmul.f32.gmra.mxu0 %v346
  %v3146 = vpop.f32.mrf.mxu0
  %v3147 = vadd.f32 %v227, %v3146
  %3148 = vmatmul.f32.gmra.mxu0 %v349
  %v3149 = vpop.f32.mrf.mxu0
  %v3150 = vadd.f32 %v232, %v3149
  %3151 = vmatmul.f32.gmra.mxu0 %v352
  %v3152 = vpop.f32.mrf.mxu0
  %v3153 = vadd.f32 %v237, %v3152
  %3154 = vmatmul.f32.gmra.mxu0 %v355
  %v3155 = vpop.f32.mrf.mxu0
  %v3156 = vadd.f32 %v242, %v3155
  %3157 = vmatmul.f32.gmra.mxu0 %v358
  %v3158 = vpop.f32.mrf.mxu0
  %v3159 = vadd.f32 %v247, %v3158
  %3160 = vmatmul.f32.gmra.mxu0 %v361
  %v3161 = vpop.f32.mrf.mxu0
  %v3162 = vadd.f32 %v252, %v3161
  %3163 = vmatmul.f32.gmra.mxu0 %v364
  %v3164 = vpop.f32.mrf.mxu0
  %v3165 = vadd.f32 %v257, %v3164
  %3166 = vmatmul.f32.gmra.mxu0 %v367
  %v3167 = vpop.f32.mrf.mxu0
  %v3168 = vadd.f32 %v262, %v3167
  %3169 = vmatmul.f32.gmra.mxu0 %v370
  %v3170 = vpop.f32.mrf.mxu0
  %v3171 = vadd.f32 %v267, %v3170
  %3172 = vmatmul.f32.gmra.mxu0 %v373
  %v3173 = vpop.f32.mrf.mxu0
  %v3174 = vadd.f32 %v272, %v3173
  %3175 = vmatmul.f32.gmra.mxu0 %v376
  %v3176 = vpop.f32.mrf.mxu0
  %v3177 = vadd.f32 %v277, %v3176
  %3178 = vmatmul.f32.gmra.mxu0 %v379
  %v3179 = vpop.f32.mrf.mxu0
  %v3180 = vadd.f32 %v282, %v3179
  %3181 = vdwg.mxu0
  %3182 = vmatpush.msra.mxu0 0.0
  %3183 = vmatpush.msra.mxu0 0.0
  %3184 = vmatpush.msra.mxu0 0.0
  %3185 = vmatpush.msra.mxu0 0.0
  %3186 = vmatpush.msra.mxu0 0.0
  %3187 = vmatpush.msra.mxu0 0.0
  %3188 = vmatpush.msra.mxu0 0.0
  %3189 = vmatpush.msra.mxu0 0.0
  %3190 = vmatpush.msra.mxu0 0.0
  %3191 = vmatpush.msra.mxu0 0.0
  %3192 = vmatpush.msra.mxu0 0.0
  %3193 = vmatpush.msra.mxu0 0.0
  %3194 = vmatpush.msra.mxu0 0.0
  %3195 = vmatpush.msra.mxu0 0.0
  %3196 = vmatpush.msra.mxu0 0.0
  %3197 = vmatpush.msra.mxu0 %v2502
  %3198 = vmatmul.f32.gmra.mxu0 %v286
  %v3199 = vpop.f32.mrf.mxu0
  %v3200 = vadd.f32 %v127, %v3199
  %3201 = vmatmul.f32.gmra.mxu0 %v289
  %v3202 = vpop.f32.mrf.mxu0
  %v3203 = vadd.f32 %v132, %v3202
  %3204 = vmatmul.f32.gmra.mxu0 %v292
  %v3205 = vpop.f32.mrf.mxu0
  %v3206 = vadd.f32 %v137, %v3205
  %3207 = vmatmul.f32.gmra.mxu0 %v295
  %v3208 = vpop.f32.mrf.mxu0
  %v3209 = vadd.f32 %v142, %v3208
  %3210 = vmatmul.f32.gmra.mxu0 %v298
  %v3211 = vpop.f32.mrf.mxu0
  %v3212 = vadd.f32 %v147, %v3211
  %3213 = vmatmul.f32.gmra.mxu0 %v301
  %v3214 = vpop.f32.mrf.mxu0
  %v3215 = vadd.f32 %v152, %v3214
  %3216 = vmatmul.f32.gmra.mxu0 %v304
  %v3217 = vpop.f32.mrf.mxu0
  %v3218 = vadd.f32 %v157, %v3217
  %3219 = vmatmul.f32.gmra.mxu0 %v307
  %v3220 = vpop.f32.mrf.mxu0
  %v3221 = vadd.f32 %v162, %v3220
  %3222 = vmatmul.f32.gmra.mxu0 %v310
  %v3223 = vpop.f32.mrf.mxu0
  %v3224 = vadd.f32 %v167, %v3223
  %3225 = vmatmul.f32.gmra.mxu0 %v313
  %v3226 = vpop.f32.mrf.mxu0
  %v3227 = vadd.f32 %v172, %v3226
  %3228 = vmatmul.f32.gmra.mxu0 %v316
  %v3229 = vpop.f32.mrf.mxu0
  %v3230 = vadd.f32 %v177, %v3229
  %3231 = vmatmul.f32.gmra.mxu0 %v319
  %v3232 = vpop.f32.mrf.mxu0
  %v3233 = vadd.f32 %v182, %v3232
  %3234 = vmatmul.f32.gmra.mxu0 %v322
  %v3235 = vpop.f32.mrf.mxu0
  %v3236 = vadd.f32 %v187, %v3235
  %3237 = vmatmul.f32.gmra.mxu0 %v325
  %v3238 = vpop.f32.mrf.mxu0
  %v3239 = vadd.f32 %v192, %v3238
  %3240 = vmatmul.f32.gmra.mxu0 %v328
  %v3241 = vpop.f32.mrf.mxu0
  %v3242 = vadd.f32 %v197, %v3241
  %3243 = vmatmul.f32.gmra.mxu0 %v331
  %v3244 = vpop.f32.mrf.mxu0
  %v3245 = vadd.f32 %v202, %v3244
  %3246 = vmatmul.f32.gmra.mxu0 %v334
  %v3247 = vpop.f32.mrf.mxu0
  %v3248 = vadd.f32 %v207, %v3247
  %3249 = vmatmul.f32.gmra.mxu0 %v337
  %v3250 = vpop.f32.mrf.mxu0
  %v3251 = vadd.f32 %v212, %v3250
  %3252 = vmatmul.f32.gmra.mxu0 %v340
  %v3253 = vpop.f32.mrf.mxu0
  %v3254 = vadd.f32 %v217, %v3253
  %3255 = vmatmul.f32.gmra.mxu0 %v343
  %v3256 = vpop.f32.mrf.mxu0
  %v3257 = vadd.f32 %v222, %v3256
  %3258 = vmatmul.f32.gmra.mxu0 %v346
  %v3259 = vpop.f32.mrf.mxu0
  %v3260 = vadd.f32 %v227, %v3259
  %3261 = vmatmul.f32.gmra.mxu0 %v349
  %v3262 = vpop.f32.mrf.mxu0
  %v3263 = vadd.f32 %v232, %v3262
  %3264 = vmatmul.f32.gmra.mxu0 %v352
  %v3265 = vpop.f32.mrf.mxu0
  %v3266 = vadd.f32 %v237, %v3265
  %3267 = vmatmul.f32.gmra.mxu0 %v355
  %v3268 = vpop.f32.mrf.mxu0
  %v3269 = vadd.f32 %v242, %v3268
  %3270 = vmatmul.f32.gmra.mxu0 %v358
  %v3271 = vpop.f32.mrf.mxu0
  %v3272 = vadd.f32 %v247, %v3271
  %3273 = vmatmul.f32.gmra.mxu0 %v361
  %v3274 = vpop.f32.mrf.mxu0
  %v3275 = vadd.f32 %v252, %v3274
  %3276 = vmatmul.f32.gmra.mxu0 %v364
  %v3277 = vpop.f32.mrf.mxu0
  %v3278 = vadd.f32 %v257, %v3277
  %3279 = vmatmul.f32.gmra.mxu0 %v367
  %v3280 = vpop.f32.mrf.mxu0
  %v3281 = vadd.f32 %v262, %v3280
  %3282 = vmatmul.f32.gmra.mxu0 %v370
  %v3283 = vpop.f32.mrf.mxu0
  %v3284 = vadd.f32 %v267, %v3283
  %3285 = vmatmul.f32.gmra.mxu0 %v373
  %v3286 = vpop.f32.mrf.mxu0
  %v3287 = vadd.f32 %v272, %v3286
  %3288 = vmatmul.f32.gmra.mxu0 %v376
  %v3289 = vpop.f32.mrf.mxu0
  %v3290 = vadd.f32 %v277, %v3289
  %3291 = vmatmul.f32.gmra.mxu0 %v379
  %v3292 = vpop.f32.mrf.mxu0
  %v3293 = vadd.f32 %v282, %v3292
  %3294 = vdwg.mxu0
  %3295 = vmatpush.msra.mxu0 0.0
  %3296 = vmatpush.msra.mxu0 0.0
  %3297 = vmatpush.msra.mxu0 0.0
  %3298 = vmatpush.msra.mxu0 0.0
  %3299 = vmatpush.msra.mxu0 0.0
  %3300 = vmatpush.msra.mxu0 0.0
  %3301 = vmatpush.msra.mxu0 0.0
  %3302 = vmatpush.msra.mxu0 0.0
  %3303 = vmatpush.msra.mxu0 0.0
  %3304 = vmatpush.msra.mxu0 0.0
  %3305 = vmatpush.msra.mxu0 0.0
  %3306 = vmatpush.msra.mxu0 0.0
  %3307 = vmatpush.msra.mxu0 0.0
  %3308 = vmatpush.msra.mxu0 0.0
  %3309 = vmatpush.msra.mxu0 0.0
  %3310 = vmatpush.msra.mxu0 %v2503
  %3311 = vmatmul.f32.gmra.mxu0 %v286
  %v3312 = vpop.f32.mrf.mxu0
  %v3313 = vadd.f32 %v127, %v3312
  %3314 = vmatmul.f32.gmra.mxu0 %v289
  %v3315 = vpop.f32.mrf.mxu0
  %v3316 = vadd.f32 %v132, %v3315
  %3317 = vmatmul.f32.gmra.mxu0 %v292
  %v3318 = vpop.f32.mrf.mxu0
  %v3319 = vadd.f32 %v137, %v3318
  %3320 = vmatmul.f32.gmra.mxu0 %v295
  %v3321 = vpop.f32.mrf.mxu0
  %v3322 = vadd.f32 %v142, %v3321
  %3323 = vmatmul.f32.gmra.mxu0 %v298
  %v3324 = vpop.f32.mrf.mxu0
  %v3325 = vadd.f32 %v147, %v3324
  %3326 = vmatmul.f32.gmra.mxu0 %v301
  %v3327 = vpop.f32.mrf.mxu0
  %v3328 = vadd.f32 %v152, %v3327
  %3329 = vmatmul.f32.gmra.mxu0 %v304
  %v3330 = vpop.f32.mrf.mxu0
  %v3331 = vadd.f32 %v157, %v3330
  %3332 = vmatmul.f32.gmra.mxu0 %v307
  %v3333 = vpop.f32.mrf.mxu0
  %v3334 = vadd.f32 %v162, %v3333
  %3335 = vmatmul.f32.gmra.mxu0 %v310
  %v3336 = vpop.f32.mrf.mxu0
  %v3337 = vadd.f32 %v167, %v3336
  %3338 = vmatmul.f32.gmra.mxu0 %v313
  %v3339 = vpop.f32.mrf.mxu0
  %v3340 = vadd.f32 %v172, %v3339
  %3341 = vmatmul.f32.gmra.mxu0 %v316
  %v3342 = vpop.f32.mrf.mxu0
  %v3343 = vadd.f32 %v177, %v3342
  %3344 = vmatmul.f32.gmra.mxu0 %v319
  %v3345 = vpop.f32.mrf.mxu0
  %v3346 = vadd.f32 %v182, %v3345
  %3347 = vmatmul.f32.gmra.mxu0 %v322
  %v3348 = vpop.f32.mrf.mxu0
  %v3349 = vadd.f32 %v187, %v3348
  %3350 = vmatmul.f32.gmra.mxu0 %v325
  %v3351 = vpop.f32.mrf.mxu0
  %v3352 = vadd.f32 %v192, %v3351
  %3353 = vmatmul.f32.gmra.mxu0 %v328
  %v3354 = vpop.f32.mrf.mxu0
  %v3355 = vadd.f32 %v197, %v3354
  %3356 = vmatmul.f32.gmra.mxu0 %v331
  %v3357 = vpop.f32.mrf.mxu0
  %v3358 = vadd.f32 %v202, %v3357
  %3359 = vmatmul.f32.gmra.mxu0 %v334
  %v3360 = vpop.f32.mrf.mxu0
  %v3361 = vadd.f32 %v207, %v3360
  %3362 = vmatmul.f32.gmra.mxu0 %v337
  %v3363 = vpop.f32.mrf.mxu0
  %v3364 = vadd.f32 %v212, %v3363
  %3365 = vmatmul.f32.gmra.mxu0 %v340
  %v3366 = vpop.f32.mrf.mxu0
  %v3367 = vadd.f32 %v217, %v3366
  %3368 = vmatmul.f32.gmra.mxu0 %v343
  %v3369 = vpop.f32.mrf.mxu0
  %v3370 = vadd.f32 %v222, %v3369
  %3371 = vmatmul.f32.gmra.mxu0 %v346
  %v3372 = vpop.f32.mrf.mxu0
  %v3373 = vadd.f32 %v227, %v3372
  %3374 = vmatmul.f32.gmra.mxu0 %v349
  %v3375 = vpop.f32.mrf.mxu0
  %v3376 = vadd.f32 %v232, %v3375
  %3377 = vmatmul.f32.gmra.mxu0 %v352
  %v3378 = vpop.f32.mrf.mxu0
  %v3379 = vadd.f32 %v237, %v3378
  %3380 = vmatmul.f32.gmra.mxu0 %v355
  %v3381 = vpop.f32.mrf.mxu0
  %v3382 = vadd.f32 %v242, %v3381
  %3383 = vmatmul.f32.gmra.mxu0 %v358
  %v3384 = vpop.f32.mrf.mxu0
  %v3385 = vadd.f32 %v247, %v3384
  %3386 = vmatmul.f32.gmra.mxu0 %v361
  %v3387 = vpop.f32.mrf.mxu0
  %v3388 = vadd.f32 %v252, %v3387
  %3389 = vmatmul.f32.gmra.mxu0 %v364
  %v3390 = vpop.f32.mrf.mxu0
  %v3391 = vadd.f32 %v257, %v3390
  %3392 = vmatmul.f32.gmra.mxu0 %v367
  %v3393 = vpop.f32.mrf.mxu0
  %v3394 = vadd.f32 %v262, %v3393
  %3395 = vmatmul.f32.gmra.mxu0 %v370
  %v3396 = vpop.f32.mrf.mxu0
  %v3397 = vadd.f32 %v267, %v3396
  %3398 = vmatmul.f32.gmra.mxu0 %v373
  %v3399 = vpop.f32.mrf.mxu0
  %v3400 = vadd.f32 %v272, %v3399
  %3401 = vmatmul.f32.gmra.mxu0 %v376
  %v3402 = vpop.f32.mrf.mxu0
  %v3403 = vadd.f32 %v277, %v3402
  %3404 = vmatmul.f32.gmra.mxu0 %v379
  %v3405 = vpop.f32.mrf.mxu0
  %v3406 = vadd.f32 %v282, %v3405
  %3407 = vdwg.mxu0
  %v3408 = vmax.f32 %v2522, 0.0
  %v3409 = vmax.f32 %v2635, 0.0
  %v3410 = vmax.f32 %v2748, 0.0
  %v3411 = vmax.f32 %v2861, 0.0
  %v3412 = vmax.f32 %v2974, 0.0
  %v3413 = vmax.f32 %v3087, 0.0
  %v3414 = vmax.f32 %v3200, 0.0
  %v3415 = vmax.f32 %v3313, 0.0
  %v3416 = vmax.f32 %v2525, 0.0
  %v3417 = vmax.f32 %v2638, 0.0
  %v3418 = vmax.f32 %v2751, 0.0
  %v3419 = vmax.f32 %v2864, 0.0
  %v3420 = vmax.f32 %v2977, 0.0
  %v3421 = vmax.f32 %v3090, 0.0
  %v3422 = vmax.f32 %v3203, 0.0
  %v3423 = vmax.f32 %v3316, 0.0
  %v3424 = vmax.f32 %v2528, 0.0
  %v3425 = vmax.f32 %v2641, 0.0
  %v3426 = vmax.f32 %v2754, 0.0
  %v3427 = vmax.f32 %v2867, 0.0
  %v3428 = vmax.f32 %v2980, 0.0
  %v3429 = vmax.f32 %v3093, 0.0
  %v3430 = vmax.f32 %v3206, 0.0
  %v3431 = vmax.f32 %v3319, 0.0
  %v3432 = vmax.f32 %v2531, 0.0
  %v3433 = vmax.f32 %v2644, 0.0
  %v3434 = vmax.f32 %v2757, 0.0
  %v3435 = vmax.f32 %v2870, 0.0
  %v3436 = vmax.f32 %v2983, 0.0
  %v3437 = vmax.f32 %v3096, 0.0
  %v3438 = vmax.f32 %v3209, 0.0
  %v3439 = vmax.f32 %v3322, 0.0
  %v3440 = vmax.f32 %v2534, 0.0
  %v3441 = vmax.f32 %v2647, 0.0
  %v3442 = vmax.f32 %v2760, 0.0
  %v3443 = vmax.f32 %v2873, 0.0
  %v3444 = vmax.f32 %v2986, 0.0
  %v3445 = vmax.f32 %v3099, 0.0
  %v3446 = vmax.f32 %v3212, 0.0
  %v3447 = vmax.f32 %v3325, 0.0
  %v3448 = vmax.f32 %v2537, 0.0
  %v3449 = vmax.f32 %v2650, 0.0
  %v3450 = vmax.f32 %v2763, 0.0
  %v3451 = vmax.f32 %v2876, 0.0
  %v3452 = vmax.f32 %v2989, 0.0
  %v3453 = vmax.f32 %v3102, 0.0
  %v3454 = vmax.f32 %v3215, 0.0
  %v3455 = vmax.f32 %v3328, 0.0
  %v3456 = vmax.f32 %v2540, 0.0
  %v3457 = vmax.f32 %v2653, 0.0
  %v3458 = vmax.f32 %v2766, 0.0
  %v3459 = vmax.f32 %v2879, 0.0
  %v3460 = vmax.f32 %v2992, 0.0
  %v3461 = vmax.f32 %v3105, 0.0
  %v3462 = vmax.f32 %v3218, 0.0
  %v3463 = vmax.f32 %v3331, 0.0
  %v3464 = vmax.f32 %v2543, 0.0
  %v3465 = vmax.f32 %v2656, 0.0
  %v3466 = vmax.f32 %v2769, 0.0
  %v3467 = vmax.f32 %v2882, 0.0
  %v3468 = vmax.f32 %v2995, 0.0
  %v3469 = vmax.f32 %v3108, 0.0
  %v3470 = vmax.f32 %v3221, 0.0
  %v3471 = vmax.f32 %v3334, 0.0
  %v3472 = vmax.f32 %v2546, 0.0
  %v3473 = vmax.f32 %v2659, 0.0
  %v3474 = vmax.f32 %v2772, 0.0
  %v3475 = vmax.f32 %v2885, 0.0
  %v3476 = vmax.f32 %v2998, 0.0
  %v3477 = vmax.f32 %v3111, 0.0
  %v3478 = vmax.f32 %v3224, 0.0
  %v3479 = vmax.f32 %v3337, 0.0
  %v3480 = vmax.f32 %v2549, 0.0
  %v3481 = vmax.f32 %v2662, 0.0
  %v3482 = vmax.f32 %v2775, 0.0
  %v3483 = vmax.f32 %v2888, 0.0
  %v3484 = vmax.f32 %v3001, 0.0
  %v3485 = vmax.f32 %v3114, 0.0
  %v3486 = vmax.f32 %v3227, 0.0
  %v3487 = vmax.f32 %v3340, 0.0
  %v3488 = vmax.f32 %v2552, 0.0
  %v3489 = vmax.f32 %v2665, 0.0
  %v3490 = vmax.f32 %v2778, 0.0
  %v3491 = vmax.f32 %v2891, 0.0
  %v3492 = vmax.f32 %v3004, 0.0
  %v3493 = vmax.f32 %v3117, 0.0
  %v3494 = vmax.f32 %v3230, 0.0
  %v3495 = vmax.f32 %v3343, 0.0
  %v3496 = vmax.f32 %v2555, 0.0
  %v3497 = vmax.f32 %v2668, 0.0
  %v3498 = vmax.f32 %v2781, 0.0
  %v3499 = vmax.f32 %v2894, 0.0
  %v3500 = vmax.f32 %v3007, 0.0
  %v3501 = vmax.f32 %v3120, 0.0
  %v3502 = vmax.f32 %v3233, 0.0
  %v3503 = vmax.f32 %v3346, 0.0
  %v3504 = vmax.f32 %v2558, 0.0
  %v3505 = vmax.f32 %v2671, 0.0
  %v3506 = vmax.f32 %v2784, 0.0
  %v3507 = vmax.f32 %v2897, 0.0
  %v3508 = vmax.f32 %v3010, 0.0
  %v3509 = vmax.f32 %v3123, 0.0
  %v3510 = vmax.f32 %v3236, 0.0
  %v3511 = vmax.f32 %v3349, 0.0
  %v3512 = vmax.f32 %v2561, 0.0
  %v3513 = vmax.f32 %v2674, 0.0
  %v3514 = vmax.f32 %v2787, 0.0
  %v3515 = vmax.f32 %v2900, 0.0
  %v3516 = vmax.f32 %v3013, 0.0
  %v3517 = vmax.f32 %v3126, 0.0
  %v3518 = vmax.f32 %v3239, 0.0
  %v3519 = vmax.f32 %v3352, 0.0
  %v3520 = vmax.f32 %v2564, 0.0
  %v3521 = vmax.f32 %v2677, 0.0
  %v3522 = vmax.f32 %v2790, 0.0
  %v3523 = vmax.f32 %v2903, 0.0
  %v3524 = vmax.f32 %v3016, 0.0
  %v3525 = vmax.f32 %v3129, 0.0
  %v3526 = vmax.f32 %v3242, 0.0
  %v3527 = vmax.f32 %v3355, 0.0
  %v3528 = vmax.f32 %v2567, 0.0
  %v3529 = vmax.f32 %v2680, 0.0
  %v3530 = vmax.f32 %v2793, 0.0
  %v3531 = vmax.f32 %v2906, 0.0
  %v3532 = vmax.f32 %v3019, 0.0
  %v3533 = vmax.f32 %v3132, 0.0
  %v3534 = vmax.f32 %v3245, 0.0
  %v3535 = vmax.f32 %v3358, 0.0
  %v3536 = vmax.f32 %v2570, 0.0
  %v3537 = vmax.f32 %v2683, 0.0
  %v3538 = vmax.f32 %v2796, 0.0
  %v3539 = vmax.f32 %v2909, 0.0
  %v3540 = vmax.f32 %v3022, 0.0
  %v3541 = vmax.f32 %v3135, 0.0
  %v3542 = vmax.f32 %v3248, 0.0
  %v3543 = vmax.f32 %v3361, 0.0
  %v3544 = vmax.f32 %v2573, 0.0
  %v3545 = vmax.f32 %v2686, 0.0
  %v3546 = vmax.f32 %v2799, 0.0
  %v3547 = vmax.f32 %v2912, 0.0
  %v3548 = vmax.f32 %v3025, 0.0
  %v3549 = vmax.f32 %v3138, 0.0
  %v3550 = vmax.f32 %v3251, 0.0
  %v3551 = vmax.f32 %v3364, 0.0
  %v3552 = vmax.f32 %v2576, 0.0
  %v3553 = vmax.f32 %v2689, 0.0
  %v3554 = vmax.f32 %v2802, 0.0
  %v3555 = vmax.f32 %v2915, 0.0
  %v3556 = vmax.f32 %v3028, 0.0
  %v3557 = vmax.f32 %v3141, 0.0
  %v3558 = vmax.f32 %v3254, 0.0
  %v3559 = vmax.f32 %v3367, 0.0
  %v3560 = vmax.f32 %v2579, 0.0
  %v3561 = vmax.f32 %v2692, 0.0
  %v3562 = vmax.f32 %v2805, 0.0
  %v3563 = vmax.f32 %v2918, 0.0
  %v3564 = vmax.f32 %v3031, 0.0
  %v3565 = vmax.f32 %v3144, 0.0
  %v3566 = vmax.f32 %v3257, 0.0
  %v3567 = vmax.f32 %v3370, 0.0
  %v3568 = vmax.f32 %v2582, 0.0
  %v3569 = vmax.f32 %v2695, 0.0
  %v3570 = vmax.f32 %v2808, 0.0
  %v3571 = vmax.f32 %v2921, 0.0
  %v3572 = vmax.f32 %v3034, 0.0
  %v3573 = vmax.f32 %v3147, 0.0
  %v3574 = vmax.f32 %v3260, 0.0
  %v3575 = vmax.f32 %v3373, 0.0
  %v3576 = vmax.f32 %v2585, 0.0
  %v3577 = vmax.f32 %v2698, 0.0
  %v3578 = vmax.f32 %v2811, 0.0
  %v3579 = vmax.f32 %v2924, 0.0
  %v3580 = vmax.f32 %v3037, 0.0
  %v3581 = vmax.f32 %v3150, 0.0
  %v3582 = vmax.f32 %v3263, 0.0
  %v3583 = vmax.f32 %v3376, 0.0
  %v3584 = vmax.f32 %v2588, 0.0
  %v3585 = vmax.f32 %v2701, 0.0
  %v3586 = vmax.f32 %v2814, 0.0
  %v3587 = vmax.f32 %v2927, 0.0
  %v3588 = vmax.f32 %v3040, 0.0
  %v3589 = vmax.f32 %v3153, 0.0
  %v3590 = vmax.f32 %v3266, 0.0
  %v3591 = vmax.f32 %v3379, 0.0
  %v3592 = vmax.f32 %v2591, 0.0
  %v3593 = vmax.f32 %v2704, 0.0
  %v3594 = vmax.f32 %v2817, 0.0
  %v3595 = vmax.f32 %v2930, 0.0
  %v3596 = vmax.f32 %v3043, 0.0
  %v3597 = vmax.f32 %v3156, 0.0
  %v3598 = vmax.f32 %v3269, 0.0
  %v3599 = vmax.f32 %v3382, 0.0
  %v3600 = vmax.f32 %v2594, 0.0
  %v3601 = vmax.f32 %v2707, 0.0
  %v3602 = vmax.f32 %v2820, 0.0
  %v3603 = vmax.f32 %v2933, 0.0
  %v3604 = vmax.f32 %v3046, 0.0
  %v3605 = vmax.f32 %v3159, 0.0
  %v3606 = vmax.f32 %v3272, 0.0
  %v3607 = vmax.f32 %v3385, 0.0
  %v3608 = vmax.f32 %v2597, 0.0
  %v3609 = vmax.f32 %v2710, 0.0
  %v3610 = vmax.f32 %v2823, 0.0
  %v3611 = vmax.f32 %v2936, 0.0
  %v3612 = vmax.f32 %v3049, 0.0
  %v3613 = vmax.f32 %v3162, 0.0
  %v3614 = vmax.f32 %v3275, 0.0
  %v3615 = vmax.f32 %v3388, 0.0
  %v3616 = vmax.f32 %v2600, 0.0
  %v3617 = vmax.f32 %v2713, 0.0
  %v3618 = vmax.f32 %v2826, 0.0
  %v3619 = vmax.f32 %v2939, 0.0
  %v3620 = vmax.f32 %v3052, 0.0
  %v3621 = vmax.f32 %v3165, 0.0
  %v3622 = vmax.f32 %v3278, 0.0
  %v3623 = vmax.f32 %v3391, 0.0
  %v3624 = vmax.f32 %v2603, 0.0
  %v3625 = vmax.f32 %v2716, 0.0
  %v3626 = vmax.f32 %v2829, 0.0
  %v3627 = vmax.f32 %v2942, 0.0
  %v3628 = vmax.f32 %v3055, 0.0
  %v3629 = vmax.f32 %v3168, 0.0
  %v3630 = vmax.f32 %v3281, 0.0
  %v3631 = vmax.f32 %v3394, 0.0
  %v3632 = vmax.f32 %v2606, 0.0
  %v3633 = vmax.f32 %v2719, 0.0
  %v3634 = vmax.f32 %v2832, 0.0
  %v3635 = vmax.f32 %v2945, 0.0
  %v3636 = vmax.f32 %v3058, 0.0
  %v3637 = vmax.f32 %v3171, 0.0
  %v3638 = vmax.f32 %v3284, 0.0
  %v3639 = vmax.f32 %v3397, 0.0
  %v3640 = vmax.f32 %v2609, 0.0
  %v3641 = vmax.f32 %v2722, 0.0
  %v3642 = vmax.f32 %v2835, 0.0
  %v3643 = vmax.f32 %v2948, 0.0
  %v3644 = vmax.f32 %v3061, 0.0
  %v3645 = vmax.f32 %v3174, 0.0
  %v3646 = vmax.f32 %v3287, 0.0
  %v3647 = vmax.f32 %v3400, 0.0
  %v3648 = vmax.f32 %v2612, 0.0
  %v3649 = vmax.f32 %v2725, 0.0
  %v3650 = vmax.f32 %v2838, 0.0
  %v3651 = vmax.f32 %v2951, 0.0
  %v3652 = vmax.f32 %v3064, 0.0
  %v3653 = vmax.f32 %v3177, 0.0
  %v3654 = vmax.f32 %v3290, 0.0
  %v3655 = vmax.f32 %v3403, 0.0
  %v3656 = vmax.f32 %v2615, 0.0
  %v3657 = vmax.f32 %v2728, 0.0
  %v3658 = vmax.f32 %v2841, 0.0
  %v3659 = vmax.f32 %v2954, 0.0
  %v3660 = vmax.f32 %v3067, 0.0
  %v3661 = vmax.f32 %v3180, 0.0
  %v3662 = vmax.f32 %v3293, 0.0
  %v3663 = vmax.f32 %v3406, 0.0
  %3664 = vmatpush.msra.mxu0 %v3528
  %3665 = vmatpush.msra.mxu0 %v3520
  %3666 = vmatpush.msra.mxu0 %v3512
  %3667 = vmatpush.msra.mxu0 %v3504
  %3668 = vmatpush.msra.mxu0 %v3496
  %3669 = vmatpush.msra.mxu0 %v3488
  %3670 = vmatpush.msra.mxu0 %v3480
  %3671 = vmatpush.msra.mxu0 %v3472
  %3672 = vmatpush.msra.mxu0 %v3464
  %3673 = vmatpush.msra.mxu0 %v3456
  %3674 = vmatpush.msra.mxu0 %v3448
  %3675 = vmatpush.msra.mxu0 %v3440
  %3676 = vmatpush.msra.mxu0 %v3432
  %3677 = vmatpush.msra.mxu0 %v3424
  %3678 = vmatpush.msra.mxu0 %v3416
  %3679 = vmatpush.msra.mxu0 %v3408
  %3680 = vmatmul.f32.gmra.mxu0 %v90
  %v3681 = vpop.f32.mrf.mxu0
  %v3682 = vadd.f32 %v1544, %v3681
  %3683 = vmatmul.f32.gmra.mxu0 %v92
  %v3684 = vpop.f32.mrf.mxu0
  %v3685 = vadd.f32 %v1549, %v3684
  %3686 = vmatmul.f32.gmra.mxu0 %v94
  %v3687 = vpop.f32.mrf.mxu0
  %v3688 = vadd.f32 %v1554, %v3687
  %3689 = vmatmul.f32.gmra.mxu0 %v96
  %v3690 = vpop.f32.mrf.mxu0
  %v3691 = vadd.f32 %v1559, %v3690
  %3692 = vmatmul.f32.gmra.mxu0 %v98
  %v3693 = vpop.f32.mrf.mxu0
  %v3694 = vadd.f32 %v1564, %v3693
  %3695 = vmatmul.f32.gmra.mxu0 %v100
  %v3696 = vpop.f32.mrf.mxu0
  %v3697 = vadd.f32 %v1569, %v3696
  %3698 = vmatmul.f32.gmra.mxu0 %v102
  %v3699 = vpop.f32.mrf.mxu0
  %v3700 = vadd.f32 %v1574, %v3699
  %3701 = vmatmul.f32.gmra.mxu0 %v104
  %v3702 = vpop.f32.mrf.mxu0
  %v3703 = vadd.f32 %v1579, %v3702
  %3704 = vdwg.mxu0
  %3705 = vmatpush.msra.mxu0 %v3656
  %3706 = vmatpush.msra.mxu0 %v3648
  %3707 = vmatpush.msra.mxu0 %v3640
  %3708 = vmatpush.msra.mxu0 %v3632
  %3709 = vmatpush.msra.mxu0 %v3624
  %3710 = vmatpush.msra.mxu0 %v3616
  %3711 = vmatpush.msra.mxu0 %v3608
  %3712 = vmatpush.msra.mxu0 %v3600
  %3713 = vmatpush.msra.mxu0 %v3592
  %3714 = vmatpush.msra.mxu0 %v3584
  %3715 = vmatpush.msra.mxu0 %v3576
  %3716 = vmatpush.msra.mxu0 %v3568
  %3717 = vmatpush.msra.mxu0 %v3560
  %3718 = vmatpush.msra.mxu0 %v3552
  %3719 = vmatpush.msra.mxu0 %v3544
  %3720 = vmatpush.msra.mxu0 %v3536
  %3721 = vmatmul.f32.gmra.mxu0 %v91
  %v3722 = vpop.f32.mrf.mxu0
  %v3723 = vadd.f32 %v3682, %v3722
  %3724 = vmatmul.f32.gmra.mxu0 %v93
  %v3725 = vpop.f32.mrf.mxu0
  %v3726 = vadd.f32 %v3685, %v3725
  %3727 = vmatmul.f32.gmra.mxu0 %v95
  %v3728 = vpop.f32.mrf.mxu0
  %v3729 = vadd.f32 %v3688, %v3728
  %3730 = vmatmul.f32.gmra.mxu0 %v97
  %v3731 = vpop.f32.mrf.mxu0
  %v3732 = vadd.f32 %v3691, %v3731
  %3733 = vmatmul.f32.gmra.mxu0 %v99
  %v3734 = vpop.f32.mrf.mxu0
  %v3735 = vadd.f32 %v3694, %v3734
  %3736 = vmatmul.f32.gmra.mxu0 %v101
  %v3737 = vpop.f32.mrf.mxu0
  %v3738 = vadd.f32 %v3697, %v3737
  %3739 = vmatmul.f32.gmra.mxu0 %v103
  %v3740 = vpop.f32.mrf.mxu0
  %v3741 = vadd.f32 %v3700, %v3740
  %3742 = vmatmul.f32.gmra.mxu0 %v105
  %v3743 = vpop.f32.mrf.mxu0
  %v3744 = vadd.f32 %v3703, %v3743
  %3745 = vdwg.mxu0
  %3746 = vmatpush.msra.mxu0 %v3529
  %3747 = vmatpush.msra.mxu0 %v3521
  %3748 = vmatpush.msra.mxu0 %v3513
  %3749 = vmatpush.msra.mxu0 %v3505
  %3750 = vmatpush.msra.mxu0 %v3497
  %3751 = vmatpush.msra.mxu0 %v3489
  %3752 = vmatpush.msra.mxu0 %v3481
  %3753 = vmatpush.msra.mxu0 %v3473
  %3754 = vmatpush.msra.mxu0 %v3465
  %3755 = vmatpush.msra.mxu0 %v3457
  %3756 = vmatpush.msra.mxu0 %v3449
  %3757 = vmatpush.msra.mxu0 %v3441
  %3758 = vmatpush.msra.mxu0 %v3433
  %3759 = vmatpush.msra.mxu0 %v3425
  %3760 = vmatpush.msra.mxu0 %v3417
  %3761 = vmatpush.msra.mxu0 %v3409
  %3762 = vmatmul.f32.gmra.mxu0 %v90
  %v3763 = vpop.f32.mrf.mxu0
  %v3764 = vadd.f32 %v1544, %v3763
  %3765 = vmatmul.f32.gmra.mxu0 %v92
  %v3766 = vpop.f32.mrf.mxu0
  %v3767 = vadd.f32 %v1549, %v3766
  %3768 = vmatmul.f32.gmra.mxu0 %v94
  %v3769 = vpop.f32.mrf.mxu0
  %v3770 = vadd.f32 %v1554, %v3769
  %3771 = vmatmul.f32.gmra.mxu0 %v96
  %v3772 = vpop.f32.mrf.mxu0
  %v3773 = vadd.f32 %v1559, %v3772
  %3774 = vmatmul.f32.gmra.mxu0 %v98
  %v3775 = vpop.f32.mrf.mxu0
  %v3776 = vadd.f32 %v1564, %v3775
  %3777 = vmatmul.f32.gmra.mxu0 %v100
  %v3778 = vpop.f32.mrf.mxu0
  %v3779 = vadd.f32 %v1569, %v3778
  %3780 = vmatmul.f32.gmra.mxu0 %v102
  %v3781 = vpop.f32.mrf.mxu0
  %v3782 = vadd.f32 %v1574, %v3781
  %3783 = vmatmul.f32.gmra.mxu0 %v104
  %v3784 = vpop.f32.mrf.mxu0
  %v3785 = vadd.f32 %v1579, %v3784
  %3786 = vdwg.mxu0
  %3787 = vmatpush.msra.mxu0 %v3657
  %3788 = vmatpush.msra.mxu0 %v3649
  %3789 = vmatpush.msra.mxu0 %v3641
  %3790 = vmatpush.msra.mxu0 %v3633
  %3791 = vmatpush.msra.mxu0 %v3625
  %3792 = vmatpush.msra.mxu0 %v3617
  %3793 = vmatpush.msra.mxu0 %v3609
  %3794 = vmatpush.msra.mxu0 %v3601
  %3795 = vmatpush.msra.mxu0 %v3593
  %3796 = vmatpush.msra.mxu0 %v3585
  %3797 = vmatpush.msra.mxu0 %v3577
  %3798 = vmatpush.msra.mxu0 %v3569
  %3799 = vmatpush.msra.mxu0 %v3561
  %3800 = vmatpush.msra.mxu0 %v3553
  %3801 = vmatpush.msra.mxu0 %v3545
  %3802 = vmatpush.msra.mxu0 %v3537
  %3803 = vmatmul.f32.gmra.mxu0 %v91
  %v3804 = vpop.f32.mrf.mxu0
  %v3805 = vadd.f32 %v3764, %v3804
  %3806 = vmatmul.f32.gmra.mxu0 %v93
  %v3807 = vpop.f32.mrf.mxu0
  %v3808 = vadd.f32 %v3767, %v3807
  %3809 = vmatmul.f32.gmra.mxu0 %v95
  %v3810 = vpop.f32.mrf.mxu0
  %v3811 = vadd.f32 %v3770, %v3810
  %3812 = vmatmul.f32.gmra.mxu0 %v97
  %v3813 = vpop.f32.mrf.mxu0
  %v3814 = vadd.f32 %v3773, %v3813
  %3815 = vmatmul.f32.gmra.mxu0 %v99
  %v3816 = vpop.f32.mrf.mxu0
  %v3817 = vadd.f32 %v3776, %v3816
  %3818 = vmatmul.f32.gmra.mxu0 %v101
  %v3819 = vpop.f32.mrf.mxu0
  %v3820 = vadd.f32 %v3779, %v3819
  %3821 = vmatmul.f32.gmra.mxu0 %v103
  %v3822 = vpop.f32.mrf.mxu0
  %v3823 = vadd.f32 %v3782, %v3822
  %3824 = vmatmul.f32.gmra.mxu0 %v105
  %v3825 = vpop.f32.mrf.mxu0
  %v3826 = vadd.f32 %v3785, %v3825
  %3827 = vdwg.mxu0
  %3828 = vmatpush.msra.mxu0 %v3530
  %3829 = vmatpush.msra.mxu0 %v3522
  %3830 = vmatpush.msra.mxu0 %v3514
  %3831 = vmatpush.msra.mxu0 %v3506
  %3832 = vmatpush.msra.mxu0 %v3498
  %3833 = vmatpush.msra.mxu0 %v3490
  %3834 = vmatpush.msra.mxu0 %v3482
  %3835 = vmatpush.msra.mxu0 %v3474
  %3836 = vmatpush.msra.mxu0 %v3466
  %3837 = vmatpush.msra.mxu0 %v3458
  %3838 = vmatpush.msra.mxu0 %v3450
  %3839 = vmatpush.msra.mxu0 %v3442
  %3840 = vmatpush.msra.mxu0 %v3434
  %3841 = vmatpush.msra.mxu0 %v3426
  %3842 = vmatpush.msra.mxu0 %v3418
  %3843 = vmatpush.msra.mxu0 %v3410
  %3844 = vmatmul.f32.gmra.mxu0 %v90
  %v3845 = vpop.f32.mrf.mxu0
  %v3846 = vadd.f32 %v1544, %v3845
  %3847 = vmatmul.f32.gmra.mxu0 %v92
  %v3848 = vpop.f32.mrf.mxu0
  %v3849 = vadd.f32 %v1549, %v3848
  %3850 = vmatmul.f32.gmra.mxu0 %v94
  %v3851 = vpop.f32.mrf.mxu0
  %v3852 = vadd.f32 %v1554, %v3851
  %3853 = vmatmul.f32.gmra.mxu0 %v96
  %v3854 = vpop.f32.mrf.mxu0
  %v3855 = vadd.f32 %v1559, %v3854
  %3856 = vmatmul.f32.gmra.mxu0 %v98
  %v3857 = vpop.f32.mrf.mxu0
  %v3858 = vadd.f32 %v1564, %v3857
  %3859 = vmatmul.f32.gmra.mxu0 %v100
  %v3860 = vpop.f32.mrf.mxu0
  %v3861 = vadd.f32 %v1569, %v3860
  %3862 = vmatmul.f32.gmra.mxu0 %v102
  %v3863 = vpop.f32.mrf.mxu0
  %v3864 = vadd.f32 %v1574, %v3863
  %3865 = vmatmul.f32.gmra.mxu0 %v104
  %v3866 = vpop.f32.mrf.mxu0
  %v3867 = vadd.f32 %v1579, %v3866
  %3868 = vdwg.mxu0
  %3869 = vmatpush.msra.mxu0 %v3658
  %3870 = vmatpush.msra.mxu0 %v3650
  %3871 = vmatpush.msra.mxu0 %v3642
  %3872 = vmatpush.msra.mxu0 %v3634
  %3873 = vmatpush.msra.mxu0 %v3626
  %3874 = vmatpush.msra.mxu0 %v3618
  %3875 = vmatpush.msra.mxu0 %v3610
  %3876 = vmatpush.msra.mxu0 %v3602
  %3877 = vmatpush.msra.mxu0 %v3594
  %3878 = vmatpush.msra.mxu0 %v3586
  %3879 = vmatpush.msra.mxu0 %v3578
  %3880 = vmatpush.msra.mxu0 %v3570
  %3881 = vmatpush.msra.mxu0 %v3562
  %3882 = vmatpush.msra.mxu0 %v3554
  %3883 = vmatpush.msra.mxu0 %v3546
  %3884 = vmatpush.msra.mxu0 %v3538
  %3885 = vmatmul.f32.gmra.mxu0 %v91
  %v3886 = vpop.f32.mrf.mxu0
  %v3887 = vadd.f32 %v3846, %v3886
  %3888 = vmatmul.f32.gmra.mxu0 %v93
  %v3889 = vpop.f32.mrf.mxu0
  %v3890 = vadd.f32 %v3849, %v3889
  %3891 = vmatmul.f32.gmra.mxu0 %v95
  %v3892 = vpop.f32.mrf.mxu0
  %v3893 = vadd.f32 %v3852, %v3892
  %3894 = vmatmul.f32.gmra.mxu0 %v97
  %v3895 = vpop.f32.mrf.mxu0
  %v3896 = vadd.f32 %v3855, %v3895
  %3897 = vmatmul.f32.gmra.mxu0 %v99
  %v3898 = vpop.f32.mrf.mxu0
  %v3899 = vadd.f32 %v3858, %v3898
  %3900 = vmatmul.f32.gmra.mxu0 %v101
  %v3901 = vpop.f32.mrf.mxu0
  %v3902 = vadd.f32 %v3861, %v3901
  %3903 = vmatmul.f32.gmra.mxu0 %v103
  %v3904 = vpop.f32.mrf.mxu0
  %v3905 = vadd.f32 %v3864, %v3904
  %3906 = vmatmul.f32.gmra.mxu0 %v105
  %v3907 = vpop.f32.mrf.mxu0
  %v3908 = vadd.f32 %v3867, %v3907
  %3909 = vdwg.mxu0
  %3910 = vmatpush.msra.mxu0 %v3531
  %3911 = vmatpush.msra.mxu0 %v3523
  %3912 = vmatpush.msra.mxu0 %v3515
  %3913 = vmatpush.msra.mxu0 %v3507
  %3914 = vmatpush.msra.mxu0 %v3499
  %3915 = vmatpush.msra.mxu0 %v3491
  %3916 = vmatpush.msra.mxu0 %v3483
  %3917 = vmatpush.msra.mxu0 %v3475
  %3918 = vmatpush.msra.mxu0 %v3467
  %3919 = vmatpush.msra.mxu0 %v3459
  %3920 = vmatpush.msra.mxu0 %v3451
  %3921 = vmatpush.msra.mxu0 %v3443
  %3922 = vmatpush.msra.mxu0 %v3435
  %3923 = vmatpush.msra.mxu0 %v3427
  %3924 = vmatpush.msra.mxu0 %v3419
  %3925 = vmatpush.msra.mxu0 %v3411
  %3926 = vmatmul.f32.gmra.mxu0 %v90
  %v3927 = vpop.f32.mrf.mxu0
  %v3928 = vadd.f32 %v1544, %v3927
  %3929 = vmatmul.f32.gmra.mxu0 %v92
  %v3930 = vpop.f32.mrf.mxu0
  %v3931 = vadd.f32 %v1549, %v3930
  %3932 = vmatmul.f32.gmra.mxu0 %v94
  %v3933 = vpop.f32.mrf.mxu0
  %v3934 = vadd.f32 %v1554, %v3933
  %3935 = vmatmul.f32.gmra.mxu0 %v96
  %v3936 = vpop.f32.mrf.mxu0
  %v3937 = vadd.f32 %v1559, %v3936
  %3938 = vmatmul.f32.gmra.mxu0 %v98
  %v3939 = vpop.f32.mrf.mxu0
  %v3940 = vadd.f32 %v1564, %v3939
  %3941 = vmatmul.f32.gmra.mxu0 %v100
  %v3942 = vpop.f32.mrf.mxu0
  %v3943 = vadd.f32 %v1569, %v3942
  %3944 = vmatmul.f32.gmra.mxu0 %v102
  %v3945 = vpop.f32.mrf.mxu0
  %v3946 = vadd.f32 %v1574, %v3945
  %3947 = vmatmul.f32.gmra.mxu0 %v104
  %v3948 = vpop.f32.mrf.mxu0
  %v3949 = vadd.f32 %v1579, %v3948
  %3950 = vdwg.mxu0
  %3951 = vmatpush.msra.mxu0 %v3659
  %3952 = vmatpush.msra.mxu0 %v3651
  %3953 = vmatpush.msra.mxu0 %v3643
  %3954 = vmatpush.msra.mxu0 %v3635
  %3955 = vmatpush.msra.mxu0 %v3627
  %3956 = vmatpush.msra.mxu0 %v3619
  %3957 = vmatpush.msra.mxu0 %v3611
  %3958 = vmatpush.msra.mxu0 %v3603
  %3959 = vmatpush.msra.mxu0 %v3595
  %3960 = vmatpush.msra.mxu0 %v3587
  %3961 = vmatpush.msra.mxu0 %v3579
  %3962 = vmatpush.msra.mxu0 %v3571
  %3963 = vmatpush.msra.mxu0 %v3563
  %3964 = vmatpush.msra.mxu0 %v3555
  %3965 = vmatpush.msra.mxu0 %v3547
  %3966 = vmatpush.msra.mxu0 %v3539
  %3967 = vmatmul.f32.gmra.mxu0 %v91
  %v3968 = vpop.f32.mrf.mxu0
  %v3969 = vadd.f32 %v3928, %v3968
  %3970 = vmatmul.f32.gmra.mxu0 %v93
  %v3971 = vpop.f32.mrf.mxu0
  %v3972 = vadd.f32 %v3931, %v3971
  %3973 = vmatmul.f32.gmra.mxu0 %v95
  %v3974 = vpop.f32.mrf.mxu0
  %v3975 = vadd.f32 %v3934, %v3974
  %3976 = vmatmul.f32.gmra.mxu0 %v97
  %v3977 = vpop.f32.mrf.mxu0
  %v3978 = vadd.f32 %v3937, %v3977
  %3979 = vmatmul.f32.gmra.mxu0 %v99
  %v3980 = vpop.f32.mrf.mxu0
  %v3981 = vadd.f32 %v3940, %v3980
  %3982 = vmatmul.f32.gmra.mxu0 %v101
  %v3983 = vpop.f32.mrf.mxu0
  %v3984 = vadd.f32 %v3943, %v3983
  %3985 = vmatmul.f32.gmra.mxu0 %v103
  %v3986 = vpop.f32.mrf.mxu0
  %v3987 = vadd.f32 %v3946, %v3986
  %3988 = vmatmul.f32.gmra.mxu0 %v105
  %v3989 = vpop.f32.mrf.mxu0
  %v3990 = vadd.f32 %v3949, %v3989
  %3991 = vdwg.mxu0
  %3992 = vmatpush.msra.mxu0 %v3532
  %3993 = vmatpush.msra.mxu0 %v3524
  %3994 = vmatpush.msra.mxu0 %v3516
  %3995 = vmatpush.msra.mxu0 %v3508
  %3996 = vmatpush.msra.mxu0 %v3500
  %3997 = vmatpush.msra.mxu0 %v3492
  %3998 = vmatpush.msra.mxu0 %v3484
  %3999 = vmatpush.msra.mxu0 %v3476
  %4000 = vmatpush.msra.mxu0 %v3468
  %4001 = vmatpush.msra.mxu0 %v3460
  %4002 = vmatpush.msra.mxu0 %v3452
  %4003 = vmatpush.msra.mxu0 %v3444
  %4004 = vmatpush.msra.mxu0 %v3436
  %4005 = vmatpush.msra.mxu0 %v3428
  %4006 = vmatpush.msra.mxu0 %v3420
  %4007 = vmatpush.msra.mxu0 %v3412
  %4008 = vmatmul.f32.gmra.mxu0 %v90
  %v4009 = vpop.f32.mrf.mxu0
  %v4010 = vadd.f32 %v1544, %v4009
  %4011 = vmatmul.f32.gmra.mxu0 %v92
  %v4012 = vpop.f32.mrf.mxu0
  %v4013 = vadd.f32 %v1549, %v4012
  %4014 = vmatmul.f32.gmra.mxu0 %v94
  %v4015 = vpop.f32.mrf.mxu0
  %v4016 = vadd.f32 %v1554, %v4015
  %4017 = vmatmul.f32.gmra.mxu0 %v96
  %v4018 = vpop.f32.mrf.mxu0
  %v4019 = vadd.f32 %v1559, %v4018
  %4020 = vmatmul.f32.gmra.mxu0 %v98
  %v4021 = vpop.f32.mrf.mxu0
  %v4022 = vadd.f32 %v1564, %v4021
  %4023 = vmatmul.f32.gmra.mxu0 %v100
  %v4024 = vpop.f32.mrf.mxu0
  %v4025 = vadd.f32 %v1569, %v4024
  %4026 = vmatmul.f32.gmra.mxu0 %v102
  %v4027 = vpop.f32.mrf.mxu0
  %v4028 = vadd.f32 %v1574, %v4027
  %4029 = vmatmul.f32.gmra.mxu0 %v104
  %v4030 = vpop.f32.mrf.mxu0
  %v4031 = vadd.f32 %v1579, %v4030
  %4032 = vdwg.mxu0
  %4033 = vmatpush.msra.mxu0 %v3660
  %4034 = vmatpush.msra.mxu0 %v3652
  %4035 = vmatpush.msra.mxu0 %v3644
  %4036 = vmatpush.msra.mxu0 %v3636
  %4037 = vmatpush.msra.mxu0 %v3628
  %4038 = vmatpush.msra.mxu0 %v3620
  %4039 = vmatpush.msra.mxu0 %v3612
  %4040 = vmatpush.msra.mxu0 %v3604
  %4041 = vmatpush.msra.mxu0 %v3596
  %4042 = vmatpush.msra.mxu0 %v3588
  %4043 = vmatpush.msra.mxu0 %v3580
  %4044 = vmatpush.msra.mxu0 %v3572
  %4045 = vmatpush.msra.mxu0 %v3564
  %4046 = vmatpush.msra.mxu0 %v3556
  %4047 = vmatpush.msra.mxu0 %v3548
  %4048 = vmatpush.msra.mxu0 %v3540
  %4049 = vmatmul.f32.gmra.mxu0 %v91
  %v4050 = vpop.f32.mrf.mxu0
  %v4051 = vadd.f32 %v4010, %v4050
  %4052 = vmatmul.f32.gmra.mxu0 %v93
  %v4053 = vpop.f32.mrf.mxu0
  %v4054 = vadd.f32 %v4013, %v4053
  %4055 = vmatmul.f32.gmra.mxu0 %v95
  %v4056 = vpop.f32.mrf.mxu0
  %v4057 = vadd.f32 %v4016, %v4056
  %4058 = vmatmul.f32.gmra.mxu0 %v97
  %v4059 = vpop.f32.mrf.mxu0
  %v4060 = vadd.f32 %v4019, %v4059
  %4061 = vmatmul.f32.gmra.mxu0 %v99
  %v4062 = vpop.f32.mrf.mxu0
  %v4063 = vadd.f32 %v4022, %v4062
  %4064 = vmatmul.f32.gmra.mxu0 %v101
  %v4065 = vpop.f32.mrf.mxu0
  %v4066 = vadd.f32 %v4025, %v4065
  %4067 = vmatmul.f32.gmra.mxu0 %v103
  %v4068 = vpop.f32.mrf.mxu0
  %v4069 = vadd.f32 %v4028, %v4068
  %4070 = vmatmul.f32.gmra.mxu0 %v105
  %v4071 = vpop.f32.mrf.mxu0
  %v4072 = vadd.f32 %v4031, %v4071
  %4073 = vdwg.mxu0
  %4074 = vmatpush.msra.mxu0 %v3533
  %4075 = vmatpush.msra.mxu0 %v3525
  %4076 = vmatpush.msra.mxu0 %v3517
  %4077 = vmatpush.msra.mxu0 %v3509
  %4078 = vmatpush.msra.mxu0 %v3501
  %4079 = vmatpush.msra.mxu0 %v3493
  %4080 = vmatpush.msra.mxu0 %v3485
  %4081 = vmatpush.msra.mxu0 %v3477
  %4082 = vmatpush.msra.mxu0 %v3469
  %4083 = vmatpush.msra.mxu0 %v3461
  %4084 = vmatpush.msra.mxu0 %v3453
  %4085 = vmatpush.msra.mxu0 %v3445
  %4086 = vmatpush.msra.mxu0 %v3437
  %4087 = vmatpush.msra.mxu0 %v3429
  %4088 = vmatpush.msra.mxu0 %v3421
  %4089 = vmatpush.msra.mxu0 %v3413
  %4090 = vmatmul.f32.gmra.mxu0 %v90
  %v4091 = vpop.f32.mrf.mxu0
  %v4092 = vadd.f32 %v1544, %v4091
  %4093 = vmatmul.f32.gmra.mxu0 %v92
  %v4094 = vpop.f32.mrf.mxu0
  %v4095 = vadd.f32 %v1549, %v4094
  %4096 = vmatmul.f32.gmra.mxu0 %v94
  %v4097 = vpop.f32.mrf.mxu0
  %v4098 = vadd.f32 %v1554, %v4097
  %4099 = vmatmul.f32.gmra.mxu0 %v96
  %v4100 = vpop.f32.mrf.mxu0
  %v4101 = vadd.f32 %v1559, %v4100
  %4102 = vmatmul.f32.gmra.mxu0 %v98
  %v4103 = vpop.f32.mrf.mxu0
  %v4104 = vadd.f32 %v1564, %v4103
  %4105 = vmatmul.f32.gmra.mxu0 %v100
  %v4106 = vpop.f32.mrf.mxu0
  %v4107 = vadd.f32 %v1569, %v4106
  %4108 = vmatmul.f32.gmra.mxu0 %v102
  %v4109 = vpop.f32.mrf.mxu0
  %v4110 = vadd.f32 %v1574, %v4109
  %4111 = vmatmul.f32.gmra.mxu0 %v104
  %v4112 = vpop.f32.mrf.mxu0
  %v4113 = vadd.f32 %v1579, %v4112
  %4114 = vdwg.mxu0
  %4115 = vmatpush.msra.mxu0 %v3661
  %4116 = vmatpush.msra.mxu0 %v3653
  %4117 = vmatpush.msra.mxu0 %v3645
  %4118 = vmatpush.msra.mxu0 %v3637
  %4119 = vmatpush.msra.mxu0 %v3629
  %4120 = vmatpush.msra.mxu0 %v3621
  %4121 = vmatpush.msra.mxu0 %v3613
  %4122 = vmatpush.msra.mxu0 %v3605
  %4123 = vmatpush.msra.mxu0 %v3597
  %4124 = vmatpush.msra.mxu0 %v3589
  %4125 = vmatpush.msra.mxu0 %v3581
  %4126 = vmatpush.msra.mxu0 %v3573
  %4127 = vmatpush.msra.mxu0 %v3565
  %4128 = vmatpush.msra.mxu0 %v3557
  %4129 = vmatpush.msra.mxu0 %v3549
  %4130 = vmatpush.msra.mxu0 %v3541
  %4131 = vmatmul.f32.gmra.mxu0 %v91
  %v4132 = vpop.f32.mrf.mxu0
  %v4133 = vadd.f32 %v4092, %v4132
  %4134 = vmatmul.f32.gmra.mxu0 %v93
  %v4135 = vpop.f32.mrf.mxu0
  %v4136 = vadd.f32 %v4095, %v4135
  %4137 = vmatmul.f32.gmra.mxu0 %v95
  %v4138 = vpop.f32.mrf.mxu0
  %v4139 = vadd.f32 %v4098, %v4138
  %4140 = vmatmul.f32.gmra.mxu0 %v97
  %v4141 = vpop.f32.mrf.mxu0
  %v4142 = vadd.f32 %v4101, %v4141
  %4143 = vmatmul.f32.gmra.mxu0 %v99
  %v4144 = vpop.f32.mrf.mxu0
  %v4145 = vadd.f32 %v4104, %v4144
  %4146 = vmatmul.f32.gmra.mxu0 %v101
  %v4147 = vpop.f32.mrf.mxu0
  %v4148 = vadd.f32 %v4107, %v4147
  %4149 = vmatmul.f32.gmra.mxu0 %v103
  %v4150 = vpop.f32.mrf.mxu0
  %v4151 = vadd.f32 %v4110, %v4150
  %4152 = vmatmul.f32.gmra.mxu0 %v105
  %v4153 = vpop.f32.mrf.mxu0
  %v4154 = vadd.f32 %v4113, %v4153
  %4155 = vdwg.mxu0
  %4156 = vmatpush.msra.mxu0 %v3534
  %4157 = vmatpush.msra.mxu0 %v3526
  %4158 = vmatpush.msra.mxu0 %v3518
  %4159 = vmatpush.msra.mxu0 %v3510
  %4160 = vmatpush.msra.mxu0 %v3502
  %4161 = vmatpush.msra.mxu0 %v3494
  %4162 = vmatpush.msra.mxu0 %v3486
  %4163 = vmatpush.msra.mxu0 %v3478
  %4164 = vmatpush.msra.mxu0 %v3470
  %4165 = vmatpush.msra.mxu0 %v3462
  %4166 = vmatpush.msra.mxu0 %v3454
  %4167 = vmatpush.msra.mxu0 %v3446
  %4168 = vmatpush.msra.mxu0 %v3438
  %4169 = vmatpush.msra.mxu0 %v3430
  %4170 = vmatpush.msra.mxu0 %v3422
  %4171 = vmatpush.msra.mxu0 %v3414
  %4172 = vmatmul.f32.gmra.mxu0 %v90
  %v4173 = vpop.f32.mrf.mxu0
  %v4174 = vadd.f32 %v1544, %v4173
  %4175 = vmatmul.f32.gmra.mxu0 %v92
  %v4176 = vpop.f32.mrf.mxu0
  %v4177 = vadd.f32 %v1549, %v4176
  %4178 = vmatmul.f32.gmra.mxu0 %v94
  %v4179 = vpop.f32.mrf.mxu0
  %v4180 = vadd.f32 %v1554, %v4179
  %4181 = vmatmul.f32.gmra.mxu0 %v96
  %v4182 = vpop.f32.mrf.mxu0
  %v4183 = vadd.f32 %v1559, %v4182
  %4184 = vmatmul.f32.gmra.mxu0 %v98
  %v4185 = vpop.f32.mrf.mxu0
  %v4186 = vadd.f32 %v1564, %v4185
  %4187 = vmatmul.f32.gmra.mxu0 %v100
  %v4188 = vpop.f32.mrf.mxu0
  %v4189 = vadd.f32 %v1569, %v4188
  %4190 = vmatmul.f32.gmra.mxu0 %v102
  %v4191 = vpop.f32.mrf.mxu0
  %v4192 = vadd.f32 %v1574, %v4191
  %4193 = vmatmul.f32.gmra.mxu0 %v104
  %v4194 = vpop.f32.mrf.mxu0
  %v4195 = vadd.f32 %v1579, %v4194
  %4196 = vdwg.mxu0
  %4197 = vmatpush.msra.mxu0 %v3662
  %4198 = vmatpush.msra.mxu0 %v3654
  %4199 = vmatpush.msra.mxu0 %v3646
  %4200 = vmatpush.msra.mxu0 %v3638
  %4201 = vmatpush.msra.mxu0 %v3630
  %4202 = vmatpush.msra.mxu0 %v3622
  %4203 = vmatpush.msra.mxu0 %v3614
  %4204 = vmatpush.msra.mxu0 %v3606
  %4205 = vmatpush.msra.mxu0 %v3598
  %4206 = vmatpush.msra.mxu0 %v3590
  %4207 = vmatpush.msra.mxu0 %v3582
  %4208 = vmatpush.msra.mxu0 %v3574
  %4209 = vmatpush.msra.mxu0 %v3566
  %4210 = vmatpush.msra.mxu0 %v3558
  %4211 = vmatpush.msra.mxu0 %v3550
  %4212 = vmatpush.msra.mxu0 %v3542
  %4213 = vmatmul.f32.gmra.mxu0 %v91
  %v4214 = vpop.f32.mrf.mxu0
  %v4215 = vadd.f32 %v4174, %v4214
  %4216 = vmatmul.f32.gmra.mxu0 %v93
  %v4217 = vpop.f32.mrf.mxu0
  %v4218 = vadd.f32 %v4177, %v4217
  %4219 = vmatmul.f32.gmra.mxu0 %v95
  %v4220 = vpop.f32.mrf.mxu0
  %v4221 = vadd.f32 %v4180, %v4220
  %4222 = vmatmul.f32.gmra.mxu0 %v97
  %v4223 = vpop.f32.mrf.mxu0
  %v4224 = vadd.f32 %v4183, %v4223
  %4225 = vmatmul.f32.gmra.mxu0 %v99
  %v4226 = vpop.f32.mrf.mxu0
  %v4227 = vadd.f32 %v4186, %v4226
  %4228 = vmatmul.f32.gmra.mxu0 %v101
  %v4229 = vpop.f32.mrf.mxu0
  %v4230 = vadd.f32 %v4189, %v4229
  %4231 = vmatmul.f32.gmra.mxu0 %v103
  %v4232 = vpop.f32.mrf.mxu0
  %v4233 = vadd.f32 %v4192, %v4232
  %4234 = vmatmul.f32.gmra.mxu0 %v105
  %v4235 = vpop.f32.mrf.mxu0
  %v4236 = vadd.f32 %v4195, %v4235
  %4237 = vdwg.mxu0
  %4238 = vmatpush.msra.mxu0 %v3535
  %4239 = vmatpush.msra.mxu0 %v3527
  %4240 = vmatpush.msra.mxu0 %v3519
  %4241 = vmatpush.msra.mxu0 %v3511
  %4242 = vmatpush.msra.mxu0 %v3503
  %4243 = vmatpush.msra.mxu0 %v3495
  %4244 = vmatpush.msra.mxu0 %v3487
  %4245 = vmatpush.msra.mxu0 %v3479
  %4246 = vmatpush.msra.mxu0 %v3471
  %4247 = vmatpush.msra.mxu0 %v3463
  %4248 = vmatpush.msra.mxu0 %v3455
  %4249 = vmatpush.msra.mxu0 %v3447
  %4250 = vmatpush.msra.mxu0 %v3439
  %4251 = vmatpush.msra.mxu0 %v3431
  %4252 = vmatpush.msra.mxu0 %v3423
  %4253 = vmatpush.msra.mxu0 %v3415
  %4254 = vmatmul.f32.gmra.mxu0 %v90
  %v4255 = vpop.f32.mrf.mxu0
  %v4256 = vadd.f32 %v1544, %v4255
  %4257 = vmatmul.f32.gmra.mxu0 %v92
  %v4258 = vpop.f32.mrf.mxu0
  %v4259 = vadd.f32 %v1549, %v4258
  %4260 = vmatmul.f32.gmra.mxu0 %v94
  %v4261 = vpop.f32.mrf.mxu0
  %v4262 = vadd.f32 %v1554, %v4261
  %4263 = vmatmul.f32.gmra.mxu0 %v96
  %v4264 = vpop.f32.mrf.mxu0
  %v4265 = vadd.f32 %v1559, %v4264
  %4266 = vmatmul.f32.gmra.mxu0 %v98
  %v4267 = vpop.f32.mrf.mxu0
  %v4268 = vadd.f32 %v1564, %v4267
  %4269 = vmatmul.f32.gmra.mxu0 %v100
  %v4270 = vpop.f32.mrf.mxu0
  %v4271 = vadd.f32 %v1569, %v4270
  %4272 = vmatmul.f32.gmra.mxu0 %v102
  %v4273 = vpop.f32.mrf.mxu0
  %v4274 = vadd.f32 %v1574, %v4273
  %4275 = vmatmul.f32.gmra.mxu0 %v104
  %v4276 = vpop.f32.mrf.mxu0
  %v4277 = vadd.f32 %v1579, %v4276
  %4278 = vdwg.mxu0
  %4279 = vmatpush.msra.mxu0 %v3663
  %4280 = vmatpush.msra.mxu0 %v3655
  %4281 = vmatpush.msra.mxu0 %v3647
  %4282 = vmatpush.msra.mxu0 %v3639
  %4283 = vmatpush.msra.mxu0 %v3631
  %4284 = vmatpush.msra.mxu0 %v3623
  %4285 = vmatpush.msra.mxu0 %v3615
  %4286 = vmatpush.msra.mxu0 %v3607
  %4287 = vmatpush.msra.mxu0 %v3599
  %4288 = vmatpush.msra.mxu0 %v3591
  %4289 = vmatpush.msra.mxu0 %v3583
  %4290 = vmatpush.msra.mxu0 %v3575
  %4291 = vmatpush.msra.mxu0 %v3567
  %4292 = vmatpush.msra.mxu0 %v3559
  %4293 = vmatpush.msra.mxu0 %v3551
  %4294 = vmatpush.msra.mxu0 %v3543
  %4295 = vmatmul.f32.gmra.mxu0 %v91
  %v4296 = vpop.f32.mrf.mxu0
  %v4297 = vadd.f32 %v4256, %v4296
  %4298 = vmatmul.f32.gmra.mxu0 %v93
  %v4299 = vpop.f32.mrf.mxu0
  %v4300 = vadd.f32 %v4259, %v4299
  %4301 = vmatmul.f32.gmra.mxu0 %v95
  %v4302 = vpop.f32.mrf.mxu0
  %v4303 = vadd.f32 %v4262, %v4302
  %4304 = vmatmul.f32.gmra.mxu0 %v97
  %v4305 = vpop.f32.mrf.mxu0
  %v4306 = vadd.f32 %v4265, %v4305
  %4307 = vmatmul.f32.gmra.mxu0 %v99
  %v4308 = vpop.f32.mrf.mxu0
  %v4309 = vadd.f32 %v4268, %v4308
  %4310 = vmatmul.f32.gmra.mxu0 %v101
  %v4311 = vpop.f32.mrf.mxu0
  %v4312 = vadd.f32 %v4271, %v4311
  %4313 = vmatmul.f32.gmra.mxu0 %v103
  %v4314 = vpop.f32.mrf.mxu0
  %v4315 = vadd.f32 %v4274, %v4314
  %4316 = vmatmul.f32.gmra.mxu0 %v105
  %v4317 = vpop.f32.mrf.mxu0
  %v4318 = vadd.f32 %v4277, %v4317
  %4319 = vdwg.mxu0
  %v4320 = vmax.f32 %v3723, 0.0
  %v4321 = vmax.f32 %v3805, 0.0
  %v4322 = vmax.f32 %v3887, 0.0
  %v4323 = vmax.f32 %v3969, 0.0
  %v4324 = vmax.f32 %v4051, 0.0
  %v4325 = vmax.f32 %v4133, 0.0
  %v4326 = vmax.f32 %v4215, 0.0
  %v4327 = vmax.f32 %v4297, 0.0
  %v4328 = vmax.f32 %v3726, 0.0
  %v4329 = vmax.f32 %v3808, 0.0
  %v4330 = vmax.f32 %v3890, 0.0
  %v4331 = vmax.f32 %v3972, 0.0
  %v4332 = vmax.f32 %v4054, 0.0
  %v4333 = vmax.f32 %v4136, 0.0
  %v4334 = vmax.f32 %v4218, 0.0
  %v4335 = vmax.f32 %v4300, 0.0
  %v4336 = vmax.f32 %v3729, 0.0
  %v4337 = vmax.f32 %v3811, 0.0
  %v4338 = vmax.f32 %v3893, 0.0
  %v4339 = vmax.f32 %v3975, 0.0
  %v4340 = vmax.f32 %v4057, 0.0
  %v4341 = vmax.f32 %v4139, 0.0
  %v4342 = vmax.f32 %v4221, 0.0
  %v4343 = vmax.f32 %v4303, 0.0
  %v4344 = vmax.f32 %v3732, 0.0
  %v4345 = vmax.f32 %v3814, 0.0
  %v4346 = vmax.f32 %v3896, 0.0
  %v4347 = vmax.f32 %v3978, 0.0
  %v4348 = vmax.f32 %v4060, 0.0
  %v4349 = vmax.f32 %v4142, 0.0
  %v4350 = vmax.f32 %v4224, 0.0
  %v4351 = vmax.f32 %v4306, 0.0
  %v4352 = vmax.f32 %v3735, 0.0
  %v4353 = vmax.f32 %v3817, 0.0
  %v4354 = vmax.f32 %v3899, 0.0
  %v4355 = vmax.f32 %v3981, 0.0
  %v4356 = vmax.f32 %v4063, 0.0
  %v4357 = vmax.f32 %v4145, 0.0
  %v4358 = vmax.f32 %v4227, 0.0
  %v4359 = vmax.f32 %v4309, 0.0
  %v4360 = vmax.f32 %v3738, 0.0
  %v4361 = vmax.f32 %v3820, 0.0
  %v4362 = vmax.f32 %v3902, 0.0
  %v4363 = vmax.f32 %v3984, 0.0
  %v4364 = vmax.f32 %v4066, 0.0
  %v4365 = vmax.f32 %v4148, 0.0
  %v4366 = vmax.f32 %v4230, 0.0
  %v4367 = vmax.f32 %v4312, 0.0
  %v4368 = vmax.f32 %v3741, 0.0
  %v4369 = vmax.f32 %v3823, 0.0
  %v4370 = vmax.f32 %v3905, 0.0
  %v4371 = vmax.f32 %v3987, 0.0
  %v4372 = vmax.f32 %v4069, 0.0
  %v4373 = vmax.f32 %v4151, 0.0
  %v4374 = vmax.f32 %v4233, 0.0
  %v4375 = vmax.f32 %v4315, 0.0
  %v4376 = vmax.f32 %v3744, 0.0
  %v4377 = vmax.f32 %v3826, 0.0
  %v4378 = vmax.f32 %v3908, 0.0
  %v4379 = vmax.f32 %v3990, 0.0
  %v4380 = vmax.f32 %v4072, 0.0
  %v4381 = vmax.f32 %v4154, 0.0
  %v4382 = vmax.f32 %v4236, 0.0
  %v4383 = vmax.f32 %v4318, 0.0
  %4384 = vmatpush.msra.mxu0 0.0
  %4385 = vmatpush.msra.mxu0 0.0
  %4386 = vmatpush.msra.mxu0 0.0
  %4387 = vmatpush.msra.mxu0 0.0
  %4388 = vmatpush.msra.mxu0 0.0
  %4389 = vmatpush.msra.mxu0 0.0
  %4390 = vmatpush.msra.mxu0 0.0
  %4391 = vmatpush.msra.mxu0 0.0
  %4392 = vmatpush.msra.mxu0 %v4376
  %4393 = vmatpush.msra.mxu0 %v4368
  %4394 = vmatpush.msra.mxu0 %v4360
  %4395 = vmatpush.msra.mxu0 %v4352
  %4396 = vmatpush.msra.mxu0 %v4344
  %4397 = vmatpush.msra.mxu0 %v4336
  %4398 = vmatpush.msra.mxu0 %v4328
  %4399 = vmatpush.msra.mxu0 %v4320
  %4400 = vmatmul.f32.gmra.mxu0 %v2308
  %v4401 = vpop.f32.mrf.mxu0
  %v4402 = vadd.f32 %v2304, %v4401
  %4403 = vdwg.mxu0
  %4404 = vmatpush.msra.mxu0 0.0
  %4405 = vmatpush.msra.mxu0 0.0
  %4406 = vmatpush.msra.mxu0 0.0
  %4407 = vmatpush.msra.mxu0 0.0
  %4408 = vmatpush.msra.mxu0 0.0
  %4409 = vmatpush.msra.mxu0 0.0
  %4410 = vmatpush.msra.mxu0 0.0
  %4411 = vmatpush.msra.mxu0 0.0
  %4412 = vmatpush.msra.mxu0 %v4377
  %4413 = vmatpush.msra.mxu0 %v4369
  %4414 = vmatpush.msra.mxu0 %v4361
  %4415 = vmatpush.msra.mxu0 %v4353
  %4416 = vmatpush.msra.mxu0 %v4345
  %4417 = vmatpush.msra.mxu0 %v4337
  %4418 = vmatpush.msra.mxu0 %v4329
  %4419 = vmatpush.msra.mxu0 %v4321
  %4420 = vmatmul.f32.gmra.mxu0 %v2308
  %v4421 = vpop.f32.mrf.mxu0
  %v4422 = vadd.f32 %v2304, %v4421
  %4423 = vdwg.mxu0
  %4424 = vmatpush.msra.mxu0 0.0
  %4425 = vmatpush.msra.mxu0 0.0
  %4426 = vmatpush.msra.mxu0 0.0
  %4427 = vmatpush.msra.mxu0 0.0
  %4428 = vmatpush.msra.mxu0 0.0
  %4429 = vmatpush.msra.mxu0 0.0
  %4430 = vmatpush.msra.mxu0 0.0
  %4431 = vmatpush.msra.mxu0 0.0
  %4432 = vmatpush.msra.mxu0 %v4378
  %4433 = vmatpush.msra.mxu0 %v4370
  %4434 = vmatpush.msra.mxu0 %v4362
  %4435 = vmatpush.msra.mxu0 %v4354
  %4436 = vmatpush.msra.mxu0 %v4346
  %4437 = vmatpush.msra.mxu0 %v4338
  %4438 = vmatpush.msra.mxu0 %v4330
  %4439 = vmatpush.msra.mxu0 %v4322
  %4440 = vmatmul.f32.gmra.mxu0 %v2308
  %v4441 = vpop.f32.mrf.mxu0
  %v4442 = vadd.f32 %v2304, %v4441
  %4443 = vdwg.mxu0
  %4444 = vmatpush.msra.mxu0 0.0
  %4445 = vmatpush.msra.mxu0 0.0
  %4446 = vmatpush.msra.mxu0 0.0
  %4447 = vmatpush.msra.mxu0 0.0
  %4448 = vmatpush.msra.mxu0 0.0
  %4449 = vmatpush.msra.mxu0 0.0
  %4450 = vmatpush.msra.mxu0 0.0
  %4451 = vmatpush.msra.mxu0 0.0
  %4452 = vmatpush.msra.mxu0 %v4379
  %4453 = vmatpush.msra.mxu0 %v4371
  %4454 = vmatpush.msra.mxu0 %v4363
  %4455 = vmatpush.msra.mxu0 %v4355
  %4456 = vmatpush.msra.mxu0 %v4347
  %4457 = vmatpush.msra.mxu0 %v4339
  %4458 = vmatpush.msra.mxu0 %v4331
  %4459 = vmatpush.msra.mxu0 %v4323
  %4460 = vmatmul.f32.gmra.mxu0 %v2308
  %v4461 = vpop.f32.mrf.mxu0
  %v4462 = vadd.f32 %v2304, %v4461
  %4463 = vdwg.mxu0
  %4464 = vmatpush.msra.mxu0 0.0
  %4465 = vmatpush.msra.mxu0 0.0
  %4466 = vmatpush.msra.mxu0 0.0
  %4467 = vmatpush.msra.mxu0 0.0
  %4468 = vmatpush.msra.mxu0 0.0
  %4469 = vmatpush.msra.mxu0 0.0
  %4470 = vmatpush.msra.mxu0 0.0
  %4471 = vmatpush.msra.mxu0 0.0
  %4472 = vmatpush.msra.mxu0 %v4380
  %4473 = vmatpush.msra.mxu0 %v4372
  %4474 = vmatpush.msra.mxu0 %v4364
  %4475 = vmatpush.msra.mxu0 %v4356
  %4476 = vmatpush.msra.mxu0 %v4348
  %4477 = vmatpush.msra.mxu0 %v4340
  %4478 = vmatpush.msra.mxu0 %v4332
  %4479 = vmatpush.msra.mxu0 %v4324
  %4480 = vmatmul.f32.gmra.mxu0 %v2308
  %v4481 = vpop.f32.mrf.mxu0
  %v4482 = vadd.f32 %v2304, %v4481
  %4483 = vdwg.mxu0
  %4484 = vmatpush.msra.mxu0 0.0
  %4485 = vmatpush.msra.mxu0 0.0
  %4486 = vmatpush.msra.mxu0 0.0
  %4487 = vmatpush.msra.mxu0 0.0
  %4488 = vmatpush.msra.mxu0 0.0
  %4489 = vmatpush.msra.mxu0 0.0
  %4490 = vmatpush.msra.mxu0 0.0
  %4491 = vmatpush.msra.mxu0 0.0
  %4492 = vmatpush.msra.mxu0 %v4381
  %4493 = vmatpush.msra.mxu0 %v4373
  %4494 = vmatpush.msra.mxu0 %v4365
  %4495 = vmatpush.msra.mxu0 %v4357
  %4496 = vmatpush.msra.mxu0 %v4349
  %4497 = vmatpush.msra.mxu0 %v4341
  %4498 = vmatpush.msra.mxu0 %v4333
  %4499 = vmatpush.msra.mxu0 %v4325
  %4500 = vmatmul.f32.gmra.mxu0 %v2308
  %v4501 = vpop.f32.mrf.mxu0
  %v4502 = vadd.f32 %v2304, %v4501
  %4503 = vdwg.mxu0
  %4504 = vmatpush.msra.mxu0 0.0
  %4505 = vmatpush.msra.mxu0 0.0
  %4506 = vmatpush.msra.mxu0 0.0
  %4507 = vmatpush.msra.mxu0 0.0
  %4508 = vmatpush.msra.mxu0 0.0
  %4509 = vmatpush.msra.mxu0 0.0
  %4510 = vmatpush.msra.mxu0 0.0
  %4511 = vmatpush.msra.mxu0 0.0
  %4512 = vmatpush.msra.mxu0 %v4382
  %4513 = vmatpush.msra.mxu0 %v4374
  %4514 = vmatpush.msra.mxu0 %v4366
  %4515 = vmatpush.msra.mxu0 %v4358
  %4516 = vmatpush.msra.mxu0 %v4350
  %4517 = vmatpush.msra.mxu0 %v4342
  %4518 = vmatpush.msra.mxu0 %v4334
  %4519 = vmatpush.msra.mxu0 %v4326
  %4520 = vmatmul.f32.gmra.mxu0 %v2308
  %v4521 = vpop.f32.mrf.mxu0
  %v4522 = vadd.f32 %v2304, %v4521
  %4523 = vdwg.mxu0
  %4524 = vmatpush.msra.mxu0 0.0
  %4525 = vmatpush.msra.mxu0 0.0
  %4526 = vmatpush.msra.mxu0 0.0
  %4527 = vmatpush.msra.mxu0 0.0
  %4528 = vmatpush.msra.mxu0 0.0
  %4529 = vmatpush.msra.mxu0 0.0
  %4530 = vmatpush.msra.mxu0 0.0
  %4531 = vmatpush.msra.mxu0 0.0
  %4532 = vmatpush.msra.mxu0 %v4383
  %4533 = vmatpush.msra.mxu0 %v4375
  %4534 = vmatpush.msra.mxu0 %v4367
  %4535 = vmatpush.msra.mxu0 %v4359
  %4536 = vmatpush.msra.mxu0 %v4351
  %4537 = vmatpush.msra.mxu0 %v4343
  %4538 = vmatpush.msra.mxu0 %v4335
  %4539 = vmatpush.msra.mxu0 %v4327
  %4540 = vmatmul.f32.gmra.mxu0 %v2308
  %v4541 = vpop.f32.mrf.mxu0
  %v4542 = vadd.f32 %v2304, %v4541
  %4543 = vdwg.mxu0
  %v4552 = vrot.slane %v4422, 4
  %v4553 = vrot.slane %v4462, 4
  %v4554 = vrot.slane %v4502, 4
  %v4555 = vrot.slane %v4542, 4
  %v4556 = vsel %vm2482, %v4402, %v4552
  %v4557 = vsel %vm2482, %v4442, %v4553
  %v4558 = vsel %vm2482, %v4482, %v4554
  %v4559 = vsel %vm2482, %v4522, %v4555
  %s4564 = scalar_lea.vmem %s7, 32
  %4565 = vst [vmem:[%s4564] sm:$0x77] %v4556
  %4566 = vst [vmem:[%s4564 + $0x8] sm:$0x77] %v4557
  %4567 = vst [vmem:[%s4564 + $0x10] sm:$0x77] %v4558
  %4568 = vst [vmem:[%s4564 + $0x18] sm:$0x77] %v4559
  // Predicated region
  $region30: #{final_mlp_forward.1} parent=0 // pred_check
    _
  $region31: #{final_mlp_forward.1} parent=0 // pred_check_branch
    %4570 = sbr.rel (0) target = $region33
  $region32: #{final_mlp_forward.1} parent=0 // pred_region
    _
  $region33: #{final_mlp_forward.1} parent=0 // pred_fallthru
    _
  // Predicated region
  $region34: #{final_mlp_forward.1} parent=0 // pred_check
    _
  $region35: #{final_mlp_forward.1} parent=0 // pred_check_branch
    %4572 = sbr.rel (0) target = $region37
  $region36: #{final_mlp_forward.1} parent=0 // pred_region
    _
  $region37: #{final_mlp_forward.1} parent=0 // pred_fallthru
    _

</llo_original>
